<compile_context>
chip_gen: v6e
topology: v6e:2x2x1
jax: 0.10.0
libtpu: 0.0.40
codegen_flags: <defaults>
</compile_context>

<pallas_src>
import math

import jax
import jax.numpy as jnp
from jax.experimental import pallas as pl
from jax.experimental.pallas import tpu as pltpu

HIDDEN_DIM = 100
OUTPUT_DIM = 100
IN_DIM = 8 * HIDDEN_DIM          # 800, hard-coded in the module's forward
PAD_HID = 128                    # lane-padded hidden width (VMEM-only)
DEFAULT_BLOCK_B = 2048           # rows per grid step (v6e: block_b=4096 also fine)


def _fused_mlp_kernel(x_ref, w1_ref, b1_ref, w2_ref, b2_ref, o_ref):
    # Cast after DMA (no-op for f32 inputs, free VPU filler if input is bf16).
    x = x_ref[...].astype(jnp.float32)
    # hidden = relu(x @ W1 + b1)        (tb, 800) @ (800, 128) -> (tb, 128)
    h = jnp.dot(x, w1_ref[...],
                preferred_element_type=jnp.float32,
                precision=jax.lax.Precision.HIGHEST)
    h = jnp.maximum(h + b1_ref[...], 0.0)
    # output = h @ W2 + b2              (tb, 128) @ (128, 100) -> (tb, 100)
    o = jnp.dot(h, w2_ref[...],
                preferred_element_type=jnp.float32,
                precision=jax.lax.Precision.HIGHEST)
    o_ref[...] = (o + b2_ref[...]).astype(o_ref.dtype)


def _round_up(x, m):
    return ((x + m - 1) // m) * m


def fixed_window_forward(features, w1, b1, w2, b2, *, block_b=DEFAULT_BLOCK_B):
    """features: (B, 800) (or reshapable to it), f32 or bf16.
    Returns (B, 1, 100) float32.

    w1: (800, 100), b1: (1, 100), w2: (100, 100), b2: (1, 100)
    (weights stored transposed relative to PyTorch's (out, in) layout).
    """
    B = features.shape[0]
    x = features.reshape(B, IN_DIM)   # no wrapper-side dtype cast / padding

    # --- zero-pad the hidden dim 100 -> 128 (weights only; never touches x or
    #     the output, so it adds no HBM traffic) ------------------------------
    hp = PAD_HID - HIDDEN_DIM
    w1p = jnp.pad(w1.astype(jnp.float32), ((0, 0), (0, hp)))   # (800, 128)
    b1p = jnp.pad(b1.astype(jnp.float32), ((0, 0), (0, hp)))   # (1, 128)
    w2p = jnp.pad(w2.astype(jnp.float32), ((0, hp), (0, 0)))   # (128, 100)
    b2p = b2.astype(jnp.float32)                               # (1, 100)

    # --- batch tiling (no padding of x; ragged last block handled by Pallas) -
    tb = min(block_b, _round_up(B, 8))
    if B >= 2048:
        # >=2 (ideally 4) grid steps so v7x's "parallel" axis can use both
        # TensorCores, while keeping per-step x tiles >= ~2 MiB.
        tb = min(tb, max(_round_up(-(-B // 4), 256), 768))
    grid = (pl.cdiv(B, tb),)

    elem_bytes = jnp.dtype(x.dtype).itemsize
    cost = pl.CostEstimate(
        flops=2 * B * (IN_DIM * PAD_HID + PAD_HID * OUTPUT_DIM),
        transcendentals=0,
        bytes_accessed=(B * (IN_DIM * elem_bytes + OUTPUT_DIM * 4)
                        + (IN_DIM * PAD_HID + PAD_HID
                           + PAD_HID * OUTPUT_DIM + OUTPUT_DIM) * 4),
    )

    # VMEM budget: double-buffered x + out tiles, single-buffered weights.
    vmem_needed = (2 * tb * IN_DIM * elem_bytes
                   + 2 * tb * OUTPUT_DIM * 4
                   + (IN_DIM * PAD_HID + PAD_HID
                      + PAD_HID * OUTPUT_DIM + OUTPUT_DIM) * 4)
    vmem_limit = min(max(32 * 1024 * 1024, int(vmem_needed * 5 // 4)),
                     64 * 1024 * 1024)

    out = pl.pallas_call(
        _fused_mlp_kernel,
        out_shape=jax.ShapeDtypeStruct((B, OUTPUT_DIM), jnp.float32),
        grid=grid,
        in_specs=[
            pl.BlockSpec((tb, IN_DIM), lambda i: (i, 0)),              # x tile
            pl.BlockSpec((IN_DIM, PAD_HID), lambda i: (0, 0),
                         pipeline_mode=pl.Buffered(1)),                # w1
            pl.BlockSpec((1, PAD_HID), lambda i: (0, 0),
                         pipeline_mode=pl.Buffered(1)),                # b1
            pl.BlockSpec((PAD_HID, OUTPUT_DIM), lambda i: (0, 0),
                         pipeline_mode=pl.Buffered(1)),                # w2
            pl.BlockSpec((1, OUTPUT_DIM), lambda i: (0, 0),
                         pipeline_mode=pl.Buffered(1)),                # b2
        ],
        out_specs=pl.BlockSpec((tb, OUTPUT_DIM), lambda i: (i, 0)),
        compiler_params=pltpu.CompilerParams(
            dimension_semantics=("parallel",),
            vmem_limit_bytes=vmem_limit,
        ),
        cost_estimate=cost,
    )(x, w1p, b1p, w2p, b2p)

    # (B, 100) -> (B, 1, 100): metadata-only reshape.
    return out.reshape(B, 1, OUTPUT_DIM)


def init_params(key):
    """Deterministic init mirroring nn.Linear's default uniform(-k, k)."""
    k1, k2, k3, k4 = jax.random.split(key, 4)
    bound1 = 1.0 / math.sqrt(IN_DIM)
    bound2 = 1.0 / math.sqrt(HIDDEN_DIM)
    # stored as (in, out) -- transposed relative to PyTorch's (out, in)
    w1 = jax.random.uniform(k1, (IN_DIM, HIDDEN_DIM), jnp.float32, -bound1, bound1)
    b1 = jax.random.uniform(k2, (1, HIDDEN_DIM), jnp.float32, -bound1, bound1)
    w2 = jax.random.uniform(k3, (HIDDEN_DIM, OUTPUT_DIM), jnp.float32, -bound2, bound2)
    b2 = jax.random.uniform(k4, (1, OUTPUT_DIM), jnp.float32, -bound2, bound2)
    return w1, b1, w2, b2


def reference_forward(features, w1, b1, w2, b2):
    B = features.shape[0]
    x = features.reshape(B, 1, IN_DIM).astype(jnp.float32)
    h = jnp.maximum(
        jnp.einsum("bli,ih->blh", x, w1,
                   precision=jax.lax.Precision.HIGHEST) + b1[0], 0.0)
    return jnp.einsum("blh,ho->blo", h, w2,
                      precision=jax.lax.Precision.HIGHEST) + b2[0]


if __name__ == "__main__":
    key = jax.random.PRNGKey(0)
    kx, kp = jax.random.split(key)

    w1, b1, w2, b2 = init_params(kp)

    # Small batch.
    batch = 2
    features = jax.random.normal(kx, (batch, IN_DIM), dtype=jnp.float32)
    out = jax.block_until_ready(fixed_window_forward(features, w1, b1, w2, b2))
    ref = reference_forward(features, w1, b1, w2, b2)
    assert out.shape == (batch, 1, OUTPUT_DIM), out.shape
    assert jnp.allclose(out, ref, atol=1e-4, rtol=1e-4), float(
        jnp.max(jnp.abs(out - ref))
    )

    # Batch that is not a multiple of 8 (exercises the ragged last block).
    batch2 = 37
    features2 = jax.random.normal(kx, (batch2, IN_DIM), dtype=jnp.float32)
    out2 = jax.block_until_ready(fixed_window_forward(features2, w1, b1, w2, b2))
    ref2 = reference_forward(features2, w1, b1, w2, b2)
    assert out2.shape == (batch2, 1, OUTPUT_DIM), out2.shape
    assert jnp.allclose(out2, ref2, atol=1e-4, rtol=1e-4), float(
        jnp.max(jnp.abs(out2 - ref2))
    )

    print("KERNEL_OK")
</pallas_src>

<mosaic_0001>
module attributes {stable_mosaic.version = 11 : i64} {
  func.func @_fused_mlp_kernel(%arg0: i32, %arg1: memref<8x800xf32, #tpu.memory_space<vmem>>, %arg2: memref<800x128xf32, #tpu.memory_space<vmem>>, %arg3: memref<1x128xf32, #tpu.memory_space<vmem>>, %arg4: memref<128x100xf32, #tpu.memory_space<vmem>>, %arg5: memref<1x100xf32, #tpu.memory_space<vmem>>, %arg6: memref<8x100xf32, #tpu.memory_space<vmem>>) attributes {dimension_semantics = [#tpu.dimension_semantics<parallel>], iteration_bounds = array<i64: 1>, scalar_prefetch = 0 : i64, scratch_operands = 0 : i64, tpu.core_type = #tpu.core_type<tc>, window_params = [{transform_indices = @transform_0, window_bounds = array<i64: 8, 800>}, {pipeline_mode = #tpu.pipeline_mode<synchronous>, transform_indices = @transform_1, window_bounds = array<i64: 800, 128>}, {pipeline_mode = #tpu.pipeline_mode<synchronous>, transform_indices = @transform_2, window_bounds = array<i64: 1, 128>}, {pipeline_mode = #tpu.pipeline_mode<synchronous>, transform_indices = @transform_3, window_bounds = array<i64: 128, 100>}, {pipeline_mode = #tpu.pipeline_mode<synchronous>, transform_indices = @transform_4, window_bounds = array<i64: 1, 100>}, {transform_indices = @transform_5, window_bounds = array<i64: 8, 100>}]} {
    %c0 = arith.constant 0 : index
    %c0_0 = arith.constant 0 : index
    %0 = vector.load %arg1[%c0, %c0_0] : memref<8x800xf32, #tpu.memory_space<vmem>>, vector<8x800xf32>
    %c0_1 = arith.constant 0 : index
    %c0_2 = arith.constant 0 : index
    %1 = vector.load %arg2[%c0_1, %c0_2] : memref<800x128xf32, #tpu.memory_space<vmem>>, vector<800x128xf32>
    %cst = arith.constant dense<0.000000e+00> : vector<8x128xf32>
    %2 = tpu.matmul %0, %1, %cst {dimension_numbers = #tpu.dot_dimension_numbers<[1], [0], [0], [1], [0, 0, 1, 1], [], []>, precision = #tpu.contract_precision<fp32>} : vector<8x800xf32>, vector<800x128xf32>, vector<8x128xf32> -> vector<8x128xf32>
    %c0_3 = arith.constant 0 : index
    %c0_4 = arith.constant 0 : index
    %3 = vector.load %arg3[%c0_3, %c0_4] : memref<1x128xf32, #tpu.memory_space<vmem>>, vector<1x128xf32>
    %4 = vector.broadcast %3 : vector<1x128xf32> to vector<8x128xf32>
    %5 = arith.addf %2, %4 : vector<8x128xf32>
    %cst_5 = arith.constant 0.000000e+00 : f32
    %6 = vector.broadcast %cst_5 : f32 to vector<8x128xf32>
    %7 = arith.maximumf %5, %6 : vector<8x128xf32>
    %c0_6 = arith.constant 0 : index
    %c0_7 = arith.constant 0 : index
    %8 = vector.load %arg4[%c0_6, %c0_7] : memref<128x100xf32, #tpu.memory_space<vmem>>, vector<128x100xf32>
    %cst_8 = arith.constant dense<0.000000e+00> : vector<8x100xf32>
    %9 = tpu.matmul %7, %8, %cst_8 {dimension_numbers = #tpu.dot_dimension_numbers<[1], [0], [0], [1], [0, 0, 1, 1], [], []>, precision = #tpu.contract_precision<fp32>} : vector<8x128xf32>, vector<128x100xf32>, vector<8x100xf32> -> vector<8x100xf32>
    %c0_9 = arith.constant 0 : index
    %c0_10 = arith.constant 0 : index
    %10 = vector.load %arg5[%c0_9, %c0_10] : memref<1x100xf32, #tpu.memory_space<vmem>>, vector<1x100xf32>
    %11 = vector.broadcast %10 : vector<1x100xf32> to vector<8x100xf32>
    %12 = arith.addf %9, %11 : vector<8x100xf32>
    %c0_11 = arith.constant 0 : index
    %c0_12 = arith.constant 0 : index
    %13 = vector.load %arg6[%c0_11, %c0_12] : memref<8x100xf32, #tpu.memory_space<vmem>>, vector<8x100xf32>
    tpu.vector_store %arg6[%c0_11, %c0_12], %12 {strides = array<i32>} : memref<8x100xf32, #tpu.memory_space<vmem>>, vector<8x100xf32>,
    return
  }
  func.func @transform_0(%arg0: i32) -> (i32, i32) {
    %c0_i32 = arith.constant 0 : i32
    %c0_i32_0 = arith.constant 0 : i32
    return %arg0, %c0_i32 : i32, i32
  }
  func.func @transform_1(%arg0: i32) -> (i32, i32) {
    %c0_i32 = arith.constant 0 : i32
    %c0_i32_0 = arith.constant 0 : i32
    %c0_i32_1 = arith.constant 0 : i32
    return %c0_i32, %c0_i32_0 : i32, i32
  }
  func.func @transform_2(%arg0: i32) -> (i32, i32) {
    %c0_i32 = arith.constant 0 : i32
    %c0_i32_0 = arith.constant 0 : i32
    %c0_i32_1 = arith.constant 0 : i32
    return %c0_i32, %c0_i32_0 : i32, i32
  }
  func.func @transform_3(%arg0: i32) -> (i32, i32) {
    %c0_i32 = arith.constant 0 : i32
    %c0_i32_0 = arith.constant 0 : i32
    %c0_i32_1 = arith.constant 0 : i32
    return %c0_i32, %c0_i32_0 : i32, i32
  }
  func.func @transform_4(%arg0: i32) -> (i32, i32) {
    %c0_i32 = arith.constant 0 : i32
    %c0_i32_0 = arith.constant 0 : i32
    %c0_i32_1 = arith.constant 0 : i32
    return %c0_i32, %c0_i32_0 : i32, i32
  }
  func.func @transform_5(%arg0: i32) -> (i32, i32) {
    %c0_i32 = arith.constant 0 : i32
    %c0_i32_0 = arith.constant 0 : i32
    return %arg0, %c0_i32 : i32, i32
  }
}

</mosaic_0001>

<llo_original>
// kernel: tpu_custom_call.1
$region0: #{tpu_custom_call.1}
  #allocation0 [shape = 'u32[]', space=smem, size = 0x4, offset = 0x4, fixed_abs, tag = 'smem constant byte address 0x4 - core index']
  #allocation1 [shape = 'u32[144,128]{1,0:T(1,128)}', space=vmem, size = 0x12000, scoped, tag = 'internal scratch']
  %s0 = inlined_call_operand.vmem [shape: f32[2,800], index: 0, kind: input, shape index: {}]
  %s1 = inlined_call_operand.hbm [shape: f32[800,128], index: 1, kind: input, shape index: {}]
  %s2 = inlined_call_operand.vmem [shape: f32[1,128], index: 2, kind: input, shape index: {}]
  %s3 = inlined_call_operand.vmem [shape: f32[128,100], index: 3, kind: input, shape index: {}]
  %s4 = inlined_call_operand.vmem [shape: f32[1,100], index: 4, kind: input, shape index: {}]
  %s5 = inlined_call_operand.hbm [shape: f32[2,100], index: 5, kind: output, shape index: {}]
  %s6 = sld [smem:[#allocation0]]
  $region34: #{tpu_custom_call.1} parent=0
    _
  %s8 = ssub.s32 1, %s6
  %s9 = scalar_select 0, %s8, %s6
  $region1: #{tpu_custom_call.1} parent=0
    #allocation2 [shape = 'u8[409600]{0}', space=vmem, size = 0x64000, scoped, tag = 'input window, operand 1, single buffered']
    #allocation3 [shape = 's32[1]{0}', space=sflag, size = 0x4, scoped, tag = 'scoped memory for tpu_custom_call.1']
    #allocation4 [shape = 's32[1]{0}', space=sflag, size = 0x4, scoped, tag = 'scoped memory for tpu_custom_call.1']
    #allocation5 [shape = 'u8[4096]{0}', space=vmem, size = 0x1000, scoped, tag = 'output window, operand 0, single buffered']
    %10 = vsyncpa [#allocation3], 0
    %11 = vsyncpa [#allocation4], 0
    // Predicated region
    $region2: #{tpu_custom_call.1} parent=1 // pred_check
      _
    $region3: #{tpu_custom_call.1} parent=1 // pred_check_branch
      %13 = sbr.rel (0) target = $region5
    $region4: #{tpu_custom_call.1} parent=1 // pred_region
      _
    $region5: #{tpu_custom_call.1} parent=1 // pred_fallthru
      _
    // Predicated region
    $region6: #{tpu_custom_call.1} parent=1 // pred_check
      _
    $region7: #{tpu_custom_call.1} parent=1 // pred_check_branch
      %15 = sbr.rel (0) target = $region9
    $region8: #{tpu_custom_call.1} parent=1 // pred_region
      %s17 = ssub.s32 12800, 12800
      %18 = vsyncadd [#allocation3], %s17
      %s19 = sshll.u32 [#allocation2], 4
      %s20 = int_to_ptr.vmem [resolvable:$true] %s19
      %25 = dma.hbm_to_vmem [thread:$0]  %s1, 12800, %s20, [#allocation3], 128, 128, 8
    $region9: #{tpu_custom_call.1} parent=1 // pred_fallthru
      _
    // Predicated region
    $region10: #{tpu_custom_call.1} parent=1 // pred_check
      _
    $region11: #{tpu_custom_call.1} parent=1 // pred_check_branch
      %27 = sbr.rel (0) target = $region13
    $region12: #{tpu_custom_call.1} parent=1 // pred_region
      _
    $region13: #{tpu_custom_call.1} parent=1 // pred_fallthru
      _
    // Predicated region
    $region14: #{tpu_custom_call.1} parent=1 // pred_check
      _
    $region15: #{tpu_custom_call.1} parent=1 // pred_check_branch
      %29 = sbr.rel (0) target = $region17
    $region16: #{tpu_custom_call.1} parent=1 // pred_region
      _
    $region17: #{tpu_custom_call.1} parent=1 // pred_fallthru
      _
    // Predicated region
    $region18: #{tpu_custom_call.1} parent=1 // pred_check
      _
    $region19: #{tpu_custom_call.1} parent=1 // pred_check_branch
      %31 = sbr.rel (0) target = $region21
    $region20: #{tpu_custom_call.1} parent=1 // pred_region
      _
    $region21: #{tpu_custom_call.1} parent=1 // pred_fallthru
      _
    // Predicated region
    $region22: #{tpu_custom_call.1} parent=1 // pred_check
      _
    $region23: #{tpu_custom_call.1} parent=1 // pred_check_branch
      %33 = sbr.rel (0) target = $region25
    $region24: #{tpu_custom_call.1} parent=1 // pred_region
      %34 = dma.done [#allocation3], 12800
    $region25: #{tpu_custom_call.1} parent=1 // pred_fallthru
      _
    %v35 = vld [vmem:[%s0] sm:$0xff]
    %v36 = vld [vmem:[%s0 + $0x8] sm:$0x3f]
    %v37 = vld [vmem:[%s0 + $0xe] sm:$0xff]
    %v38 = vld [vmem:[%s0 + $0x16] sm:$0x3f]
    %v39 = vld [vmem:[%s0 + $0x1c] sm:$0xff]
    %v40 = vld [vmem:[%s0 + $0x24] sm:$0x3f]
    %v41 = vld [vmem:[%s0 + $0x2a] sm:$0xff]
    %v42 = vld [vmem:[%s0 + $0x32] sm:$0x3f]
    %v43 = vld [vmem:[#allocation2] sm:$0xff]
    %v44 = vld [vmem:[#allocation2 + $0x8] sm:$0xff]
    %v45 = vld [vmem:[#allocation2 + $0x10] sm:$0xff]
    %v46 = vld [vmem:[#allocation2 + $0x18] sm:$0xff]
    %v47 = vld [vmem:[#allocation2 + $0x20] sm:$0xff]
    %v48 = vld [vmem:[#allocation2 + $0x28] sm:$0xff]
    %v49 = vld [vmem:[#allocation2 + $0x30] sm:$0xff]
    %v50 = vld [vmem:[#allocation2 + $0x38] sm:$0xff]
    %v51 = vld [vmem:[#allocation2 + $0x40] sm:$0xff]
    %v52 = vld [vmem:[#allocation2 + $0x48] sm:$0xff]
    %v53 = vld [vmem:[#allocation2 + $0x50] sm:$0xff]
    %v54 = vld [vmem:[#allocation2 + $0x58] sm:$0xff]
    %v55 = vld [vmem:[#allocation2 + $0x60] sm:$0xff]
    %v56 = vld [vmem:[#allocation2 + $0x68] sm:$0xff]
    %v57 = vld [vmem:[#allocation2 + $0x70] sm:$0xff]
    %v58 = vld [vmem:[#allocation2 + $0x78] sm:$0xff]
    %v59 = vld [vmem:[#allocation2 + $0x80] sm:$0xff]
    %v60 = vld [vmem:[#allocation2 + $0x88] sm:$0xff]
    %v61 = vld [vmem:[#allocation2 + $0x90] sm:$0xff]
    %v62 = vld [vmem:[#allocation2 + $0x98] sm:$0xff]
    %v63 = vld [vmem:[#allocation2 + $0xa0] sm:$0xff]
    %v64 = vld [vmem:[#allocation2 + $0xa8] sm:$0xff]
    %v65 = vld [vmem:[#allocation2 + $0xb0] sm:$0xff]
    %v66 = vld [vmem:[#allocation2 + $0xb8] sm:$0xff]
    %v67 = vld [vmem:[#allocation2 + $0xc0] sm:$0xff]
    %v68 = vld [vmem:[#allocation2 + $0xc8] sm:$0xff]
    %v69 = vld [vmem:[#allocation2 + $0xd0] sm:$0xff]
    %v70 = vld [vmem:[#allocation2 + $0xd8] sm:$0xff]
    %v71 = vld [vmem:[#allocation2 + $0xe0] sm:$0xff]
    %v72 = vld [vmem:[#allocation2 + $0xe8] sm:$0xff]
    %v73 = vld [vmem:[#allocation2 + $0xf0] sm:$0xff]
    %v74 = vld [vmem:[#allocation2 + $0xf8] sm:$0xff]
    %v75 = vld [vmem:[#allocation2 + $0x100] sm:$0xff]
    %v76 = vld [vmem:[#allocation2 + $0x108] sm:$0xff]
    %v77 = vld [vmem:[#allocation2 + $0x110] sm:$0xff]
    %v78 = vld [vmem:[#allocation2 + $0x118] sm:$0xff]
    %v79 = vld [vmem:[#allocation2 + $0x120] sm:$0xff]
    %v80 = vld [vmem:[#allocation2 + $0x128] sm:$0xff]
    %v81 = vld [vmem:[#allocation2 + $0x130] sm:$0xff]
    %v82 = vld [vmem:[#allocation2 + $0x138] sm:$0xff]
    %v83 = vld [vmem:[#allocation2 + $0x140] sm:$0xff]
    %v84 = vld [vmem:[#allocation2 + $0x148] sm:$0xff]
    %v85 = vld [vmem:[#allocation2 + $0x150] sm:$0xff]
    %v86 = vld [vmem:[#allocation2 + $0x158] sm:$0xff]
    %v87 = vld [vmem:[#allocation2 + $0x160] sm:$0xff]
    %v88 = vld [vmem:[#allocation2 + $0x168] sm:$0xff]
    %v89 = vld [vmem:[#allocation2 + $0x170] sm:$0xff]
    %v90 = vld [vmem:[#allocation2 + $0x178] sm:$0xff]
    %v91 = vld [vmem:[#allocation2 + $0x180] sm:$0xff]
    %v92 = vld [vmem:[#allocation2 + $0x188] sm:$0xff]
    %v93 = vld [vmem:[#allocation2 + $0x190] sm:$0xff]
    %v94 = vld [vmem:[#allocation2 + $0x198] sm:$0xff]
    %v95 = vld [vmem:[#allocation2 + $0x1a0] sm:$0xff]
    %v96 = vld [vmem:[#allocation2 + $0x1a8] sm:$0xff]
    %v97 = vld [vmem:[#allocation2 + $0x1b0] sm:$0xff]
    %v98 = vld [vmem:[#allocation2 + $0x1b8] sm:$0xff]
    %v99 = vld [vmem:[#allocation2 + $0x1c0] sm:$0xff]
    %v100 = vld [vmem:[#allocation2 + $0x1c8] sm:$0xff]
    %v101 = vld [vmem:[#allocation2 + $0x1d0] sm:$0xff]
    %v102 = vld [vmem:[#allocation2 + $0x1d8] sm:$0xff]
    %v103 = vld [vmem:[#allocation2 + $0x1e0] sm:$0xff]
    %v104 = vld [vmem:[#allocation2 + $0x1e8] sm:$0xff]
    %v105 = vld [vmem:[#allocation2 + $0x1f0] sm:$0xff]
    %v106 = vld [vmem:[#allocation2 + $0x1f8] sm:$0xff]
    %v107 = vld [vmem:[#allocation2 + $0x200] sm:$0xff]
    %v108 = vld [vmem:[#allocation2 + $0x208] sm:$0xff]
    %v109 = vld [vmem:[#allocation2 + $0x210] sm:$0xff]
    %v110 = vld [vmem:[#allocation2 + $0x218] sm:$0xff]
    %v111 = vld [vmem:[#allocation2 + $0x220] sm:$0xff]
    %v112 = vld [vmem:[#allocation2 + $0x228] sm:$0xff]
    %v113 = vld [vmem:[#allocation2 + $0x230] sm:$0xff]
    %v114 = vld [vmem:[#allocation2 + $0x238] sm:$0xff]
    %v115 = vld [vmem:[#allocation2 + $0x240] sm:$0xff]
    %v116 = vld [vmem:[#allocation2 + $0x248] sm:$0xff]
    %v117 = vld [vmem:[#allocation2 + $0x250] sm:$0xff]
    %v118 = vld [vmem:[#allocation2 + $0x258] sm:$0xff]
    %v119 = vld [vmem:[#allocation2 + $0x260] sm:$0xff]
    %v120 = vld [vmem:[#allocation2 + $0x268] sm:$0xff]
    %v121 = vld [vmem:[#allocation2 + $0x270] sm:$0xff]
    %v122 = vld [vmem:[#allocation2 + $0x278] sm:$0xff]
    %v123 = vld [vmem:[#allocation2 + $0x280] sm:$0xff]
    %v124 = vld [vmem:[#allocation2 + $0x288] sm:$0xff]
    %v125 = vld [vmem:[#allocation2 + $0x290] sm:$0xff]
    %v126 = vld [vmem:[#allocation2 + $0x298] sm:$0xff]
    %v127 = vld [vmem:[#allocation2 + $0x2a0] sm:$0xff]
    %v128 = vld [vmem:[#allocation2 + $0x2a8] sm:$0xff]
    %v129 = vld [vmem:[#allocation2 + $0x2b0] sm:$0xff]
    %v130 = vld [vmem:[#allocation2 + $0x2b8] sm:$0xff]
    %v131 = vld [vmem:[#allocation2 + $0x2c0] sm:$0xff]
    %v132 = vld [vmem:[#allocation2 + $0x2c8] sm:$0xff]
    %v133 = vld [vmem:[#allocation2 + $0x2d0] sm:$0xff]
    %v134 = vld [vmem:[#allocation2 + $0x2d8] sm:$0xff]
    %v135 = vld [vmem:[#allocation2 + $0x2e0] sm:$0xff]
    %v136 = vld [vmem:[#allocation2 + $0x2e8] sm:$0xff]
    %v137 = vld [vmem:[#allocation2 + $0x2f0] sm:$0xff]
    %v138 = vld [vmem:[#allocation2 + $0x2f8] sm:$0xff]
    %v139 = vld [vmem:[#allocation2 + $0x300] sm:$0xff]
    %v140 = vld [vmem:[#allocation2 + $0x308] sm:$0xff]
    %v141 = vld [vmem:[#allocation2 + $0x310] sm:$0xff]
    %v142 = vld [vmem:[#allocation2 + $0x318] sm:$0xff]
    %v143 = vld [vmem:[%s2] sm:$0x1]
    %v145 = vlaneseq
    %v146 = vshrl.u32 %v145, 7
    %v147 = vsub.s32 0, %v146
    %v148 = vrot.slane %v143, %v147
    %v158 = vcombine.low %v35, %v37
    %v159 = vcombine.high %v35, %v37
    %v160 = vcombine.low %v39, %v41
    %v161 = vcombine.high %v39, %v41
    %v163 = vunpack.c.l.s4 1983009808
    %v164 = vunpack.c.0.s8 %v163
    %v165 = vlaneseq
    %v166 = vshrl.u32 %v165, 7
    %v167 = vsub.s32 %v164, %v166
    %v168 = vrot.slane %v158, %v167
    %v170 = vunpack.c.l.s4 1983009808
    %v171 = vunpack.c.0.s8 %v170
    %v172 = vlaneseq
    %v173 = vshrl.u32 %v172, 7
    %v174 = vsub.s32 %v171, %v173
    %v175 = vrot.slane %v159, %v174
    %v177 = vunpack.c.l.s4 1983009808
    %v178 = vunpack.c.0.s8 %v177
    %v179 = vlaneseq
    %v180 = vshrl.u32 %v179, 7
    %v181 = vsub.s32 %v178, %v180
    %v182 = vrot.slane %v160, %v181
    %v184 = vunpack.c.l.s4 1983009808
    %v185 = vunpack.c.0.s8 %v184
    %v186 = vlaneseq
    %v187 = vshrl.u32 %v186, 7
    %v188 = vsub.s32 %v185, %v187
    %v189 = vrot.slane %v161, %v188
    %v190 = vcombine.low %v168, %v182
    %v191 = vcombine.high %v168, %v182
    %v192 = vcombine.low %v175, %v189
    %v193 = vcombine.high %v175, %v189
    %v194 = vcombine.low %v36, %v38
    %v195 = vcombine.high %v36, %v38
    %v196 = vcombine.low %v40, %v42
    %v197 = vcombine.high %v40, %v42
    %v199 = vunpack.c.l.s4 1983009808
    %v200 = vunpack.c.0.s8 %v199
    %v201 = vlaneseq
    %v202 = vshrl.u32 %v201, 7
    %v203 = vsub.s32 %v200, %v202
    %v204 = vrot.slane %v194, %v203
    %v206 = vunpack.c.l.s4 1983009808
    %v207 = vunpack.c.0.s8 %v206
    %v208 = vlaneseq
    %v209 = vshrl.u32 %v208, 7
    %v210 = vsub.s32 %v207, %v209
    %v211 = vrot.slane %v195, %v210
    %v213 = vunpack.c.l.s4 1983009808
    %v214 = vunpack.c.0.s8 %v213
    %v215 = vlaneseq
    %v216 = vshrl.u32 %v215, 7
    %v217 = vsub.s32 %v214, %v216
    %v218 = vrot.slane %v196, %v217
    %v220 = vunpack.c.l.s4 1983009808
    %v221 = vunpack.c.0.s8 %v220
    %v222 = vlaneseq
    %v223 = vshrl.u32 %v222, 7
    %v224 = vsub.s32 %v221, %v223
    %v225 = vrot.slane %v197, %v224
    %v226 = vcombine.low %v204, %v218
    %v227 = vcombine.high %v204, %v218
    %v228 = vcombine.low %v211, %v225
    %vm235 = vcmask 261120
    %v236 = vsel %vm235, %v228, 0
    %238 = vmatprep.subr.mxu0 0.0
    %v239 = vand.u32 %v58, 4294901760
    %240 = vmatpush1.msra.mxu0 %v239
    %241 = vmatprep.subr.mxu0 0.0
    %v242 = vand.u32 %v57, 4294901760
    %243 = vmatpush1.msra.mxu0 %v242
    %244 = vmatprep.subr.mxu0 0.0
    %v245 = vand.u32 %v56, 4294901760
    %246 = vmatpush1.msra.mxu0 %v245
    %247 = vmatprep.subr.mxu0 0.0
    %v248 = vand.u32 %v55, 4294901760
    %249 = vmatpush1.msra.mxu0 %v248
    %250 = vmatprep.subr.mxu0 0.0
    %v251 = vand.u32 %v54, 4294901760
    %252 = vmatpush1.msra.mxu0 %v251
    %253 = vmatprep.subr.mxu0 0.0
    %v254 = vand.u32 %v53, 4294901760
    %255 = vmatpush1.msra.mxu0 %v254
    %256 = vmatprep.subr.mxu0 0.0
    %v257 = vand.u32 %v52, 4294901760
    %258 = vmatpush1.msra.mxu0 %v257
    %259 = vmatprep.subr.mxu0 0.0
    %v260 = vand.u32 %v51, 4294901760
    %261 = vmatpush1.msra.mxu0 %v260
    %262 = vmatprep.subr.mxu0 0.0
    %v263 = vand.u32 %v50, 4294901760
    %264 = vmatpush1.msra.mxu0 %v263
    %265 = vmatprep.subr.mxu0 0.0
    %v266 = vand.u32 %v49, 4294901760
    %267 = vmatpush1.msra.mxu0 %v266
    %268 = vmatprep.subr.mxu0 0.0
    %v269 = vand.u32 %v48, 4294901760
    %270 = vmatpush1.msra.mxu0 %v269
    %271 = vmatprep.subr.mxu0 0.0
    %v272 = vand.u32 %v47, 4294901760
    %273 = vmatpush1.msra.mxu0 %v272
    %274 = vmatprep.subr.mxu0 0.0
    %v275 = vand.u32 %v46, 4294901760
    %276 = vmatpush1.msra.mxu0 %v275
    %277 = vmatprep.subr.mxu0 0.0
    %v278 = vand.u32 %v45, 4294901760
    %279 = vmatpush1.msra.mxu0 %v278
    %280 = vmatprep.subr.mxu0 0.0
    %v281 = vand.u32 %v44, 4294901760
    %282 = vmatpush1.msra.mxu0 %v281
    %283 = vmatprep.subr.mxu0 0.0
    %v284 = vand.u32 %v43, 4294901760
    %285 = vmatpush1.msra.mxu0 %v284
    %286 = vmatprep.subr.mxu0 0.0
    %v287 = vand.u32 %v74, 4294901760
    %288 = vmatpush2.msra.mxu0 %v287
    %289 = vmatprep.subr.mxu0 0.0
    %v290 = vand.u32 %v73, 4294901760
    %291 = vmatpush2.msra.mxu0 %v290
    %292 = vmatprep.subr.mxu0 0.0
    %v293 = vand.u32 %v72, 4294901760
    %294 = vmatpush2.msra.mxu0 %v293
    %295 = vmatprep.subr.mxu0 0.0
    %v296 = vand.u32 %v71, 4294901760
    %297 = vmatpush2.msra.mxu0 %v296
    %298 = vmatprep.subr.mxu0 0.0
    %v299 = vand.u32 %v70, 4294901760
    %300 = vmatpush2.msra.mxu0 %v299
    %301 = vmatprep.subr.mxu0 0.0
    %v302 = vand.u32 %v69, 4294901760
    %303 = vmatpush2.msra.mxu0 %v302
    %304 = vmatprep.subr.mxu0 0.0
    %v305 = vand.u32 %v68, 4294901760
    %306 = vmatpush2.msra.mxu0 %v305
    %307 = vmatprep.subr.mxu0 0.0
    %v308 = vand.u32 %v67, 4294901760
    %309 = vmatpush2.msra.mxu0 %v308
    %310 = vmatprep.subr.mxu0 0.0
    %v311 = vand.u32 %v66, 4294901760
    %312 = vmatpush2.msra.mxu0 %v311
    %313 = vmatprep.subr.mxu0 0.0
    %v314 = vand.u32 %v65, 4294901760
    %315 = vmatpush2.msra.mxu0 %v314
    %316 = vmatprep.subr.mxu0 0.0
    %v317 = vand.u32 %v64, 4294901760
    %318 = vmatpush2.msra.mxu0 %v317
    %319 = vmatprep.subr.mxu0 0.0
    %v320 = vand.u32 %v63, 4294901760
    %321 = vmatpush2.msra.mxu0 %v320
    %322 = vmatprep.subr.mxu0 0.0
    %v323 = vand.u32 %v62, 4294901760
    %324 = vmatpush2.msra.mxu0 %v323
    %325 = vmatprep.subr.mxu0 0.0
    %v326 = vand.u32 %v61, 4294901760
    %327 = vmatpush2.msra.mxu0 %v326
    %328 = vmatprep.subr.mxu0 0.0
    %v329 = vand.u32 %v60, 4294901760
    %330 = vmatpush2.msra.mxu0 %v329
    %331 = vmatprep.subr.mxu0 0.0
    %v332 = vand.u32 %v59, 4294901760
    %333 = vmatpush2.msra.mxu0 %v332
    %v334 = vand.u32 %v191, 4294901760
    %v335 = vsub.f32 %v191, %v334
    %v336 = vand.u32 %v335, 4294901760
    %v337 = vsub.f32 %v335, %v336
    %v338 = vand.u32 %v337, 4294901760
    %339 = vmatprep.mubr.f32.mxu0 %v338
    %v340 = vand.u32 %v190, 4294901760
    %v341 = vsub.f32 %v190, %v340
    %v342 = vand.u32 %v341, 4294901760
    %v343 = vsub.f32 %v341, %v342
    %v344 = vand.u32 %v343, 4294901760
    %345 = vmatmul.mubr.f32.gmra.mxu0 %v344
    %v346 = vpop.f32.mrf.mxu0
    %v347 = vadd.f32 %v148, %v346
    %v348 = vpop.f32.mrf.mxu0
    %349 = vdwg.mxu0
    %350 = vmatprep.subr.mxu0 0.0
    %v351 = vand.u32 %v58, 4294901760
    %v352 = vsub.f32 %v58, %v351
    %v353 = vand.u32 %v352, 4294901760
    %v354 = vsub.f32 %v352, %v353
    %v355 = vand.u32 %v354, 4294901760
    %356 = vmatpush1.msra.mxu0 %v355
    %357 = vmatprep.subr.mxu0 0.0
    %v358 = vand.u32 %v57, 4294901760
    %v359 = vsub.f32 %v57, %v358
    %v360 = vand.u32 %v359, 4294901760
    %v361 = vsub.f32 %v359, %v360
    %v362 = vand.u32 %v361, 4294901760
    %363 = vmatpush1.msra.mxu0 %v362
    %364 = vmatprep.subr.mxu0 0.0
    %v365 = vand.u32 %v56, 4294901760
    %v366 = vsub.f32 %v56, %v365
    %v367 = vand.u32 %v366, 4294901760
    %v368 = vsub.f32 %v366, %v367
    %v369 = vand.u32 %v368, 4294901760
    %370 = vmatpush1.msra.mxu0 %v369
    %371 = vmatprep.subr.mxu0 0.0
    %v372 = vand.u32 %v55, 4294901760
    %v373 = vsub.f32 %v55, %v372
    %v374 = vand.u32 %v373, 4294901760
    %v375 = vsub.f32 %v373, %v374
    %v376 = vand.u32 %v375, 4294901760
    %377 = vmatpush1.msra.mxu0 %v376
    %378 = vmatprep.subr.mxu0 0.0
    %v379 = vand.u32 %v54, 4294901760
    %v380 = vsub.f32 %v54, %v379
    %v381 = vand.u32 %v380, 4294901760
    %v382 = vsub.f32 %v380, %v381
    %v383 = vand.u32 %v382, 4294901760
    %384 = vmatpush1.msra.mxu0 %v383
    %385 = vmatprep.subr.mxu0 0.0
    %v386 = vand.u32 %v53, 4294901760
    %v387 = vsub.f32 %v53, %v386
    %v388 = vand.u32 %v387, 4294901760
    %v389 = vsub.f32 %v387, %v388
    %v390 = vand.u32 %v389, 4294901760
    %391 = vmatpush1.msra.mxu0 %v390
    %392 = vmatprep.subr.mxu0 0.0
    %v393 = vand.u32 %v52, 4294901760
    %v394 = vsub.f32 %v52, %v393
    %v395 = vand.u32 %v394, 4294901760
    %v396 = vsub.f32 %v394, %v395
    %v397 = vand.u32 %v396, 4294901760
    %398 = vmatpush1.msra.mxu0 %v397
    %399 = vmatprep.subr.mxu0 0.0
    %v400 = vand.u32 %v51, 4294901760
    %v401 = vsub.f32 %v51, %v400
    %v402 = vand.u32 %v401, 4294901760
    %v403 = vsub.f32 %v401, %v402
    %v404 = vand.u32 %v403, 4294901760
    %405 = vmatpush1.msra.mxu0 %v404
    %406 = vmatprep.subr.mxu0 0.0
    %v407 = vand.u32 %v50, 4294901760
    %v408 = vsub.f32 %v50, %v407
    %v409 = vand.u32 %v408, 4294901760
    %v410 = vsub.f32 %v408, %v409
    %v411 = vand.u32 %v410, 4294901760
    %412 = vmatpush1.msra.mxu0 %v411
    %413 = vmatprep.subr.mxu0 0.0
    %v414 = vand.u32 %v49, 4294901760
    %v415 = vsub.f32 %v49, %v414
    %v416 = vand.u32 %v415, 4294901760
    %v417 = vsub.f32 %v415, %v416
    %v418 = vand.u32 %v417, 4294901760
    %419 = vmatpush1.msra.mxu0 %v418
    %420 = vmatprep.subr.mxu0 0.0
    %v421 = vand.u32 %v48, 4294901760
    %v422 = vsub.f32 %v48, %v421
    %v423 = vand.u32 %v422, 4294901760
    %v424 = vsub.f32 %v422, %v423
    %v425 = vand.u32 %v424, 4294901760
    %426 = vmatpush1.msra.mxu0 %v425
    %427 = vmatprep.subr.mxu0 0.0
    %v428 = vand.u32 %v47, 4294901760
    %v429 = vsub.f32 %v47, %v428
    %v430 = vand.u32 %v429, 4294901760
    %v431 = vsub.f32 %v429, %v430
    %v432 = vand.u32 %v431, 4294901760
    %433 = vmatpush1.msra.mxu0 %v432
    %434 = vmatprep.subr.mxu0 0.0
    %v435 = vand.u32 %v46, 4294901760
    %v436 = vsub.f32 %v46, %v435
    %v437 = vand.u32 %v436, 4294901760
    %v438 = vsub.f32 %v436, %v437
    %v439 = vand.u32 %v438, 4294901760
    %440 = vmatpush1.msra.mxu0 %v439
    %441 = vmatprep.subr.mxu0 0.0
    %v442 = vand.u32 %v45, 4294901760
    %v443 = vsub.f32 %v45, %v442
    %v444 = vand.u32 %v443, 4294901760
    %v445 = vsub.f32 %v443, %v444
    %v446 = vand.u32 %v445, 4294901760
    %447 = vmatpush1.msra.mxu0 %v446
    %448 = vmatprep.subr.mxu0 0.0
    %v449 = vand.u32 %v44, 4294901760
    %v450 = vsub.f32 %v44, %v449
    %v451 = vand.u32 %v450, 4294901760
    %v452 = vsub.f32 %v450, %v451
    %v453 = vand.u32 %v452, 4294901760
    %454 = vmatpush1.msra.mxu0 %v453
    %455 = vmatprep.subr.mxu0 0.0
    %v456 = vand.u32 %v43, 4294901760
    %v457 = vsub.f32 %v43, %v456
    %v458 = vand.u32 %v457, 4294901760
    %v459 = vsub.f32 %v457, %v458
    %v460 = vand.u32 %v459, 4294901760
    %461 = vmatpush1.msra.mxu0 %v460
    %462 = vmatprep.subr.mxu0 0.0
    %v463 = vand.u32 %v74, 4294901760
    %v464 = vsub.f32 %v74, %v463
    %v465 = vand.u32 %v464, 4294901760
    %v466 = vsub.f32 %v464, %v465
    %v467 = vand.u32 %v466, 4294901760
    %468 = vmatpush2.msra.mxu0 %v467
    %469 = vmatprep.subr.mxu0 0.0
    %v470 = vand.u32 %v73, 4294901760
    %v471 = vsub.f32 %v73, %v470
    %v472 = vand.u32 %v471, 4294901760
    %v473 = vsub.f32 %v471, %v472
    %v474 = vand.u32 %v473, 4294901760
    %475 = vmatpush2.msra.mxu0 %v474
    %476 = vmatprep.subr.mxu0 0.0
    %v477 = vand.u32 %v72, 4294901760
    %v478 = vsub.f32 %v72, %v477
    %v479 = vand.u32 %v478, 4294901760
    %v480 = vsub.f32 %v478, %v479
    %v481 = vand.u32 %v480, 4294901760
    %482 = vmatpush2.msra.mxu0 %v481
    %483 = vmatprep.subr.mxu0 0.0
    %v484 = vand.u32 %v71, 4294901760
    %v485 = vsub.f32 %v71, %v484
    %v486 = vand.u32 %v485, 4294901760
    %v487 = vsub.f32 %v485, %v486
    %v488 = vand.u32 %v487, 4294901760
    %489 = vmatpush2.msra.mxu0 %v488
    %490 = vmatprep.subr.mxu0 0.0
    %v491 = vand.u32 %v70, 4294901760
    %v492 = vsub.f32 %v70, %v491
    %v493 = vand.u32 %v492, 4294901760
    %v494 = vsub.f32 %v492, %v493
    %v495 = vand.u32 %v494, 4294901760
    %496 = vmatpush2.msra.mxu0 %v495
    %497 = vmatprep.subr.mxu0 0.0
    %v498 = vand.u32 %v69, 4294901760
    %v499 = vsub.f32 %v69, %v498
    %v500 = vand.u32 %v499, 4294901760
    %v501 = vsub.f32 %v499, %v500
    %v502 = vand.u32 %v501, 4294901760
    %503 = vmatpush2.msra.mxu0 %v502
    %504 = vmatprep.subr.mxu0 0.0
    %v505 = vand.u32 %v68, 4294901760
    %v506 = vsub.f32 %v68, %v505
    %v507 = vand.u32 %v506, 4294901760
    %v508 = vsub.f32 %v506, %v507
    %v509 = vand.u32 %v508, 4294901760
    %510 = vmatpush2.msra.mxu0 %v509
    %511 = vmatprep.subr.mxu0 0.0
    %v512 = vand.u32 %v67, 4294901760
    %v513 = vsub.f32 %v67, %v512
    %v514 = vand.u32 %v513, 4294901760
    %v515 = vsub.f32 %v513, %v514
    %v516 = vand.u32 %v515, 4294901760
    %517 = vmatpush2.msra.mxu0 %v516
    %518 = vmatprep.subr.mxu0 0.0
    %v519 = vand.u32 %v66, 4294901760
    %v520 = vsub.f32 %v66, %v519
    %v521 = vand.u32 %v520, 4294901760
    %v522 = vsub.f32 %v520, %v521
    %v523 = vand.u32 %v522, 4294901760
    %524 = vmatpush2.msra.mxu0 %v523
    %525 = vmatprep.subr.mxu0 0.0
    %v526 = vand.u32 %v65, 4294901760
    %v527 = vsub.f32 %v65, %v526
    %v528 = vand.u32 %v527, 4294901760
    %v529 = vsub.f32 %v527, %v528
    %v530 = vand.u32 %v529, 4294901760
    %531 = vmatpush2.msra.mxu0 %v530
    %532 = vmatprep.subr.mxu0 0.0
    %v533 = vand.u32 %v64, 4294901760
    %v534 = vsub.f32 %v64, %v533
    %v535 = vand.u32 %v534, 4294901760
    %v536 = vsub.f32 %v534, %v535
    %v537 = vand.u32 %v536, 4294901760
    %538 = vmatpush2.msra.mxu0 %v537
    %539 = vmatprep.subr.mxu0 0.0
    %v540 = vand.u32 %v63, 4294901760
    %v541 = vsub.f32 %v63, %v540
    %v542 = vand.u32 %v541, 4294901760
    %v543 = vsub.f32 %v541, %v542
    %v544 = vand.u32 %v543, 4294901760
    %545 = vmatpush2.msra.mxu0 %v544
    %546 = vmatprep.subr.mxu0 0.0
    %v547 = vand.u32 %v62, 4294901760
    %v548 = vsub.f32 %v62, %v547
    %v549 = vand.u32 %v548, 4294901760
    %v550 = vsub.f32 %v548, %v549
    %v551 = vand.u32 %v550, 4294901760
    %552 = vmatpush2.msra.mxu0 %v551
    %553 = vmatprep.subr.mxu0 0.0
    %v554 = vand.u32 %v61, 4294901760
    %v555 = vsub.f32 %v61, %v554
    %v556 = vand.u32 %v555, 4294901760
    %v557 = vsub.f32 %v555, %v556
    %v558 = vand.u32 %v557, 4294901760
    %559 = vmatpush2.msra.mxu0 %v558
    %560 = vmatprep.subr.mxu0 0.0
    %v561 = vand.u32 %v60, 4294901760
    %v562 = vsub.f32 %v60, %v561
    %v563 = vand.u32 %v562, 4294901760
    %v564 = vsub.f32 %v562, %v563
    %v565 = vand.u32 %v564, 4294901760
    %566 = vmatpush2.msra.mxu0 %v565
    %567 = vmatprep.subr.mxu0 0.0
    %v568 = vand.u32 %v59, 4294901760
    %v569 = vsub.f32 %v59, %v568
    %v570 = vand.u32 %v569, 4294901760
    %v571 = vsub.f32 %v569, %v570
    %v572 = vand.u32 %v571, 4294901760
    %573 = vmatpush2.msra.mxu0 %v572
    %v574 = vand.u32 %v191, 4294901760
    %575 = vmatprep.mubr.f32.mxu0 %v574
    %v576 = vand.u32 %v190, 4294901760
    %577 = vmatmul.mubr.f32.gmra.mxu0 %v576
    %v578 = vpop.f32.mrf.mxu0
    %v579 = vadd.f32 %v347, %v578
    %v580 = vpop.f32.mrf.mxu0
    %581 = vdwg.mxu0
    %582 = vmatprep.subr.mxu0 0.0
    %v583 = vand.u32 %v58, 4294901760
    %v584 = vsub.f32 %v58, %v583
    %585 = vmatpush1.msra.mxu0 %v584
    %586 = vmatprep.subr.mxu0 0.0
    %v587 = vand.u32 %v57, 4294901760
    %v588 = vsub.f32 %v57, %v587
    %589 = vmatpush1.msra.mxu0 %v588
    %590 = vmatprep.subr.mxu0 0.0
    %v591 = vand.u32 %v56, 4294901760
    %v592 = vsub.f32 %v56, %v591
    %593 = vmatpush1.msra.mxu0 %v592
    %594 = vmatprep.subr.mxu0 0.0
    %v595 = vand.u32 %v55, 4294901760
    %v596 = vsub.f32 %v55, %v595
    %597 = vmatpush1.msra.mxu0 %v596
    %598 = vmatprep.subr.mxu0 0.0
    %v599 = vand.u32 %v54, 4294901760
    %v600 = vsub.f32 %v54, %v599
    %601 = vmatpush1.msra.mxu0 %v600
    %602 = vmatprep.subr.mxu0 0.0
    %v603 = vand.u32 %v53, 4294901760
    %v604 = vsub.f32 %v53, %v603
    %605 = vmatpush1.msra.mxu0 %v604
    %606 = vmatprep.subr.mxu0 0.0
    %v607 = vand.u32 %v52, 4294901760
    %v608 = vsub.f32 %v52, %v607
    %609 = vmatpush1.msra.mxu0 %v608
    %610 = vmatprep.subr.mxu0 0.0
    %v611 = vand.u32 %v51, 4294901760
    %v612 = vsub.f32 %v51, %v611
    %613 = vmatpush1.msra.mxu0 %v612
    %614 = vmatprep.subr.mxu0 0.0
    %v615 = vand.u32 %v50, 4294901760
    %v616 = vsub.f32 %v50, %v615
    %617 = vmatpush1.msra.mxu0 %v616
    %618 = vmatprep.subr.mxu0 0.0
    %v619 = vand.u32 %v49, 4294901760
    %v620 = vsub.f32 %v49, %v619
    %621 = vmatpush1.msra.mxu0 %v620
    %622 = vmatprep.subr.mxu0 0.0
    %v623 = vand.u32 %v48, 4294901760
    %v624 = vsub.f32 %v48, %v623
    %625 = vmatpush1.msra.mxu0 %v624
    %626 = vmatprep.subr.mxu0 0.0
    %v627 = vand.u32 %v47, 4294901760
    %v628 = vsub.f32 %v47, %v627
    %629 = vmatpush1.msra.mxu0 %v628
    %630 = vmatprep.subr.mxu0 0.0
    %v631 = vand.u32 %v46, 4294901760
    %v632 = vsub.f32 %v46, %v631
    %633 = vmatpush1.msra.mxu0 %v632
    %634 = vmatprep.subr.mxu0 0.0
    %v635 = vand.u32 %v45, 4294901760
    %v636 = vsub.f32 %v45, %v635
    %637 = vmatpush1.msra.mxu0 %v636
    %638 = vmatprep.subr.mxu0 0.0
    %v639 = vand.u32 %v44, 4294901760
    %v640 = vsub.f32 %v44, %v639
    %641 = vmatpush1.msra.mxu0 %v640
    %642 = vmatprep.subr.mxu0 0.0
    %v643 = vand.u32 %v43, 4294901760
    %v644 = vsub.f32 %v43, %v643
    %645 = vmatpush1.msra.mxu0 %v644
    %646 = vmatprep.subr.mxu0 0.0
    %v647 = vand.u32 %v74, 4294901760
    %v648 = vsub.f32 %v74, %v647
    %649 = vmatpush2.msra.mxu0 %v648
    %650 = vmatprep.subr.mxu0 0.0
    %v651 = vand.u32 %v73, 4294901760
    %v652 = vsub.f32 %v73, %v651
    %653 = vmatpush2.msra.mxu0 %v652
    %654 = vmatprep.subr.mxu0 0.0
    %v655 = vand.u32 %v72, 4294901760
    %v656 = vsub.f32 %v72, %v655
    %657 = vmatpush2.msra.mxu0 %v656
    %658 = vmatprep.subr.mxu0 0.0
    %v659 = vand.u32 %v71, 4294901760
    %v660 = vsub.f32 %v71, %v659
    %661 = vmatpush2.msra.mxu0 %v660
    %662 = vmatprep.subr.mxu0 0.0
    %v663 = vand.u32 %v70, 4294901760
    %v664 = vsub.f32 %v70, %v663
    %665 = vmatpush2.msra.mxu0 %v664
    %666 = vmatprep.subr.mxu0 0.0
    %v667 = vand.u32 %v69, 4294901760
    %v668 = vsub.f32 %v69, %v667
    %669 = vmatpush2.msra.mxu0 %v668
    %670 = vmatprep.subr.mxu0 0.0
    %v671 = vand.u32 %v68, 4294901760
    %v672 = vsub.f32 %v68, %v671
    %673 = vmatpush2.msra.mxu0 %v672
    %674 = vmatprep.subr.mxu0 0.0
    %v675 = vand.u32 %v67, 4294901760
    %v676 = vsub.f32 %v67, %v675
    %677 = vmatpush2.msra.mxu0 %v676
    %678 = vmatprep.subr.mxu0 0.0
    %v679 = vand.u32 %v66, 4294901760
    %v680 = vsub.f32 %v66, %v679
    %681 = vmatpush2.msra.mxu0 %v680
    %682 = vmatprep.subr.mxu0 0.0
    %v683 = vand.u32 %v65, 4294901760
    %v684 = vsub.f32 %v65, %v683
    %685 = vmatpush2.msra.mxu0 %v684
    %686 = vmatprep.subr.mxu0 0.0
    %v687 = vand.u32 %v64, 4294901760
    %v688 = vsub.f32 %v64, %v687
    %689 = vmatpush2.msra.mxu0 %v688
    %690 = vmatprep.subr.mxu0 0.0
    %v691 = vand.u32 %v63, 4294901760
    %v692 = vsub.f32 %v63, %v691
    %693 = vmatpush2.msra.mxu0 %v692
    %694 = vmatprep.subr.mxu0 0.0
    %v695 = vand.u32 %v62, 4294901760
    %v696 = vsub.f32 %v62, %v695
    %697 = vmatpush2.msra.mxu0 %v696
    %698 = vmatprep.subr.mxu0 0.0
    %v699 = vand.u32 %v61, 4294901760
    %v700 = vsub.f32 %v61, %v699
    %701 = vmatpush2.msra.mxu0 %v700
    %702 = vmatprep.subr.mxu0 0.0
    %v703 = vand.u32 %v60, 4294901760
    %v704 = vsub.f32 %v60, %v703
    %705 = vmatpush2.msra.mxu0 %v704
    %706 = vmatprep.subr.mxu0 0.0
    %v707 = vand.u32 %v59, 4294901760
    %v708 = vsub.f32 %v59, %v707
    %709 = vmatpush2.msra.mxu0 %v708
    %v710 = vand.u32 %v191, 4294901760
    %v711 = vsub.f32 %v191, %v710
    %712 = vmatprep.mubr.f32.mxu0 %v711
    %v713 = vand.u32 %v190, 4294901760
    %v714 = vsub.f32 %v190, %v713
    %715 = vmatmul.mubr.f32.gmra.mxu0 %v714
    %v716 = vpop.f32.mrf.mxu0
    %v717 = vadd.f32 %v579, %v716
    %v718 = vpop.f32.mrf.mxu0
    %719 = vdwg.mxu0
    %720 = vmatprep.subr.mxu0 0.0
    %v721 = vand.u32 %v58, 4294901760
    %722 = vmatpush1.msra.mxu0 %v721
    %723 = vmatprep.subr.mxu0 0.0
    %v724 = vand.u32 %v57, 4294901760
    %725 = vmatpush1.msra.mxu0 %v724
    %726 = vmatprep.subr.mxu0 0.0
    %v727 = vand.u32 %v56, 4294901760
    %728 = vmatpush1.msra.mxu0 %v727
    %729 = vmatprep.subr.mxu0 0.0
    %v730 = vand.u32 %v55, 4294901760
    %731 = vmatpush1.msra.mxu0 %v730
    %732 = vmatprep.subr.mxu0 0.0
    %v733 = vand.u32 %v54, 4294901760
    %734 = vmatpush1.msra.mxu0 %v733
    %735 = vmatprep.subr.mxu0 0.0
    %v736 = vand.u32 %v53, 4294901760
    %737 = vmatpush1.msra.mxu0 %v736
    %738 = vmatprep.subr.mxu0 0.0
    %v739 = vand.u32 %v52, 4294901760
    %740 = vmatpush1.msra.mxu0 %v739
    %741 = vmatprep.subr.mxu0 0.0
    %v742 = vand.u32 %v51, 4294901760
    %743 = vmatpush1.msra.mxu0 %v742
    %744 = vmatprep.subr.mxu0 0.0
    %v745 = vand.u32 %v50, 4294901760
    %746 = vmatpush1.msra.mxu0 %v745
    %747 = vmatprep.subr.mxu0 0.0
    %v748 = vand.u32 %v49, 4294901760
    %749 = vmatpush1.msra.mxu0 %v748
    %750 = vmatprep.subr.mxu0 0.0
    %v751 = vand.u32 %v48, 4294901760
    %752 = vmatpush1.msra.mxu0 %v751
    %753 = vmatprep.subr.mxu0 0.0
    %v754 = vand.u32 %v47, 4294901760
    %755 = vmatpush1.msra.mxu0 %v754
    %756 = vmatprep.subr.mxu0 0.0
    %v757 = vand.u32 %v46, 4294901760
    %758 = vmatpush1.msra.mxu0 %v757
    %759 = vmatprep.subr.mxu0 0.0
    %v760 = vand.u32 %v45, 4294901760
    %761 = vmatpush1.msra.mxu0 %v760
    %762 = vmatprep.subr.mxu0 0.0
    %v763 = vand.u32 %v44, 4294901760
    %764 = vmatpush1.msra.mxu0 %v763
    %765 = vmatprep.subr.mxu0 0.0
    %v766 = vand.u32 %v43, 4294901760
    %767 = vmatpush1.msra.mxu0 %v766
    %768 = vmatprep.subr.mxu0 0.0
    %v769 = vand.u32 %v74, 4294901760
    %770 = vmatpush2.msra.mxu0 %v769
    %771 = vmatprep.subr.mxu0 0.0
    %v772 = vand.u32 %v73, 4294901760
    %773 = vmatpush2.msra.mxu0 %v772
    %774 = vmatprep.subr.mxu0 0.0
    %v775 = vand.u32 %v72, 4294901760
    %776 = vmatpush2.msra.mxu0 %v775
    %777 = vmatprep.subr.mxu0 0.0
    %v778 = vand.u32 %v71, 4294901760
    %779 = vmatpush2.msra.mxu0 %v778
    %780 = vmatprep.subr.mxu0 0.0
    %v781 = vand.u32 %v70, 4294901760
    %782 = vmatpush2.msra.mxu0 %v781
    %783 = vmatprep.subr.mxu0 0.0
    %v784 = vand.u32 %v69, 4294901760
    %785 = vmatpush2.msra.mxu0 %v784
    %786 = vmatprep.subr.mxu0 0.0
    %v787 = vand.u32 %v68, 4294901760
    %788 = vmatpush2.msra.mxu0 %v787
    %789 = vmatprep.subr.mxu0 0.0
    %v790 = vand.u32 %v67, 4294901760
    %791 = vmatpush2.msra.mxu0 %v790
    %792 = vmatprep.subr.mxu0 0.0
    %v793 = vand.u32 %v66, 4294901760
    %794 = vmatpush2.msra.mxu0 %v793
    %795 = vmatprep.subr.mxu0 0.0
    %v796 = vand.u32 %v65, 4294901760
    %797 = vmatpush2.msra.mxu0 %v796
    %798 = vmatprep.subr.mxu0 0.0
    %v799 = vand.u32 %v64, 4294901760
    %800 = vmatpush2.msra.mxu0 %v799
    %801 = vmatprep.subr.mxu0 0.0
    %v802 = vand.u32 %v63, 4294901760
    %803 = vmatpush2.msra.mxu0 %v802
    %804 = vmatprep.subr.mxu0 0.0
    %v805 = vand.u32 %v62, 4294901760
    %806 = vmatpush2.msra.mxu0 %v805
    %807 = vmatprep.subr.mxu0 0.0
    %v808 = vand.u32 %v61, 4294901760
    %809 = vmatpush2.msra.mxu0 %v808
    %810 = vmatprep.subr.mxu0 0.0
    %v811 = vand.u32 %v60, 4294901760
    %812 = vmatpush2.msra.mxu0 %v811
    %813 = vmatprep.subr.mxu0 0.0
    %v814 = vand.u32 %v59, 4294901760
    %815 = vmatpush2.msra.mxu0 %v814
    %v816 = vand.u32 %v191, 4294901760
    %v817 = vsub.f32 %v191, %v816
    %v818 = vand.u32 %v817, 4294901760
    %819 = vmatprep.mubr.f32.mxu0 %v818
    %v820 = vand.u32 %v190, 4294901760
    %v821 = vsub.f32 %v190, %v820
    %v822 = vand.u32 %v821, 4294901760
    %823 = vmatmul.mubr.f32.gmra.mxu0 %v822
    %v824 = vpop.f32.mrf.mxu0
    %v825 = vadd.f32 %v717, %v824
    %v826 = vpop.f32.mrf.mxu0
    %827 = vdwg.mxu0
    %828 = vmatprep.subr.mxu0 0.0
    %v829 = vand.u32 %v58, 4294901760
    %v830 = vsub.f32 %v58, %v829
    %v831 = vand.u32 %v830, 4294901760
    %832 = vmatpush1.msra.mxu0 %v831
    %833 = vmatprep.subr.mxu0 0.0
    %v834 = vand.u32 %v57, 4294901760
    %v835 = vsub.f32 %v57, %v834
    %v836 = vand.u32 %v835, 4294901760
    %837 = vmatpush1.msra.mxu0 %v836
    %838 = vmatprep.subr.mxu0 0.0
    %v839 = vand.u32 %v56, 4294901760
    %v840 = vsub.f32 %v56, %v839
    %v841 = vand.u32 %v840, 4294901760
    %842 = vmatpush1.msra.mxu0 %v841
    %843 = vmatprep.subr.mxu0 0.0
    %v844 = vand.u32 %v55, 4294901760
    %v845 = vsub.f32 %v55, %v844
    %v846 = vand.u32 %v845, 4294901760
    %847 = vmatpush1.msra.mxu0 %v846
    %848 = vmatprep.subr.mxu0 0.0
    %v849 = vand.u32 %v54, 4294901760
    %v850 = vsub.f32 %v54, %v849
    %v851 = vand.u32 %v850, 4294901760
    %852 = vmatpush1.msra.mxu0 %v851
    %853 = vmatprep.subr.mxu0 0.0
    %v854 = vand.u32 %v53, 4294901760
    %v855 = vsub.f32 %v53, %v854
    %v856 = vand.u32 %v855, 4294901760
    %857 = vmatpush1.msra.mxu0 %v856
    %858 = vmatprep.subr.mxu0 0.0
    %v859 = vand.u32 %v52, 4294901760
    %v860 = vsub.f32 %v52, %v859
    %v861 = vand.u32 %v860, 4294901760
    %862 = vmatpush1.msra.mxu0 %v861
    %863 = vmatprep.subr.mxu0 0.0
    %v864 = vand.u32 %v51, 4294901760
    %v865 = vsub.f32 %v51, %v864
    %v866 = vand.u32 %v865, 4294901760
    %867 = vmatpush1.msra.mxu0 %v866
    %868 = vmatprep.subr.mxu0 0.0
    %v869 = vand.u32 %v50, 4294901760
    %v870 = vsub.f32 %v50, %v869
    %v871 = vand.u32 %v870, 4294901760
    %872 = vmatpush1.msra.mxu0 %v871
    %873 = vmatprep.subr.mxu0 0.0
    %v874 = vand.u32 %v49, 4294901760
    %v875 = vsub.f32 %v49, %v874
    %v876 = vand.u32 %v875, 4294901760
    %877 = vmatpush1.msra.mxu0 %v876
    %878 = vmatprep.subr.mxu0 0.0
    %v879 = vand.u32 %v48, 4294901760
    %v880 = vsub.f32 %v48, %v879
    %v881 = vand.u32 %v880, 4294901760
    %882 = vmatpush1.msra.mxu0 %v881
    %883 = vmatprep.subr.mxu0 0.0
    %v884 = vand.u32 %v47, 4294901760
    %v885 = vsub.f32 %v47, %v884
    %v886 = vand.u32 %v885, 4294901760
    %887 = vmatpush1.msra.mxu0 %v886
    %888 = vmatprep.subr.mxu0 0.0
    %v889 = vand.u32 %v46, 4294901760
    %v890 = vsub.f32 %v46, %v889
    %v891 = vand.u32 %v890, 4294901760
    %892 = vmatpush1.msra.mxu0 %v891
    %893 = vmatprep.subr.mxu0 0.0
    %v894 = vand.u32 %v45, 4294901760
    %v895 = vsub.f32 %v45, %v894
    %v896 = vand.u32 %v895, 4294901760
    %897 = vmatpush1.msra.mxu0 %v896
    %898 = vmatprep.subr.mxu0 0.0
    %v899 = vand.u32 %v44, 4294901760
    %v900 = vsub.f32 %v44, %v899
    %v901 = vand.u32 %v900, 4294901760
    %902 = vmatpush1.msra.mxu0 %v901
    %903 = vmatprep.subr.mxu0 0.0
    %v904 = vand.u32 %v43, 4294901760
    %v905 = vsub.f32 %v43, %v904
    %v906 = vand.u32 %v905, 4294901760
    %907 = vmatpush1.msra.mxu0 %v906
    %908 = vmatprep.subr.mxu0 0.0
    %v909 = vand.u32 %v74, 4294901760
    %v910 = vsub.f32 %v74, %v909
    %v911 = vand.u32 %v910, 4294901760
    %912 = vmatpush2.msra.mxu0 %v911
    %913 = vmatprep.subr.mxu0 0.0
    %v914 = vand.u32 %v73, 4294901760
    %v915 = vsub.f32 %v73, %v914
    %v916 = vand.u32 %v915, 4294901760
    %917 = vmatpush2.msra.mxu0 %v916
    %918 = vmatprep.subr.mxu0 0.0
    %v919 = vand.u32 %v72, 4294901760
    %v920 = vsub.f32 %v72, %v919
    %v921 = vand.u32 %v920, 4294901760
    %922 = vmatpush2.msra.mxu0 %v921
    %923 = vmatprep.subr.mxu0 0.0
    %v924 = vand.u32 %v71, 4294901760
    %v925 = vsub.f32 %v71, %v924
    %v926 = vand.u32 %v925, 4294901760
    %927 = vmatpush2.msra.mxu0 %v926
    %928 = vmatprep.subr.mxu0 0.0
    %v929 = vand.u32 %v70, 4294901760
    %v930 = vsub.f32 %v70, %v929
    %v931 = vand.u32 %v930, 4294901760
    %932 = vmatpush2.msra.mxu0 %v931
    %933 = vmatprep.subr.mxu0 0.0
    %v934 = vand.u32 %v69, 4294901760
    %v935 = vsub.f32 %v69, %v934
    %v936 = vand.u32 %v935, 4294901760
    %937 = vmatpush2.msra.mxu0 %v936
    %938 = vmatprep.subr.mxu0 0.0
    %v939 = vand.u32 %v68, 4294901760
    %v940 = vsub.f32 %v68, %v939
    %v941 = vand.u32 %v940, 4294901760
    %942 = vmatpush2.msra.mxu0 %v941
    %943 = vmatprep.subr.mxu0 0.0
    %v944 = vand.u32 %v67, 4294901760
    %v945 = vsub.f32 %v67, %v944
    %v946 = vand.u32 %v945, 4294901760
    %947 = vmatpush2.msra.mxu0 %v946
    %948 = vmatprep.subr.mxu0 0.0
    %v949 = vand.u32 %v66, 4294901760
    %v950 = vsub.f32 %v66, %v949
    %v951 = vand.u32 %v950, 4294901760
    %952 = vmatpush2.msra.mxu0 %v951
    %953 = vmatprep.subr.mxu0 0.0
    %v954 = vand.u32 %v65, 4294901760
    %v955 = vsub.f32 %v65, %v954
    %v956 = vand.u32 %v955, 4294901760
    %957 = vmatpush2.msra.mxu0 %v956
    %958 = vmatprep.subr.mxu0 0.0
    %v959 = vand.u32 %v64, 4294901760
    %v960 = vsub.f32 %v64, %v959
    %v961 = vand.u32 %v960, 4294901760
    %962 = vmatpush2.msra.mxu0 %v961
    %963 = vmatprep.subr.mxu0 0.0
    %v964 = vand.u32 %v63, 4294901760
    %v965 = vsub.f32 %v63, %v964
    %v966 = vand.u32 %v965, 4294901760
    %967 = vmatpush2.msra.mxu0 %v966
    %968 = vmatprep.subr.mxu0 0.0
    %v969 = vand.u32 %v62, 4294901760
    %v970 = vsub.f32 %v62, %v969
    %v971 = vand.u32 %v970, 4294901760
    %972 = vmatpush2.msra.mxu0 %v971
    %973 = vmatprep.subr.mxu0 0.0
    %v974 = vand.u32 %v61, 4294901760
    %v975 = vsub.f32 %v61, %v974
    %v976 = vand.u32 %v975, 4294901760
    %977 = vmatpush2.msra.mxu0 %v976
    %978 = vmatprep.subr.mxu0 0.0
    %v979 = vand.u32 %v60, 4294901760
    %v980 = vsub.f32 %v60, %v979
    %v981 = vand.u32 %v980, 4294901760
    %982 = vmatpush2.msra.mxu0 %v981
    %983 = vmatprep.subr.mxu0 0.0
    %v984 = vand.u32 %v59, 4294901760
    %v985 = vsub.f32 %v59, %v984
    %v986 = vand.u32 %v985, 4294901760
    %987 = vmatpush2.msra.mxu0 %v986
    %v988 = vand.u32 %v191, 4294901760
    %989 = vmatprep.mubr.f32.mxu0 %v988
    %v990 = vand.u32 %v190, 4294901760
    %991 = vmatmul.mubr.f32.gmra.mxu0 %v990
    %v992 = vpop.f32.mrf.mxu0
    %v993 = vadd.f32 %v825, %v992
    %v994 = vpop.f32.mrf.mxu0
    %995 = vdwg.mxu0
    %996 = vmatprep.subr.mxu0 0.0
    %v997 = vand.u32 %v58, 4294901760
    %998 = vmatpush1.msra.mxu0 %v997
    %999 = vmatprep.subr.mxu0 0.0
    %v1000 = vand.u32 %v57, 4294901760
    %1001 = vmatpush1.msra.mxu0 %v1000
    %1002 = vmatprep.subr.mxu0 0.0
    %v1003 = vand.u32 %v56, 4294901760
    %1004 = vmatpush1.msra.mxu0 %v1003
    %1005 = vmatprep.subr.mxu0 0.0
    %v1006 = vand.u32 %v55, 4294901760
    %1007 = vmatpush1.msra.mxu0 %v1006
    %1008 = vmatprep.subr.mxu0 0.0
    %v1009 = vand.u32 %v54, 4294901760
    %1010 = vmatpush1.msra.mxu0 %v1009
    %1011 = vmatprep.subr.mxu0 0.0
    %v1012 = vand.u32 %v53, 4294901760
    %1013 = vmatpush1.msra.mxu0 %v1012
    %1014 = vmatprep.subr.mxu0 0.0
    %v1015 = vand.u32 %v52, 4294901760
    %1016 = vmatpush1.msra.mxu0 %v1015
    %1017 = vmatprep.subr.mxu0 0.0
    %v1018 = vand.u32 %v51, 4294901760
    %1019 = vmatpush1.msra.mxu0 %v1018
    %1020 = vmatprep.subr.mxu0 0.0
    %v1021 = vand.u32 %v50, 4294901760
    %1022 = vmatpush1.msra.mxu0 %v1021
    %1023 = vmatprep.subr.mxu0 0.0
    %v1024 = vand.u32 %v49, 4294901760
    %1025 = vmatpush1.msra.mxu0 %v1024
    %1026 = vmatprep.subr.mxu0 0.0
    %v1027 = vand.u32 %v48, 4294901760
    %1028 = vmatpush1.msra.mxu0 %v1027
    %1029 = vmatprep.subr.mxu0 0.0
    %v1030 = vand.u32 %v47, 4294901760
    %1031 = vmatpush1.msra.mxu0 %v1030
    %1032 = vmatprep.subr.mxu0 0.0
    %v1033 = vand.u32 %v46, 4294901760
    %1034 = vmatpush1.msra.mxu0 %v1033
    %1035 = vmatprep.subr.mxu0 0.0
    %v1036 = vand.u32 %v45, 4294901760
    %1037 = vmatpush1.msra.mxu0 %v1036
    %1038 = vmatprep.subr.mxu0 0.0
    %v1039 = vand.u32 %v44, 4294901760
    %1040 = vmatpush1.msra.mxu0 %v1039
    %1041 = vmatprep.subr.mxu0 0.0
    %v1042 = vand.u32 %v43, 4294901760
    %1043 = vmatpush1.msra.mxu0 %v1042
    %1044 = vmatprep.subr.mxu0 0.0
    %v1045 = vand.u32 %v74, 4294901760
    %1046 = vmatpush2.msra.mxu0 %v1045
    %1047 = vmatprep.subr.mxu0 0.0
    %v1048 = vand.u32 %v73, 4294901760
    %1049 = vmatpush2.msra.mxu0 %v1048
    %1050 = vmatprep.subr.mxu0 0.0
    %v1051 = vand.u32 %v72, 4294901760
    %1052 = vmatpush2.msra.mxu0 %v1051
    %1053 = vmatprep.subr.mxu0 0.0
    %v1054 = vand.u32 %v71, 4294901760
    %1055 = vmatpush2.msra.mxu0 %v1054
    %1056 = vmatprep.subr.mxu0 0.0
    %v1057 = vand.u32 %v70, 4294901760
    %1058 = vmatpush2.msra.mxu0 %v1057
    %1059 = vmatprep.subr.mxu0 0.0
    %v1060 = vand.u32 %v69, 4294901760
    %1061 = vmatpush2.msra.mxu0 %v1060
    %1062 = vmatprep.subr.mxu0 0.0
    %v1063 = vand.u32 %v68, 4294901760
    %1064 = vmatpush2.msra.mxu0 %v1063
    %1065 = vmatprep.subr.mxu0 0.0
    %v1066 = vand.u32 %v67, 4294901760
    %1067 = vmatpush2.msra.mxu0 %v1066
    %1068 = vmatprep.subr.mxu0 0.0
    %v1069 = vand.u32 %v66, 4294901760
    %1070 = vmatpush2.msra.mxu0 %v1069
    %1071 = vmatprep.subr.mxu0 0.0
    %v1072 = vand.u32 %v65, 4294901760
    %1073 = vmatpush2.msra.mxu0 %v1072
    %1074 = vmatprep.subr.mxu0 0.0
    %v1075 = vand.u32 %v64, 4294901760
    %1076 = vmatpush2.msra.mxu0 %v1075
    %1077 = vmatprep.subr.mxu0 0.0
    %v1078 = vand.u32 %v63, 4294901760
    %1079 = vmatpush2.msra.mxu0 %v1078
    %1080 = vmatprep.subr.mxu0 0.0
    %v1081 = vand.u32 %v62, 4294901760
    %1082 = vmatpush2.msra.mxu0 %v1081
    %1083 = vmatprep.subr.mxu0 0.0
    %v1084 = vand.u32 %v61, 4294901760
    %1085 = vmatpush2.msra.mxu0 %v1084
    %1086 = vmatprep.subr.mxu0 0.0
    %v1087 = vand.u32 %v60, 4294901760
    %1088 = vmatpush2.msra.mxu0 %v1087
    %1089 = vmatprep.subr.mxu0 0.0
    %v1090 = vand.u32 %v59, 4294901760
    %1091 = vmatpush2.msra.mxu0 %v1090
    %v1092 = vand.u32 %v191, 4294901760
    %1093 = vmatprep.mubr.f32.mxu0 %v1092
    %v1094 = vand.u32 %v190, 4294901760
    %1095 = vmatmul.mubr.f32.gmra.mxu0 %v1094
    %v1096 = vpop.f32.mrf.mxu0
    %v1097 = vadd.f32 %v993, %v1096
    %v1098 = vpop.f32.mrf.mxu0
    %1099 = vdwg.mxu0
    %1100 = vmatprep.subr.mxu0 0.0
    %v1101 = vand.u32 %v90, 4294901760
    %1102 = vmatpush1.msra.mxu0 %v1101
    %1103 = vmatprep.subr.mxu0 0.0
    %v1104 = vand.u32 %v89, 4294901760
    %1105 = vmatpush1.msra.mxu0 %v1104
    %1106 = vmatprep.subr.mxu0 0.0
    %v1107 = vand.u32 %v88, 4294901760
    %1108 = vmatpush1.msra.mxu0 %v1107
    %1109 = vmatprep.subr.mxu0 0.0
    %v1110 = vand.u32 %v87, 4294901760
    %1111 = vmatpush1.msra.mxu0 %v1110
    %1112 = vmatprep.subr.mxu0 0.0
    %v1113 = vand.u32 %v86, 4294901760
    %1114 = vmatpush1.msra.mxu0 %v1113
    %1115 = vmatprep.subr.mxu0 0.0
    %v1116 = vand.u32 %v85, 4294901760
    %1117 = vmatpush1.msra.mxu0 %v1116
    %1118 = vmatprep.subr.mxu0 0.0
    %v1119 = vand.u32 %v84, 4294901760
    %1120 = vmatpush1.msra.mxu0 %v1119
    %1121 = vmatprep.subr.mxu0 0.0
    %v1122 = vand.u32 %v83, 4294901760
    %1123 = vmatpush1.msra.mxu0 %v1122
    %1124 = vmatprep.subr.mxu0 0.0
    %v1125 = vand.u32 %v82, 4294901760
    %1126 = vmatpush1.msra.mxu0 %v1125
    %1127 = vmatprep.subr.mxu0 0.0
    %v1128 = vand.u32 %v81, 4294901760
    %1129 = vmatpush1.msra.mxu0 %v1128
    %1130 = vmatprep.subr.mxu0 0.0
    %v1131 = vand.u32 %v80, 4294901760
    %1132 = vmatpush1.msra.mxu0 %v1131
    %1133 = vmatprep.subr.mxu0 0.0
    %v1134 = vand.u32 %v79, 4294901760
    %1135 = vmatpush1.msra.mxu0 %v1134
    %1136 = vmatprep.subr.mxu0 0.0
    %v1137 = vand.u32 %v78, 4294901760
    %1138 = vmatpush1.msra.mxu0 %v1137
    %1139 = vmatprep.subr.mxu0 0.0
    %v1140 = vand.u32 %v77, 4294901760
    %1141 = vmatpush1.msra.mxu0 %v1140
    %1142 = vmatprep.subr.mxu0 0.0
    %v1143 = vand.u32 %v76, 4294901760
    %1144 = vmatpush1.msra.mxu0 %v1143
    %1145 = vmatprep.subr.mxu0 0.0
    %v1146 = vand.u32 %v75, 4294901760
    %1147 = vmatpush1.msra.mxu0 %v1146
    %1148 = vmatprep.subr.mxu0 0.0
    %v1149 = vand.u32 %v106, 4294901760
    %1150 = vmatpush2.msra.mxu0 %v1149
    %1151 = vmatprep.subr.mxu0 0.0
    %v1152 = vand.u32 %v105, 4294901760
    %1153 = vmatpush2.msra.mxu0 %v1152
    %1154 = vmatprep.subr.mxu0 0.0
    %v1155 = vand.u32 %v104, 4294901760
    %1156 = vmatpush2.msra.mxu0 %v1155
    %1157 = vmatprep.subr.mxu0 0.0
    %v1158 = vand.u32 %v103, 4294901760
    %1159 = vmatpush2.msra.mxu0 %v1158
    %1160 = vmatprep.subr.mxu0 0.0
    %v1161 = vand.u32 %v102, 4294901760
    %1162 = vmatpush2.msra.mxu0 %v1161
    %1163 = vmatprep.subr.mxu0 0.0
    %v1164 = vand.u32 %v101, 4294901760
    %1165 = vmatpush2.msra.mxu0 %v1164
    %1166 = vmatprep.subr.mxu0 0.0
    %v1167 = vand.u32 %v100, 4294901760
    %1168 = vmatpush2.msra.mxu0 %v1167
    %1169 = vmatprep.subr.mxu0 0.0
    %v1170 = vand.u32 %v99, 4294901760
    %1171 = vmatpush2.msra.mxu0 %v1170
    %1172 = vmatprep.subr.mxu0 0.0
    %v1173 = vand.u32 %v98, 4294901760
    %1174 = vmatpush2.msra.mxu0 %v1173
    %1175 = vmatprep.subr.mxu0 0.0
    %v1176 = vand.u32 %v97, 4294901760
    %1177 = vmatpush2.msra.mxu0 %v1176
    %1178 = vmatprep.subr.mxu0 0.0
    %v1179 = vand.u32 %v96, 4294901760
    %1180 = vmatpush2.msra.mxu0 %v1179
    %1181 = vmatprep.subr.mxu0 0.0
    %v1182 = vand.u32 %v95, 4294901760
    %1183 = vmatpush2.msra.mxu0 %v1182
    %1184 = vmatprep.subr.mxu0 0.0
    %v1185 = vand.u32 %v94, 4294901760
    %1186 = vmatpush2.msra.mxu0 %v1185
    %1187 = vmatprep.subr.mxu0 0.0
    %v1188 = vand.u32 %v93, 4294901760
    %1189 = vmatpush2.msra.mxu0 %v1188
    %1190 = vmatprep.subr.mxu0 0.0
    %v1191 = vand.u32 %v92, 4294901760
    %1192 = vmatpush2.msra.mxu0 %v1191
    %1193 = vmatprep.subr.mxu0 0.0
    %v1194 = vand.u32 %v91, 4294901760
    %1195 = vmatpush2.msra.mxu0 %v1194
    %v1196 = vand.u32 %v193, 4294901760
    %v1197 = vsub.f32 %v193, %v1196
    %v1198 = vand.u32 %v1197, 4294901760
    %v1199 = vsub.f32 %v1197, %v1198
    %v1200 = vand.u32 %v1199, 4294901760
    %1201 = vmatprep.mubr.f32.mxu0 %v1200
    %v1202 = vand.u32 %v192, 4294901760
    %v1203 = vsub.f32 %v192, %v1202
    %v1204 = vand.u32 %v1203, 4294901760
    %v1205 = vsub.f32 %v1203, %v1204
    %v1206 = vand.u32 %v1205, 4294901760
    %1207 = vmatmul.mubr.f32.gmra.mxu0 %v1206
    %v1208 = vpop.f32.mrf.mxu0
    %v1209 = vadd.f32 %v1097, %v1208
    %v1210 = vpop.f32.mrf.mxu0
    %1211 = vdwg.mxu0
    %1212 = vmatprep.subr.mxu0 0.0
    %v1213 = vand.u32 %v90, 4294901760
    %v1214 = vsub.f32 %v90, %v1213
    %v1215 = vand.u32 %v1214, 4294901760
    %v1216 = vsub.f32 %v1214, %v1215
    %v1217 = vand.u32 %v1216, 4294901760
    %1218 = vmatpush1.msra.mxu0 %v1217
    %1219 = vmatprep.subr.mxu0 0.0
    %v1220 = vand.u32 %v89, 4294901760
    %v1221 = vsub.f32 %v89, %v1220
    %v1222 = vand.u32 %v1221, 4294901760
    %v1223 = vsub.f32 %v1221, %v1222
    %v1224 = vand.u32 %v1223, 4294901760
    %1225 = vmatpush1.msra.mxu0 %v1224
    %1226 = vmatprep.subr.mxu0 0.0
    %v1227 = vand.u32 %v88, 4294901760
    %v1228 = vsub.f32 %v88, %v1227
    %v1229 = vand.u32 %v1228, 4294901760
    %v1230 = vsub.f32 %v1228, %v1229
    %v1231 = vand.u32 %v1230, 4294901760
    %1232 = vmatpush1.msra.mxu0 %v1231
    %1233 = vmatprep.subr.mxu0 0.0
    %v1234 = vand.u32 %v87, 4294901760
    %v1235 = vsub.f32 %v87, %v1234
    %v1236 = vand.u32 %v1235, 4294901760
    %v1237 = vsub.f32 %v1235, %v1236
    %v1238 = vand.u32 %v1237, 4294901760
    %1239 = vmatpush1.msra.mxu0 %v1238
    %1240 = vmatprep.subr.mxu0 0.0
    %v1241 = vand.u32 %v86, 4294901760
    %v1242 = vsub.f32 %v86, %v1241
    %v1243 = vand.u32 %v1242, 4294901760
    %v1244 = vsub.f32 %v1242, %v1243
    %v1245 = vand.u32 %v1244, 4294901760
    %1246 = vmatpush1.msra.mxu0 %v1245
    %1247 = vmatprep.subr.mxu0 0.0
    %v1248 = vand.u32 %v85, 4294901760
    %v1249 = vsub.f32 %v85, %v1248
    %v1250 = vand.u32 %v1249, 4294901760
    %v1251 = vsub.f32 %v1249, %v1250
    %v1252 = vand.u32 %v1251, 4294901760
    %1253 = vmatpush1.msra.mxu0 %v1252
    %1254 = vmatprep.subr.mxu0 0.0
    %v1255 = vand.u32 %v84, 4294901760
    %v1256 = vsub.f32 %v84, %v1255
    %v1257 = vand.u32 %v1256, 4294901760
    %v1258 = vsub.f32 %v1256, %v1257
    %v1259 = vand.u32 %v1258, 4294901760
    %1260 = vmatpush1.msra.mxu0 %v1259
    %1261 = vmatprep.subr.mxu0 0.0
    %v1262 = vand.u32 %v83, 4294901760
    %v1263 = vsub.f32 %v83, %v1262
    %v1264 = vand.u32 %v1263, 4294901760
    %v1265 = vsub.f32 %v1263, %v1264
    %v1266 = vand.u32 %v1265, 4294901760
    %1267 = vmatpush1.msra.mxu0 %v1266
    %1268 = vmatprep.subr.mxu0 0.0
    %v1269 = vand.u32 %v82, 4294901760
    %v1270 = vsub.f32 %v82, %v1269
    %v1271 = vand.u32 %v1270, 4294901760
    %v1272 = vsub.f32 %v1270, %v1271
    %v1273 = vand.u32 %v1272, 4294901760
    %1274 = vmatpush1.msra.mxu0 %v1273
    %1275 = vmatprep.subr.mxu0 0.0
    %v1276 = vand.u32 %v81, 4294901760
    %v1277 = vsub.f32 %v81, %v1276
    %v1278 = vand.u32 %v1277, 4294901760
    %v1279 = vsub.f32 %v1277, %v1278
    %v1280 = vand.u32 %v1279, 4294901760
    %1281 = vmatpush1.msra.mxu0 %v1280
    %1282 = vmatprep.subr.mxu0 0.0
    %v1283 = vand.u32 %v80, 4294901760
    %v1284 = vsub.f32 %v80, %v1283
    %v1285 = vand.u32 %v1284, 4294901760
    %v1286 = vsub.f32 %v1284, %v1285
    %v1287 = vand.u32 %v1286, 4294901760
    %1288 = vmatpush1.msra.mxu0 %v1287
    %1289 = vmatprep.subr.mxu0 0.0
    %v1290 = vand.u32 %v79, 4294901760
    %v1291 = vsub.f32 %v79, %v1290
    %v1292 = vand.u32 %v1291, 4294901760
    %v1293 = vsub.f32 %v1291, %v1292
    %v1294 = vand.u32 %v1293, 4294901760
    %1295 = vmatpush1.msra.mxu0 %v1294
    %1296 = vmatprep.subr.mxu0 0.0
    %v1297 = vand.u32 %v78, 4294901760
    %v1298 = vsub.f32 %v78, %v1297
    %v1299 = vand.u32 %v1298, 4294901760
    %v1300 = vsub.f32 %v1298, %v1299
    %v1301 = vand.u32 %v1300, 4294901760
    %1302 = vmatpush1.msra.mxu0 %v1301
    %1303 = vmatprep.subr.mxu0 0.0
    %v1304 = vand.u32 %v77, 4294901760
    %v1305 = vsub.f32 %v77, %v1304
    %v1306 = vand.u32 %v1305, 4294901760
    %v1307 = vsub.f32 %v1305, %v1306
    %v1308 = vand.u32 %v1307, 4294901760
    %1309 = vmatpush1.msra.mxu0 %v1308
    %1310 = vmatprep.subr.mxu0 0.0
    %v1311 = vand.u32 %v76, 4294901760
    %v1312 = vsub.f32 %v76, %v1311
    %v1313 = vand.u32 %v1312, 4294901760
    %v1314 = vsub.f32 %v1312, %v1313
    %v1315 = vand.u32 %v1314, 4294901760
    %1316 = vmatpush1.msra.mxu0 %v1315
    %1317 = vmatprep.subr.mxu0 0.0
    %v1318 = vand.u32 %v75, 4294901760
    %v1319 = vsub.f32 %v75, %v1318
    %v1320 = vand.u32 %v1319, 4294901760
    %v1321 = vsub.f32 %v1319, %v1320
    %v1322 = vand.u32 %v1321, 4294901760
    %1323 = vmatpush1.msra.mxu0 %v1322
    %1324 = vmatprep.subr.mxu0 0.0
    %v1325 = vand.u32 %v106, 4294901760
    %v1326 = vsub.f32 %v106, %v1325
    %v1327 = vand.u32 %v1326, 4294901760
    %v1328 = vsub.f32 %v1326, %v1327
    %v1329 = vand.u32 %v1328, 4294901760
    %1330 = vmatpush2.msra.mxu0 %v1329
    %1331 = vmatprep.subr.mxu0 0.0
    %v1332 = vand.u32 %v105, 4294901760
    %v1333 = vsub.f32 %v105, %v1332
    %v1334 = vand.u32 %v1333, 4294901760
    %v1335 = vsub.f32 %v1333, %v1334
    %v1336 = vand.u32 %v1335, 4294901760
    %1337 = vmatpush2.msra.mxu0 %v1336
    %1338 = vmatprep.subr.mxu0 0.0
    %v1339 = vand.u32 %v104, 4294901760
    %v1340 = vsub.f32 %v104, %v1339
    %v1341 = vand.u32 %v1340, 4294901760
    %v1342 = vsub.f32 %v1340, %v1341
    %v1343 = vand.u32 %v1342, 4294901760
    %1344 = vmatpush2.msra.mxu0 %v1343
    %1345 = vmatprep.subr.mxu0 0.0
    %v1346 = vand.u32 %v103, 4294901760
    %v1347 = vsub.f32 %v103, %v1346
    %v1348 = vand.u32 %v1347, 4294901760
    %v1349 = vsub.f32 %v1347, %v1348
    %v1350 = vand.u32 %v1349, 4294901760
    %1351 = vmatpush2.msra.mxu0 %v1350
    %1352 = vmatprep.subr.mxu0 0.0
    %v1353 = vand.u32 %v102, 4294901760
    %v1354 = vsub.f32 %v102, %v1353
    %v1355 = vand.u32 %v1354, 4294901760
    %v1356 = vsub.f32 %v1354, %v1355
    %v1357 = vand.u32 %v1356, 4294901760
    %1358 = vmatpush2.msra.mxu0 %v1357
    %1359 = vmatprep.subr.mxu0 0.0
    %v1360 = vand.u32 %v101, 4294901760
    %v1361 = vsub.f32 %v101, %v1360
    %v1362 = vand.u32 %v1361, 4294901760
    %v1363 = vsub.f32 %v1361, %v1362
    %v1364 = vand.u32 %v1363, 4294901760
    %1365 = vmatpush2.msra.mxu0 %v1364
    %1366 = vmatprep.subr.mxu0 0.0
    %v1367 = vand.u32 %v100, 4294901760
    %v1368 = vsub.f32 %v100, %v1367
    %v1369 = vand.u32 %v1368, 4294901760
    %v1370 = vsub.f32 %v1368, %v1369
    %v1371 = vand.u32 %v1370, 4294901760
    %1372 = vmatpush2.msra.mxu0 %v1371
    %1373 = vmatprep.subr.mxu0 0.0
    %v1374 = vand.u32 %v99, 4294901760
    %v1375 = vsub.f32 %v99, %v1374
    %v1376 = vand.u32 %v1375, 4294901760
    %v1377 = vsub.f32 %v1375, %v1376
    %v1378 = vand.u32 %v1377, 4294901760
    %1379 = vmatpush2.msra.mxu0 %v1378
    %1380 = vmatprep.subr.mxu0 0.0
    %v1381 = vand.u32 %v98, 4294901760
    %v1382 = vsub.f32 %v98, %v1381
    %v1383 = vand.u32 %v1382, 4294901760
    %v1384 = vsub.f32 %v1382, %v1383
    %v1385 = vand.u32 %v1384, 4294901760
    %1386 = vmatpush2.msra.mxu0 %v1385
    %1387 = vmatprep.subr.mxu0 0.0
    %v1388 = vand.u32 %v97, 4294901760
    %v1389 = vsub.f32 %v97, %v1388
    %v1390 = vand.u32 %v1389, 4294901760
    %v1391 = vsub.f32 %v1389, %v1390
    %v1392 = vand.u32 %v1391, 4294901760
    %1393 = vmatpush2.msra.mxu0 %v1392
    %1394 = vmatprep.subr.mxu0 0.0
    %v1395 = vand.u32 %v96, 4294901760
    %v1396 = vsub.f32 %v96, %v1395
    %v1397 = vand.u32 %v1396, 4294901760
    %v1398 = vsub.f32 %v1396, %v1397
    %v1399 = vand.u32 %v1398, 4294901760
    %1400 = vmatpush2.msra.mxu0 %v1399
    %1401 = vmatprep.subr.mxu0 0.0
    %v1402 = vand.u32 %v95, 4294901760
    %v1403 = vsub.f32 %v95, %v1402
    %v1404 = vand.u32 %v1403, 4294901760
    %v1405 = vsub.f32 %v1403, %v1404
    %v1406 = vand.u32 %v1405, 4294901760
    %1407 = vmatpush2.msra.mxu0 %v1406
    %1408 = vmatprep.subr.mxu0 0.0
    %v1409 = vand.u32 %v94, 4294901760
    %v1410 = vsub.f32 %v94, %v1409
    %v1411 = vand.u32 %v1410, 4294901760
    %v1412 = vsub.f32 %v1410, %v1411
    %v1413 = vand.u32 %v1412, 4294901760
    %1414 = vmatpush2.msra.mxu0 %v1413
    %1415 = vmatprep.subr.mxu0 0.0
    %v1416 = vand.u32 %v93, 4294901760
    %v1417 = vsub.f32 %v93, %v1416
    %v1418 = vand.u32 %v1417, 4294901760
    %v1419 = vsub.f32 %v1417, %v1418
    %v1420 = vand.u32 %v1419, 4294901760
    %1421 = vmatpush2.msra.mxu0 %v1420
    %1422 = vmatprep.subr.mxu0 0.0
    %v1423 = vand.u32 %v92, 4294901760
    %v1424 = vsub.f32 %v92, %v1423
    %v1425 = vand.u32 %v1424, 4294901760
    %v1426 = vsub.f32 %v1424, %v1425
    %v1427 = vand.u32 %v1426, 4294901760
    %1428 = vmatpush2.msra.mxu0 %v1427
    %1429 = vmatprep.subr.mxu0 0.0
    %v1430 = vand.u32 %v91, 4294901760
    %v1431 = vsub.f32 %v91, %v1430
    %v1432 = vand.u32 %v1431, 4294901760
    %v1433 = vsub.f32 %v1431, %v1432
    %v1434 = vand.u32 %v1433, 4294901760
    %1435 = vmatpush2.msra.mxu0 %v1434
    %v1436 = vand.u32 %v193, 4294901760
    %1437 = vmatprep.mubr.f32.mxu0 %v1436
    %v1438 = vand.u32 %v192, 4294901760
    %1439 = vmatmul.mubr.f32.gmra.mxu0 %v1438
    %v1440 = vpop.f32.mrf.mxu0
    %v1441 = vadd.f32 %v1209, %v1440
    %v1442 = vpop.f32.mrf.mxu0
    %1443 = vdwg.mxu0
    %1444 = vmatprep.subr.mxu0 0.0
    %v1445 = vand.u32 %v90, 4294901760
    %v1446 = vsub.f32 %v90, %v1445
    %1447 = vmatpush1.msra.mxu0 %v1446
    %1448 = vmatprep.subr.mxu0 0.0
    %v1449 = vand.u32 %v89, 4294901760
    %v1450 = vsub.f32 %v89, %v1449
    %1451 = vmatpush1.msra.mxu0 %v1450
    %1452 = vmatprep.subr.mxu0 0.0
    %v1453 = vand.u32 %v88, 4294901760
    %v1454 = vsub.f32 %v88, %v1453
    %1455 = vmatpush1.msra.mxu0 %v1454
    %1456 = vmatprep.subr.mxu0 0.0
    %v1457 = vand.u32 %v87, 4294901760
    %v1458 = vsub.f32 %v87, %v1457
    %1459 = vmatpush1.msra.mxu0 %v1458
    %1460 = vmatprep.subr.mxu0 0.0
    %v1461 = vand.u32 %v86, 4294901760
    %v1462 = vsub.f32 %v86, %v1461
    %1463 = vmatpush1.msra.mxu0 %v1462
    %1464 = vmatprep.subr.mxu0 0.0
    %v1465 = vand.u32 %v85, 4294901760
    %v1466 = vsub.f32 %v85, %v1465
    %1467 = vmatpush1.msra.mxu0 %v1466
    %1468 = vmatprep.subr.mxu0 0.0
    %v1469 = vand.u32 %v84, 4294901760
    %v1470 = vsub.f32 %v84, %v1469
    %1471 = vmatpush1.msra.mxu0 %v1470
    %1472 = vmatprep.subr.mxu0 0.0
    %v1473 = vand.u32 %v83, 4294901760
    %v1474 = vsub.f32 %v83, %v1473
    %1475 = vmatpush1.msra.mxu0 %v1474
    %1476 = vmatprep.subr.mxu0 0.0
    %v1477 = vand.u32 %v82, 4294901760
    %v1478 = vsub.f32 %v82, %v1477
    %1479 = vmatpush1.msra.mxu0 %v1478
    %1480 = vmatprep.subr.mxu0 0.0
    %v1481 = vand.u32 %v81, 4294901760
    %v1482 = vsub.f32 %v81, %v1481
    %1483 = vmatpush1.msra.mxu0 %v1482
    %1484 = vmatprep.subr.mxu0 0.0
    %v1485 = vand.u32 %v80, 4294901760
    %v1486 = vsub.f32 %v80, %v1485
    %1487 = vmatpush1.msra.mxu0 %v1486
    %1488 = vmatprep.subr.mxu0 0.0
    %v1489 = vand.u32 %v79, 4294901760
    %v1490 = vsub.f32 %v79, %v1489
    %1491 = vmatpush1.msra.mxu0 %v1490
    %1492 = vmatprep.subr.mxu0 0.0
    %v1493 = vand.u32 %v78, 4294901760
    %v1494 = vsub.f32 %v78, %v1493
    %1495 = vmatpush1.msra.mxu0 %v1494
    %1496 = vmatprep.subr.mxu0 0.0
    %v1497 = vand.u32 %v77, 4294901760
    %v1498 = vsub.f32 %v77, %v1497
    %1499 = vmatpush1.msra.mxu0 %v1498
    %1500 = vmatprep.subr.mxu0 0.0
    %v1501 = vand.u32 %v76, 4294901760
    %v1502 = vsub.f32 %v76, %v1501
    %1503 = vmatpush1.msra.mxu0 %v1502
    %1504 = vmatprep.subr.mxu0 0.0
    %v1505 = vand.u32 %v75, 4294901760
    %v1506 = vsub.f32 %v75, %v1505
    %1507 = vmatpush1.msra.mxu0 %v1506
    %1508 = vmatprep.subr.mxu0 0.0
    %v1509 = vand.u32 %v106, 4294901760
    %v1510 = vsub.f32 %v106, %v1509
    %1511 = vmatpush2.msra.mxu0 %v1510
    %1512 = vmatprep.subr.mxu0 0.0
    %v1513 = vand.u32 %v105, 4294901760
    %v1514 = vsub.f32 %v105, %v1513
    %1515 = vmatpush2.msra.mxu0 %v1514
    %1516 = vmatprep.subr.mxu0 0.0
    %v1517 = vand.u32 %v104, 4294901760
    %v1518 = vsub.f32 %v104, %v1517
    %1519 = vmatpush2.msra.mxu0 %v1518
    %1520 = vmatprep.subr.mxu0 0.0
    %v1521 = vand.u32 %v103, 4294901760
    %v1522 = vsub.f32 %v103, %v1521
    %1523 = vmatpush2.msra.mxu0 %v1522
    %1524 = vmatprep.subr.mxu0 0.0
    %v1525 = vand.u32 %v102, 4294901760
    %v1526 = vsub.f32 %v102, %v1525
    %1527 = vmatpush2.msra.mxu0 %v1526
    %1528 = vmatprep.subr.mxu0 0.0
    %v1529 = vand.u32 %v101, 4294901760
    %v1530 = vsub.f32 %v101, %v1529
    %1531 = vmatpush2.msra.mxu0 %v1530
    %1532 = vmatprep.subr.mxu0 0.0
    %v1533 = vand.u32 %v100, 4294901760
    %v1534 = vsub.f32 %v100, %v1533
    %1535 = vmatpush2.msra.mxu0 %v1534
    %1536 = vmatprep.subr.mxu0 0.0
    %v1537 = vand.u32 %v99, 4294901760
    %v1538 = vsub.f32 %v99, %v1537
    %1539 = vmatpush2.msra.mxu0 %v1538
    %1540 = vmatprep.subr.mxu0 0.0
    %v1541 = vand.u32 %v98, 4294901760
    %v1542 = vsub.f32 %v98, %v1541
    %1543 = vmatpush2.msra.mxu0 %v1542
    %1544 = vmatprep.subr.mxu0 0.0
    %v1545 = vand.u32 %v97, 4294901760
    %v1546 = vsub.f32 %v97, %v1545
    %1547 = vmatpush2.msra.mxu0 %v1546
    %1548 = vmatprep.subr.mxu0 0.0
    %v1549 = vand.u32 %v96, 4294901760
    %v1550 = vsub.f32 %v96, %v1549
    %1551 = vmatpush2.msra.mxu0 %v1550
    %1552 = vmatprep.subr.mxu0 0.0
    %v1553 = vand.u32 %v95, 4294901760
    %v1554 = vsub.f32 %v95, %v1553
    %1555 = vmatpush2.msra.mxu0 %v1554
    %1556 = vmatprep.subr.mxu0 0.0
    %v1557 = vand.u32 %v94, 4294901760
    %v1558 = vsub.f32 %v94, %v1557
    %1559 = vmatpush2.msra.mxu0 %v1558
    %1560 = vmatprep.subr.mxu0 0.0
    %v1561 = vand.u32 %v93, 4294901760
    %v1562 = vsub.f32 %v93, %v1561
    %1563 = vmatpush2.msra.mxu0 %v1562
    %1564 = vmatprep.subr.mxu0 0.0
    %v1565 = vand.u32 %v92, 4294901760
    %v1566 = vsub.f32 %v92, %v1565
    %1567 = vmatpush2.msra.mxu0 %v1566
    %1568 = vmatprep.subr.mxu0 0.0
    %v1569 = vand.u32 %v91, 4294901760
    %v1570 = vsub.f32 %v91, %v1569
    %1571 = vmatpush2.msra.mxu0 %v1570
    %v1572 = vand.u32 %v193, 4294901760
    %v1573 = vsub.f32 %v193, %v1572
    %1574 = vmatprep.mubr.f32.mxu0 %v1573
    %v1575 = vand.u32 %v192, 4294901760
    %v1576 = vsub.f32 %v192, %v1575
    %1577 = vmatmul.mubr.f32.gmra.mxu0 %v1576
    %v1578 = vpop.f32.mrf.mxu0
    %v1579 = vadd.f32 %v1441, %v1578
    %v1580 = vpop.f32.mrf.mxu0
    %1581 = vdwg.mxu0
    %1582 = vmatprep.subr.mxu0 0.0
    %v1583 = vand.u32 %v90, 4294901760
    %1584 = vmatpush1.msra.mxu0 %v1583
    %1585 = vmatprep.subr.mxu0 0.0
    %v1586 = vand.u32 %v89, 4294901760
    %1587 = vmatpush1.msra.mxu0 %v1586
    %1588 = vmatprep.subr.mxu0 0.0
    %v1589 = vand.u32 %v88, 4294901760
    %1590 = vmatpush1.msra.mxu0 %v1589
    %1591 = vmatprep.subr.mxu0 0.0
    %v1592 = vand.u32 %v87, 4294901760
    %1593 = vmatpush1.msra.mxu0 %v1592
    %1594 = vmatprep.subr.mxu0 0.0
    %v1595 = vand.u32 %v86, 4294901760
    %1596 = vmatpush1.msra.mxu0 %v1595
    %1597 = vmatprep.subr.mxu0 0.0
    %v1598 = vand.u32 %v85, 4294901760
    %1599 = vmatpush1.msra.mxu0 %v1598
    %1600 = vmatprep.subr.mxu0 0.0
    %v1601 = vand.u32 %v84, 4294901760
    %1602 = vmatpush1.msra.mxu0 %v1601
    %1603 = vmatprep.subr.mxu0 0.0
    %v1604 = vand.u32 %v83, 4294901760
    %1605 = vmatpush1.msra.mxu0 %v1604
    %1606 = vmatprep.subr.mxu0 0.0
    %v1607 = vand.u32 %v82, 4294901760
    %1608 = vmatpush1.msra.mxu0 %v1607
    %1609 = vmatprep.subr.mxu0 0.0
    %v1610 = vand.u32 %v81, 4294901760
    %1611 = vmatpush1.msra.mxu0 %v1610
    %1612 = vmatprep.subr.mxu0 0.0
    %v1613 = vand.u32 %v80, 4294901760
    %1614 = vmatpush1.msra.mxu0 %v1613
    %1615 = vmatprep.subr.mxu0 0.0
    %v1616 = vand.u32 %v79, 4294901760
    %1617 = vmatpush1.msra.mxu0 %v1616
    %1618 = vmatprep.subr.mxu0 0.0
    %v1619 = vand.u32 %v78, 4294901760
    %1620 = vmatpush1.msra.mxu0 %v1619
    %1621 = vmatprep.subr.mxu0 0.0
    %v1622 = vand.u32 %v77, 4294901760
    %1623 = vmatpush1.msra.mxu0 %v1622
    %1624 = vmatprep.subr.mxu0 0.0
    %v1625 = vand.u32 %v76, 4294901760
    %1626 = vmatpush1.msra.mxu0 %v1625
    %1627 = vmatprep.subr.mxu0 0.0
    %v1628 = vand.u32 %v75, 4294901760
    %1629 = vmatpush1.msra.mxu0 %v1628
    %1630 = vmatprep.subr.mxu0 0.0
    %v1631 = vand.u32 %v106, 4294901760
    %1632 = vmatpush2.msra.mxu0 %v1631
    %1633 = vmatprep.subr.mxu0 0.0
    %v1634 = vand.u32 %v105, 4294901760
    %1635 = vmatpush2.msra.mxu0 %v1634
    %1636 = vmatprep.subr.mxu0 0.0
    %v1637 = vand.u32 %v104, 4294901760
    %1638 = vmatpush2.msra.mxu0 %v1637
    %1639 = vmatprep.subr.mxu0 0.0
    %v1640 = vand.u32 %v103, 4294901760
    %1641 = vmatpush2.msra.mxu0 %v1640
    %1642 = vmatprep.subr.mxu0 0.0
    %v1643 = vand.u32 %v102, 4294901760
    %1644 = vmatpush2.msra.mxu0 %v1643
    %1645 = vmatprep.subr.mxu0 0.0
    %v1646 = vand.u32 %v101, 4294901760
    %1647 = vmatpush2.msra.mxu0 %v1646
    %1648 = vmatprep.subr.mxu0 0.0
    %v1649 = vand.u32 %v100, 4294901760
    %1650 = vmatpush2.msra.mxu0 %v1649
    %1651 = vmatprep.subr.mxu0 0.0
    %v1652 = vand.u32 %v99, 4294901760
    %1653 = vmatpush2.msra.mxu0 %v1652
    %1654 = vmatprep.subr.mxu0 0.0
    %v1655 = vand.u32 %v98, 4294901760
    %1656 = vmatpush2.msra.mxu0 %v1655
    %1657 = vmatprep.subr.mxu0 0.0
    %v1658 = vand.u32 %v97, 4294901760
    %1659 = vmatpush2.msra.mxu0 %v1658
    %1660 = vmatprep.subr.mxu0 0.0
    %v1661 = vand.u32 %v96, 4294901760
    %1662 = vmatpush2.msra.mxu0 %v1661
    %1663 = vmatprep.subr.mxu0 0.0
    %v1664 = vand.u32 %v95, 4294901760
    %1665 = vmatpush2.msra.mxu0 %v1664
    %1666 = vmatprep.subr.mxu0 0.0
    %v1667 = vand.u32 %v94, 4294901760
    %1668 = vmatpush2.msra.mxu0 %v1667
    %1669 = vmatprep.subr.mxu0 0.0
    %v1670 = vand.u32 %v93, 4294901760
    %1671 = vmatpush2.msra.mxu0 %v1670
    %1672 = vmatprep.subr.mxu0 0.0
    %v1673 = vand.u32 %v92, 4294901760
    %1674 = vmatpush2.msra.mxu0 %v1673
    %1675 = vmatprep.subr.mxu0 0.0
    %v1676 = vand.u32 %v91, 4294901760
    %1677 = vmatpush2.msra.mxu0 %v1676
    %v1678 = vand.u32 %v193, 4294901760
    %v1679 = vsub.f32 %v193, %v1678
    %v1680 = vand.u32 %v1679, 4294901760
    %1681 = vmatprep.mubr.f32.mxu0 %v1680
    %v1682 = vand.u32 %v192, 4294901760
    %v1683 = vsub.f32 %v192, %v1682
    %v1684 = vand.u32 %v1683, 4294901760
    %1685 = vmatmul.mubr.f32.gmra.mxu0 %v1684
    %v1686 = vpop.f32.mrf.mxu0
    %v1687 = vadd.f32 %v1579, %v1686
    %v1688 = vpop.f32.mrf.mxu0
    %1689 = vdwg.mxu0
    %1690 = vmatprep.subr.mxu0 0.0
    %v1691 = vand.u32 %v90, 4294901760
    %v1692 = vsub.f32 %v90, %v1691
    %v1693 = vand.u32 %v1692, 4294901760
    %1694 = vmatpush1.msra.mxu0 %v1693
    %1695 = vmatprep.subr.mxu0 0.0
    %v1696 = vand.u32 %v89, 4294901760
    %v1697 = vsub.f32 %v89, %v1696
    %v1698 = vand.u32 %v1697, 4294901760
    %1699 = vmatpush1.msra.mxu0 %v1698
    %1700 = vmatprep.subr.mxu0 0.0
    %v1701 = vand.u32 %v88, 4294901760
    %v1702 = vsub.f32 %v88, %v1701
    %v1703 = vand.u32 %v1702, 4294901760
    %1704 = vmatpush1.msra.mxu0 %v1703
    %1705 = vmatprep.subr.mxu0 0.0
    %v1706 = vand.u32 %v87, 4294901760
    %v1707 = vsub.f32 %v87, %v1706
    %v1708 = vand.u32 %v1707, 4294901760
    %1709 = vmatpush1.msra.mxu0 %v1708
    %1710 = vmatprep.subr.mxu0 0.0
    %v1711 = vand.u32 %v86, 4294901760
    %v1712 = vsub.f32 %v86, %v1711
    %v1713 = vand.u32 %v1712, 4294901760
    %1714 = vmatpush1.msra.mxu0 %v1713
    %1715 = vmatprep.subr.mxu0 0.0
    %v1716 = vand.u32 %v85, 4294901760
    %v1717 = vsub.f32 %v85, %v1716
    %v1718 = vand.u32 %v1717, 4294901760
    %1719 = vmatpush1.msra.mxu0 %v1718
    %1720 = vmatprep.subr.mxu0 0.0
    %v1721 = vand.u32 %v84, 4294901760
    %v1722 = vsub.f32 %v84, %v1721
    %v1723 = vand.u32 %v1722, 4294901760
    %1724 = vmatpush1.msra.mxu0 %v1723
    %1725 = vmatprep.subr.mxu0 0.0
    %v1726 = vand.u32 %v83, 4294901760
    %v1727 = vsub.f32 %v83, %v1726
    %v1728 = vand.u32 %v1727, 4294901760
    %1729 = vmatpush1.msra.mxu0 %v1728
    %1730 = vmatprep.subr.mxu0 0.0
    %v1731 = vand.u32 %v82, 4294901760
    %v1732 = vsub.f32 %v82, %v1731
    %v1733 = vand.u32 %v1732, 4294901760
    %1734 = vmatpush1.msra.mxu0 %v1733
    %1735 = vmatprep.subr.mxu0 0.0
    %v1736 = vand.u32 %v81, 4294901760
    %v1737 = vsub.f32 %v81, %v1736
    %v1738 = vand.u32 %v1737, 4294901760
    %1739 = vmatpush1.msra.mxu0 %v1738
    %1740 = vmatprep.subr.mxu0 0.0
    %v1741 = vand.u32 %v80, 4294901760
    %v1742 = vsub.f32 %v80, %v1741
    %v1743 = vand.u32 %v1742, 4294901760
    %1744 = vmatpush1.msra.mxu0 %v1743
    %1745 = vmatprep.subr.mxu0 0.0
    %v1746 = vand.u32 %v79, 4294901760
    %v1747 = vsub.f32 %v79, %v1746
    %v1748 = vand.u32 %v1747, 4294901760
    %1749 = vmatpush1.msra.mxu0 %v1748
    %1750 = vmatprep.subr.mxu0 0.0
    %v1751 = vand.u32 %v78, 4294901760
    %v1752 = vsub.f32 %v78, %v1751
    %v1753 = vand.u32 %v1752, 4294901760
    %1754 = vmatpush1.msra.mxu0 %v1753
    %1755 = vmatprep.subr.mxu0 0.0
    %v1756 = vand.u32 %v77, 4294901760
    %v1757 = vsub.f32 %v77, %v1756
    %v1758 = vand.u32 %v1757, 4294901760
    %1759 = vmatpush1.msra.mxu0 %v1758
    %1760 = vmatprep.subr.mxu0 0.0
    %v1761 = vand.u32 %v76, 4294901760
    %v1762 = vsub.f32 %v76, %v1761
    %v1763 = vand.u32 %v1762, 4294901760
    %1764 = vmatpush1.msra.mxu0 %v1763
    %1765 = vmatprep.subr.mxu0 0.0
    %v1766 = vand.u32 %v75, 4294901760
    %v1767 = vsub.f32 %v75, %v1766
    %v1768 = vand.u32 %v1767, 4294901760
    %1769 = vmatpush1.msra.mxu0 %v1768
    %1770 = vmatprep.subr.mxu0 0.0
    %v1771 = vand.u32 %v106, 4294901760
    %v1772 = vsub.f32 %v106, %v1771
    %v1773 = vand.u32 %v1772, 4294901760
    %1774 = vmatpush2.msra.mxu0 %v1773
    %1775 = vmatprep.subr.mxu0 0.0
    %v1776 = vand.u32 %v105, 4294901760
    %v1777 = vsub.f32 %v105, %v1776
    %v1778 = vand.u32 %v1777, 4294901760
    %1779 = vmatpush2.msra.mxu0 %v1778
    %1780 = vmatprep.subr.mxu0 0.0
    %v1781 = vand.u32 %v104, 4294901760
    %v1782 = vsub.f32 %v104, %v1781
    %v1783 = vand.u32 %v1782, 4294901760
    %1784 = vmatpush2.msra.mxu0 %v1783
    %1785 = vmatprep.subr.mxu0 0.0
    %v1786 = vand.u32 %v103, 4294901760
    %v1787 = vsub.f32 %v103, %v1786
    %v1788 = vand.u32 %v1787, 4294901760
    %1789 = vmatpush2.msra.mxu0 %v1788
    %1790 = vmatprep.subr.mxu0 0.0
    %v1791 = vand.u32 %v102, 4294901760
    %v1792 = vsub.f32 %v102, %v1791
    %v1793 = vand.u32 %v1792, 4294901760
    %1794 = vmatpush2.msra.mxu0 %v1793
    %1795 = vmatprep.subr.mxu0 0.0
    %v1796 = vand.u32 %v101, 4294901760
    %v1797 = vsub.f32 %v101, %v1796
    %v1798 = vand.u32 %v1797, 4294901760
    %1799 = vmatpush2.msra.mxu0 %v1798
    %1800 = vmatprep.subr.mxu0 0.0
    %v1801 = vand.u32 %v100, 4294901760
    %v1802 = vsub.f32 %v100, %v1801
    %v1803 = vand.u32 %v1802, 4294901760
    %1804 = vmatpush2.msra.mxu0 %v1803
    %1805 = vmatprep.subr.mxu0 0.0
    %v1806 = vand.u32 %v99, 4294901760
    %v1807 = vsub.f32 %v99, %v1806
    %v1808 = vand.u32 %v1807, 4294901760
    %1809 = vmatpush2.msra.mxu0 %v1808
    %1810 = vmatprep.subr.mxu0 0.0
    %v1811 = vand.u32 %v98, 4294901760
    %v1812 = vsub.f32 %v98, %v1811
    %v1813 = vand.u32 %v1812, 4294901760
    %1814 = vmatpush2.msra.mxu0 %v1813
    %1815 = vmatprep.subr.mxu0 0.0
    %v1816 = vand.u32 %v97, 4294901760
    %v1817 = vsub.f32 %v97, %v1816
    %v1818 = vand.u32 %v1817, 4294901760
    %1819 = vmatpush2.msra.mxu0 %v1818
    %1820 = vmatprep.subr.mxu0 0.0
    %v1821 = vand.u32 %v96, 4294901760
    %v1822 = vsub.f32 %v96, %v1821
    %v1823 = vand.u32 %v1822, 4294901760
    %1824 = vmatpush2.msra.mxu0 %v1823
    %1825 = vmatprep.subr.mxu0 0.0
    %v1826 = vand.u32 %v95, 4294901760
    %v1827 = vsub.f32 %v95, %v1826
    %v1828 = vand.u32 %v1827, 4294901760
    %1829 = vmatpush2.msra.mxu0 %v1828
    %1830 = vmatprep.subr.mxu0 0.0
    %v1831 = vand.u32 %v94, 4294901760
    %v1832 = vsub.f32 %v94, %v1831
    %v1833 = vand.u32 %v1832, 4294901760
    %1834 = vmatpush2.msra.mxu0 %v1833
    %1835 = vmatprep.subr.mxu0 0.0
    %v1836 = vand.u32 %v93, 4294901760
    %v1837 = vsub.f32 %v93, %v1836
    %v1838 = vand.u32 %v1837, 4294901760
    %1839 = vmatpush2.msra.mxu0 %v1838
    %1840 = vmatprep.subr.mxu0 0.0
    %v1841 = vand.u32 %v92, 4294901760
    %v1842 = vsub.f32 %v92, %v1841
    %v1843 = vand.u32 %v1842, 4294901760
    %1844 = vmatpush2.msra.mxu0 %v1843
    %1845 = vmatprep.subr.mxu0 0.0
    %v1846 = vand.u32 %v91, 4294901760
    %v1847 = vsub.f32 %v91, %v1846
    %v1848 = vand.u32 %v1847, 4294901760
    %1849 = vmatpush2.msra.mxu0 %v1848
    %v1850 = vand.u32 %v193, 4294901760
    %1851 = vmatprep.mubr.f32.mxu0 %v1850
    %v1852 = vand.u32 %v192, 4294901760
    %1853 = vmatmul.mubr.f32.gmra.mxu0 %v1852
    %v1854 = vpop.f32.mrf.mxu0
    %v1855 = vadd.f32 %v1687, %v1854
    %v1856 = vpop.f32.mrf.mxu0
    %1857 = vdwg.mxu0
    %1858 = vmatprep.subr.mxu0 0.0
    %v1859 = vand.u32 %v90, 4294901760
    %1860 = vmatpush1.msra.mxu0 %v1859
    %1861 = vmatprep.subr.mxu0 0.0
    %v1862 = vand.u32 %v89, 4294901760
    %1863 = vmatpush1.msra.mxu0 %v1862
    %1864 = vmatprep.subr.mxu0 0.0
    %v1865 = vand.u32 %v88, 4294901760
    %1866 = vmatpush1.msra.mxu0 %v1865
    %1867 = vmatprep.subr.mxu0 0.0
    %v1868 = vand.u32 %v87, 4294901760
    %1869 = vmatpush1.msra.mxu0 %v1868
    %1870 = vmatprep.subr.mxu0 0.0
    %v1871 = vand.u32 %v86, 4294901760
    %1872 = vmatpush1.msra.mxu0 %v1871
    %1873 = vmatprep.subr.mxu0 0.0
    %v1874 = vand.u32 %v85, 4294901760
    %1875 = vmatpush1.msra.mxu0 %v1874
    %1876 = vmatprep.subr.mxu0 0.0
    %v1877 = vand.u32 %v84, 4294901760
    %1878 = vmatpush1.msra.mxu0 %v1877
    %1879 = vmatprep.subr.mxu0 0.0
    %v1880 = vand.u32 %v83, 4294901760
    %1881 = vmatpush1.msra.mxu0 %v1880
    %1882 = vmatprep.subr.mxu0 0.0
    %v1883 = vand.u32 %v82, 4294901760
    %1884 = vmatpush1.msra.mxu0 %v1883
    %1885 = vmatprep.subr.mxu0 0.0
    %v1886 = vand.u32 %v81, 4294901760
    %1887 = vmatpush1.msra.mxu0 %v1886
    %1888 = vmatprep.subr.mxu0 0.0
    %v1889 = vand.u32 %v80, 4294901760
    %1890 = vmatpush1.msra.mxu0 %v1889
    %1891 = vmatprep.subr.mxu0 0.0
    %v1892 = vand.u32 %v79, 4294901760
    %1893 = vmatpush1.msra.mxu0 %v1892
    %1894 = vmatprep.subr.mxu0 0.0
    %v1895 = vand.u32 %v78, 4294901760
    %1896 = vmatpush1.msra.mxu0 %v1895
    %1897 = vmatprep.subr.mxu0 0.0
    %v1898 = vand.u32 %v77, 4294901760
    %1899 = vmatpush1.msra.mxu0 %v1898
    %1900 = vmatprep.subr.mxu0 0.0
    %v1901 = vand.u32 %v76, 4294901760
    %1902 = vmatpush1.msra.mxu0 %v1901
    %1903 = vmatprep.subr.mxu0 0.0
    %v1904 = vand.u32 %v75, 4294901760
    %1905 = vmatpush1.msra.mxu0 %v1904
    %1906 = vmatprep.subr.mxu0 0.0
    %v1907 = vand.u32 %v106, 4294901760
    %1908 = vmatpush2.msra.mxu0 %v1907
    %1909 = vmatprep.subr.mxu0 0.0
    %v1910 = vand.u32 %v105, 4294901760
    %1911 = vmatpush2.msra.mxu0 %v1910
    %1912 = vmatprep.subr.mxu0 0.0
    %v1913 = vand.u32 %v104, 4294901760
    %1914 = vmatpush2.msra.mxu0 %v1913
    %1915 = vmatprep.subr.mxu0 0.0
    %v1916 = vand.u32 %v103, 4294901760
    %1917 = vmatpush2.msra.mxu0 %v1916
    %1918 = vmatprep.subr.mxu0 0.0
    %v1919 = vand.u32 %v102, 4294901760
    %1920 = vmatpush2.msra.mxu0 %v1919
    %1921 = vmatprep.subr.mxu0 0.0
    %v1922 = vand.u32 %v101, 4294901760
    %1923 = vmatpush2.msra.mxu0 %v1922
    %1924 = vmatprep.subr.mxu0 0.0
    %v1925 = vand.u32 %v100, 4294901760
    %1926 = vmatpush2.msra.mxu0 %v1925
    %1927 = vmatprep.subr.mxu0 0.0
    %v1928 = vand.u32 %v99, 4294901760
    %1929 = vmatpush2.msra.mxu0 %v1928
    %1930 = vmatprep.subr.mxu0 0.0
    %v1931 = vand.u32 %v98, 4294901760
    %1932 = vmatpush2.msra.mxu0 %v1931
    %1933 = vmatprep.subr.mxu0 0.0
    %v1934 = vand.u32 %v97, 4294901760
    %1935 = vmatpush2.msra.mxu0 %v1934
    %1936 = vmatprep.subr.mxu0 0.0
    %v1937 = vand.u32 %v96, 4294901760
    %1938 = vmatpush2.msra.mxu0 %v1937
    %1939 = vmatprep.subr.mxu0 0.0
    %v1940 = vand.u32 %v95, 4294901760
    %1941 = vmatpush2.msra.mxu0 %v1940
    %1942 = vmatprep.subr.mxu0 0.0
    %v1943 = vand.u32 %v94, 4294901760
    %1944 = vmatpush2.msra.mxu0 %v1943
    %1945 = vmatprep.subr.mxu0 0.0
    %v1946 = vand.u32 %v93, 4294901760
    %1947 = vmatpush2.msra.mxu0 %v1946
    %1948 = vmatprep.subr.mxu0 0.0
    %v1949 = vand.u32 %v92, 4294901760
    %1950 = vmatpush2.msra.mxu0 %v1949
    %1951 = vmatprep.subr.mxu0 0.0
    %v1952 = vand.u32 %v91, 4294901760
    %1953 = vmatpush2.msra.mxu0 %v1952
    %v1954 = vand.u32 %v193, 4294901760
    %1955 = vmatprep.mubr.f32.mxu0 %v1954
    %v1956 = vand.u32 %v192, 4294901760
    %1957 = vmatmul.mubr.f32.gmra.mxu0 %v1956
    %v1958 = vpop.f32.mrf.mxu0
    %v1959 = vadd.f32 %v1855, %v1958
    %v1960 = vpop.f32.mrf.mxu0
    %1961 = vdwg.mxu0
    %1962 = vmatprep.subr.mxu0 0.0
    %v1963 = vand.u32 %v122, 4294901760
    %1964 = vmatpush1.msra.mxu0 %v1963
    %1965 = vmatprep.subr.mxu0 0.0
    %v1966 = vand.u32 %v121, 4294901760
    %1967 = vmatpush1.msra.mxu0 %v1966
    %1968 = vmatprep.subr.mxu0 0.0
    %v1969 = vand.u32 %v120, 4294901760
    %1970 = vmatpush1.msra.mxu0 %v1969
    %1971 = vmatprep.subr.mxu0 0.0
    %v1972 = vand.u32 %v119, 4294901760
    %1973 = vmatpush1.msra.mxu0 %v1972
    %1974 = vmatprep.subr.mxu0 0.0
    %v1975 = vand.u32 %v118, 4294901760
    %1976 = vmatpush1.msra.mxu0 %v1975
    %1977 = vmatprep.subr.mxu0 0.0
    %v1978 = vand.u32 %v117, 4294901760
    %1979 = vmatpush1.msra.mxu0 %v1978
    %1980 = vmatprep.subr.mxu0 0.0
    %v1981 = vand.u32 %v116, 4294901760
    %1982 = vmatpush1.msra.mxu0 %v1981
    %1983 = vmatprep.subr.mxu0 0.0
    %v1984 = vand.u32 %v115, 4294901760
    %1985 = vmatpush1.msra.mxu0 %v1984
    %1986 = vmatprep.subr.mxu0 0.0
    %v1987 = vand.u32 %v114, 4294901760
    %1988 = vmatpush1.msra.mxu0 %v1987
    %1989 = vmatprep.subr.mxu0 0.0
    %v1990 = vand.u32 %v113, 4294901760
    %1991 = vmatpush1.msra.mxu0 %v1990
    %1992 = vmatprep.subr.mxu0 0.0
    %v1993 = vand.u32 %v112, 4294901760
    %1994 = vmatpush1.msra.mxu0 %v1993
    %1995 = vmatprep.subr.mxu0 0.0
    %v1996 = vand.u32 %v111, 4294901760
    %1997 = vmatpush1.msra.mxu0 %v1996
    %1998 = vmatprep.subr.mxu0 0.0
    %v1999 = vand.u32 %v110, 4294901760
    %2000 = vmatpush1.msra.mxu0 %v1999
    %2001 = vmatprep.subr.mxu0 0.0
    %v2002 = vand.u32 %v109, 4294901760
    %2003 = vmatpush1.msra.mxu0 %v2002
    %2004 = vmatprep.subr.mxu0 0.0
    %v2005 = vand.u32 %v108, 4294901760
    %2006 = vmatpush1.msra.mxu0 %v2005
    %2007 = vmatprep.subr.mxu0 0.0
    %v2008 = vand.u32 %v107, 4294901760
    %2009 = vmatpush1.msra.mxu0 %v2008
    %2010 = vmatprep.subr.mxu0 0.0
    %v2011 = vand.u32 %v138, 4294901760
    %2012 = vmatpush2.msra.mxu0 %v2011
    %2013 = vmatprep.subr.mxu0 0.0
    %v2014 = vand.u32 %v137, 4294901760
    %2015 = vmatpush2.msra.mxu0 %v2014
    %2016 = vmatprep.subr.mxu0 0.0
    %v2017 = vand.u32 %v136, 4294901760
    %2018 = vmatpush2.msra.mxu0 %v2017
    %2019 = vmatprep.subr.mxu0 0.0
    %v2020 = vand.u32 %v135, 4294901760
    %2021 = vmatpush2.msra.mxu0 %v2020
    %2022 = vmatprep.subr.mxu0 0.0
    %v2023 = vand.u32 %v134, 4294901760
    %2024 = vmatpush2.msra.mxu0 %v2023
    %2025 = vmatprep.subr.mxu0 0.0
    %v2026 = vand.u32 %v133, 4294901760
    %2027 = vmatpush2.msra.mxu0 %v2026
    %2028 = vmatprep.subr.mxu0 0.0
    %v2029 = vand.u32 %v132, 4294901760
    %2030 = vmatpush2.msra.mxu0 %v2029
    %2031 = vmatprep.subr.mxu0 0.0
    %v2032 = vand.u32 %v131, 4294901760
    %2033 = vmatpush2.msra.mxu0 %v2032
    %2034 = vmatprep.subr.mxu0 0.0
    %v2035 = vand.u32 %v130, 4294901760
    %2036 = vmatpush2.msra.mxu0 %v2035
    %2037 = vmatprep.subr.mxu0 0.0
    %v2038 = vand.u32 %v129, 4294901760
    %2039 = vmatpush2.msra.mxu0 %v2038
    %2040 = vmatprep.subr.mxu0 0.0
    %v2041 = vand.u32 %v128, 4294901760
    %2042 = vmatpush2.msra.mxu0 %v2041
    %2043 = vmatprep.subr.mxu0 0.0
    %v2044 = vand.u32 %v127, 4294901760
    %2045 = vmatpush2.msra.mxu0 %v2044
    %2046 = vmatprep.subr.mxu0 0.0
    %v2047 = vand.u32 %v126, 4294901760
    %2048 = vmatpush2.msra.mxu0 %v2047
    %2049 = vmatprep.subr.mxu0 0.0
    %v2050 = vand.u32 %v125, 4294901760
    %2051 = vmatpush2.msra.mxu0 %v2050
    %2052 = vmatprep.subr.mxu0 0.0
    %v2053 = vand.u32 %v124, 4294901760
    %2054 = vmatpush2.msra.mxu0 %v2053
    %2055 = vmatprep.subr.mxu0 0.0
    %v2056 = vand.u32 %v123, 4294901760
    %2057 = vmatpush2.msra.mxu0 %v2056
    %v2058 = vand.u32 %v227, 4294901760
    %v2059 = vsub.f32 %v227, %v2058
    %v2060 = vand.u32 %v2059, 4294901760
    %v2061 = vsub.f32 %v2059, %v2060
    %v2062 = vand.u32 %v2061, 4294901760
    %2063 = vmatprep.mubr.f32.mxu0 %v2062
    %v2064 = vand.u32 %v226, 4294901760
    %v2065 = vsub.f32 %v226, %v2064
    %v2066 = vand.u32 %v2065, 4294901760
    %v2067 = vsub.f32 %v2065, %v2066
    %v2068 = vand.u32 %v2067, 4294901760
    %2069 = vmatmul.mubr.f32.gmra.mxu0 %v2068
    %v2070 = vpop.f32.mrf.mxu0
    %v2071 = vadd.f32 %v1959, %v2070
    %v2072 = vpop.f32.mrf.mxu0
    %2073 = vdwg.mxu0
    %2074 = vmatprep.subr.mxu0 0.0
    %v2075 = vand.u32 %v122, 4294901760
    %v2076 = vsub.f32 %v122, %v2075
    %v2077 = vand.u32 %v2076, 4294901760
    %v2078 = vsub.f32 %v2076, %v2077
    %v2079 = vand.u32 %v2078, 4294901760
    %2080 = vmatpush1.msra.mxu0 %v2079
    %2081 = vmatprep.subr.mxu0 0.0
    %v2082 = vand.u32 %v121, 4294901760
    %v2083 = vsub.f32 %v121, %v2082
    %v2084 = vand.u32 %v2083, 4294901760
    %v2085 = vsub.f32 %v2083, %v2084
    %v2086 = vand.u32 %v2085, 4294901760
    %2087 = vmatpush1.msra.mxu0 %v2086
    %2088 = vmatprep.subr.mxu0 0.0
    %v2089 = vand.u32 %v120, 4294901760
    %v2090 = vsub.f32 %v120, %v2089
    %v2091 = vand.u32 %v2090, 4294901760
    %v2092 = vsub.f32 %v2090, %v2091
    %v2093 = vand.u32 %v2092, 4294901760
    %2094 = vmatpush1.msra.mxu0 %v2093
    %2095 = vmatprep.subr.mxu0 0.0
    %v2096 = vand.u32 %v119, 4294901760
    %v2097 = vsub.f32 %v119, %v2096
    %v2098 = vand.u32 %v2097, 4294901760
    %v2099 = vsub.f32 %v2097, %v2098
    %v2100 = vand.u32 %v2099, 4294901760
    %2101 = vmatpush1.msra.mxu0 %v2100
    %2102 = vmatprep.subr.mxu0 0.0
    %v2103 = vand.u32 %v118, 4294901760
    %v2104 = vsub.f32 %v118, %v2103
    %v2105 = vand.u32 %v2104, 4294901760
    %v2106 = vsub.f32 %v2104, %v2105
    %v2107 = vand.u32 %v2106, 4294901760
    %2108 = vmatpush1.msra.mxu0 %v2107
    %2109 = vmatprep.subr.mxu0 0.0
    %v2110 = vand.u32 %v117, 4294901760
    %v2111 = vsub.f32 %v117, %v2110
    %v2112 = vand.u32 %v2111, 4294901760
    %v2113 = vsub.f32 %v2111, %v2112
    %v2114 = vand.u32 %v2113, 4294901760
    %2115 = vmatpush1.msra.mxu0 %v2114
    %2116 = vmatprep.subr.mxu0 0.0
    %v2117 = vand.u32 %v116, 4294901760
    %v2118 = vsub.f32 %v116, %v2117
    %v2119 = vand.u32 %v2118, 4294901760
    %v2120 = vsub.f32 %v2118, %v2119
    %v2121 = vand.u32 %v2120, 4294901760
    %2122 = vmatpush1.msra.mxu0 %v2121
    %2123 = vmatprep.subr.mxu0 0.0
    %v2124 = vand.u32 %v115, 4294901760
    %v2125 = vsub.f32 %v115, %v2124
    %v2126 = vand.u32 %v2125, 4294901760
    %v2127 = vsub.f32 %v2125, %v2126
    %v2128 = vand.u32 %v2127, 4294901760
    %2129 = vmatpush1.msra.mxu0 %v2128
    %2130 = vmatprep.subr.mxu0 0.0
    %v2131 = vand.u32 %v114, 4294901760
    %v2132 = vsub.f32 %v114, %v2131
    %v2133 = vand.u32 %v2132, 4294901760
    %v2134 = vsub.f32 %v2132, %v2133
    %v2135 = vand.u32 %v2134, 4294901760
    %2136 = vmatpush1.msra.mxu0 %v2135
    %2137 = vmatprep.subr.mxu0 0.0
    %v2138 = vand.u32 %v113, 4294901760
    %v2139 = vsub.f32 %v113, %v2138
    %v2140 = vand.u32 %v2139, 4294901760
    %v2141 = vsub.f32 %v2139, %v2140
    %v2142 = vand.u32 %v2141, 4294901760
    %2143 = vmatpush1.msra.mxu0 %v2142
    %2144 = vmatprep.subr.mxu0 0.0
    %v2145 = vand.u32 %v112, 4294901760
    %v2146 = vsub.f32 %v112, %v2145
    %v2147 = vand.u32 %v2146, 4294901760
    %v2148 = vsub.f32 %v2146, %v2147
    %v2149 = vand.u32 %v2148, 4294901760
    %2150 = vmatpush1.msra.mxu0 %v2149
    %2151 = vmatprep.subr.mxu0 0.0
    %v2152 = vand.u32 %v111, 4294901760
    %v2153 = vsub.f32 %v111, %v2152
    %v2154 = vand.u32 %v2153, 4294901760
    %v2155 = vsub.f32 %v2153, %v2154
    %v2156 = vand.u32 %v2155, 4294901760
    %2157 = vmatpush1.msra.mxu0 %v2156
    %2158 = vmatprep.subr.mxu0 0.0
    %v2159 = vand.u32 %v110, 4294901760
    %v2160 = vsub.f32 %v110, %v2159
    %v2161 = vand.u32 %v2160, 4294901760
    %v2162 = vsub.f32 %v2160, %v2161
    %v2163 = vand.u32 %v2162, 4294901760
    %2164 = vmatpush1.msra.mxu0 %v2163
    %2165 = vmatprep.subr.mxu0 0.0
    %v2166 = vand.u32 %v109, 4294901760
    %v2167 = vsub.f32 %v109, %v2166
    %v2168 = vand.u32 %v2167, 4294901760
    %v2169 = vsub.f32 %v2167, %v2168
    %v2170 = vand.u32 %v2169, 4294901760
    %2171 = vmatpush1.msra.mxu0 %v2170
    %2172 = vmatprep.subr.mxu0 0.0
    %v2173 = vand.u32 %v108, 4294901760
    %v2174 = vsub.f32 %v108, %v2173
    %v2175 = vand.u32 %v2174, 4294901760
    %v2176 = vsub.f32 %v2174, %v2175
    %v2177 = vand.u32 %v2176, 4294901760
    %2178 = vmatpush1.msra.mxu0 %v2177
    %2179 = vmatprep.subr.mxu0 0.0
    %v2180 = vand.u32 %v107, 4294901760
    %v2181 = vsub.f32 %v107, %v2180
    %v2182 = vand.u32 %v2181, 4294901760
    %v2183 = vsub.f32 %v2181, %v2182
    %v2184 = vand.u32 %v2183, 4294901760
    %2185 = vmatpush1.msra.mxu0 %v2184
    %2186 = vmatprep.subr.mxu0 0.0
    %v2187 = vand.u32 %v138, 4294901760
    %v2188 = vsub.f32 %v138, %v2187
    %v2189 = vand.u32 %v2188, 4294901760
    %v2190 = vsub.f32 %v2188, %v2189
    %v2191 = vand.u32 %v2190, 4294901760
    %2192 = vmatpush2.msra.mxu0 %v2191
    %2193 = vmatprep.subr.mxu0 0.0
    %v2194 = vand.u32 %v137, 4294901760
    %v2195 = vsub.f32 %v137, %v2194
    %v2196 = vand.u32 %v2195, 4294901760
    %v2197 = vsub.f32 %v2195, %v2196
    %v2198 = vand.u32 %v2197, 4294901760
    %2199 = vmatpush2.msra.mxu0 %v2198
    %2200 = vmatprep.subr.mxu0 0.0
    %v2201 = vand.u32 %v136, 4294901760
    %v2202 = vsub.f32 %v136, %v2201
    %v2203 = vand.u32 %v2202, 4294901760
    %v2204 = vsub.f32 %v2202, %v2203
    %v2205 = vand.u32 %v2204, 4294901760
    %2206 = vmatpush2.msra.mxu0 %v2205
    %2207 = vmatprep.subr.mxu0 0.0
    %v2208 = vand.u32 %v135, 4294901760
    %v2209 = vsub.f32 %v135, %v2208
    %v2210 = vand.u32 %v2209, 4294901760
    %v2211 = vsub.f32 %v2209, %v2210
    %v2212 = vand.u32 %v2211, 4294901760
    %2213 = vmatpush2.msra.mxu0 %v2212
    %2214 = vmatprep.subr.mxu0 0.0
    %v2215 = vand.u32 %v134, 4294901760
    %v2216 = vsub.f32 %v134, %v2215
    %v2217 = vand.u32 %v2216, 4294901760
    %v2218 = vsub.f32 %v2216, %v2217
    %v2219 = vand.u32 %v2218, 4294901760
    %2220 = vmatpush2.msra.mxu0 %v2219
    %2221 = vmatprep.subr.mxu0 0.0
    %v2222 = vand.u32 %v133, 4294901760
    %v2223 = vsub.f32 %v133, %v2222
    %v2224 = vand.u32 %v2223, 4294901760
    %v2225 = vsub.f32 %v2223, %v2224
    %v2226 = vand.u32 %v2225, 4294901760
    %2227 = vmatpush2.msra.mxu0 %v2226
    %2228 = vmatprep.subr.mxu0 0.0
    %v2229 = vand.u32 %v132, 4294901760
    %v2230 = vsub.f32 %v132, %v2229
    %v2231 = vand.u32 %v2230, 4294901760
    %v2232 = vsub.f32 %v2230, %v2231
    %v2233 = vand.u32 %v2232, 4294901760
    %2234 = vmatpush2.msra.mxu0 %v2233
    %2235 = vmatprep.subr.mxu0 0.0
    %v2236 = vand.u32 %v131, 4294901760
    %v2237 = vsub.f32 %v131, %v2236
    %v2238 = vand.u32 %v2237, 4294901760
    %v2239 = vsub.f32 %v2237, %v2238
    %v2240 = vand.u32 %v2239, 4294901760
    %2241 = vmatpush2.msra.mxu0 %v2240
    %2242 = vmatprep.subr.mxu0 0.0
    %v2243 = vand.u32 %v130, 4294901760
    %v2244 = vsub.f32 %v130, %v2243
    %v2245 = vand.u32 %v2244, 4294901760
    %v2246 = vsub.f32 %v2244, %v2245
    %v2247 = vand.u32 %v2246, 4294901760
    %2248 = vmatpush2.msra.mxu0 %v2247
    %2249 = vmatprep.subr.mxu0 0.0
    %v2250 = vand.u32 %v129, 4294901760
    %v2251 = vsub.f32 %v129, %v2250
    %v2252 = vand.u32 %v2251, 4294901760
    %v2253 = vsub.f32 %v2251, %v2252
    %v2254 = vand.u32 %v2253, 4294901760
    %2255 = vmatpush2.msra.mxu0 %v2254
    %2256 = vmatprep.subr.mxu0 0.0
    %v2257 = vand.u32 %v128, 4294901760
    %v2258 = vsub.f32 %v128, %v2257
    %v2259 = vand.u32 %v2258, 4294901760
    %v2260 = vsub.f32 %v2258, %v2259
    %v2261 = vand.u32 %v2260, 4294901760
    %2262 = vmatpush2.msra.mxu0 %v2261
    %2263 = vmatprep.subr.mxu0 0.0
    %v2264 = vand.u32 %v127, 4294901760
    %v2265 = vsub.f32 %v127, %v2264
    %v2266 = vand.u32 %v2265, 4294901760
    %v2267 = vsub.f32 %v2265, %v2266
    %v2268 = vand.u32 %v2267, 4294901760
    %2269 = vmatpush2.msra.mxu0 %v2268
    %2270 = vmatprep.subr.mxu0 0.0
    %v2271 = vand.u32 %v126, 4294901760
    %v2272 = vsub.f32 %v126, %v2271
    %v2273 = vand.u32 %v2272, 4294901760
    %v2274 = vsub.f32 %v2272, %v2273
    %v2275 = vand.u32 %v2274, 4294901760
    %2276 = vmatpush2.msra.mxu0 %v2275
    %2277 = vmatprep.subr.mxu0 0.0
    %v2278 = vand.u32 %v125, 4294901760
    %v2279 = vsub.f32 %v125, %v2278
    %v2280 = vand.u32 %v2279, 4294901760
    %v2281 = vsub.f32 %v2279, %v2280
    %v2282 = vand.u32 %v2281, 4294901760
    %2283 = vmatpush2.msra.mxu0 %v2282
    %2284 = vmatprep.subr.mxu0 0.0
    %v2285 = vand.u32 %v124, 4294901760
    %v2286 = vsub.f32 %v124, %v2285
    %v2287 = vand.u32 %v2286, 4294901760
    %v2288 = vsub.f32 %v2286, %v2287
    %v2289 = vand.u32 %v2288, 4294901760
    %2290 = vmatpush2.msra.mxu0 %v2289
    %2291 = vmatprep.subr.mxu0 0.0
    %v2292 = vand.u32 %v123, 4294901760
    %v2293 = vsub.f32 %v123, %v2292
    %v2294 = vand.u32 %v2293, 4294901760
    %v2295 = vsub.f32 %v2293, %v2294
    %v2296 = vand.u32 %v2295, 4294901760
    %2297 = vmatpush2.msra.mxu0 %v2296
    %v2298 = vand.u32 %v227, 4294901760
    %2299 = vmatprep.mubr.f32.mxu0 %v2298
    %v2300 = vand.u32 %v226, 4294901760
    %2301 = vmatmul.mubr.f32.gmra.mxu0 %v2300
    %v2302 = vpop.f32.mrf.mxu0
    %v2303 = vadd.f32 %v2071, %v2302
    %v2304 = vpop.f32.mrf.mxu0
    %2305 = vdwg.mxu0
    %2306 = vmatprep.subr.mxu0 0.0
    %v2307 = vand.u32 %v122, 4294901760
    %v2308 = vsub.f32 %v122, %v2307
    %2309 = vmatpush1.msra.mxu0 %v2308
    %2310 = vmatprep.subr.mxu0 0.0
    %v2311 = vand.u32 %v121, 4294901760
    %v2312 = vsub.f32 %v121, %v2311
    %2313 = vmatpush1.msra.mxu0 %v2312
    %2314 = vmatprep.subr.mxu0 0.0
    %v2315 = vand.u32 %v120, 4294901760
    %v2316 = vsub.f32 %v120, %v2315
    %2317 = vmatpush1.msra.mxu0 %v2316
    %2318 = vmatprep.subr.mxu0 0.0
    %v2319 = vand.u32 %v119, 4294901760
    %v2320 = vsub.f32 %v119, %v2319
    %2321 = vmatpush1.msra.mxu0 %v2320
    %2322 = vmatprep.subr.mxu0 0.0
    %v2323 = vand.u32 %v118, 4294901760
    %v2324 = vsub.f32 %v118, %v2323
    %2325 = vmatpush1.msra.mxu0 %v2324
    %2326 = vmatprep.subr.mxu0 0.0
    %v2327 = vand.u32 %v117, 4294901760
    %v2328 = vsub.f32 %v117, %v2327
    %2329 = vmatpush1.msra.mxu0 %v2328
    %2330 = vmatprep.subr.mxu0 0.0
    %v2331 = vand.u32 %v116, 4294901760
    %v2332 = vsub.f32 %v116, %v2331
    %2333 = vmatpush1.msra.mxu0 %v2332
    %2334 = vmatprep.subr.mxu0 0.0
    %v2335 = vand.u32 %v115, 4294901760
    %v2336 = vsub.f32 %v115, %v2335
    %2337 = vmatpush1.msra.mxu0 %v2336
    %2338 = vmatprep.subr.mxu0 0.0
    %v2339 = vand.u32 %v114, 4294901760
    %v2340 = vsub.f32 %v114, %v2339
    %2341 = vmatpush1.msra.mxu0 %v2340
    %2342 = vmatprep.subr.mxu0 0.0
    %v2343 = vand.u32 %v113, 4294901760
    %v2344 = vsub.f32 %v113, %v2343
    %2345 = vmatpush1.msra.mxu0 %v2344
    %2346 = vmatprep.subr.mxu0 0.0
    %v2347 = vand.u32 %v112, 4294901760
    %v2348 = vsub.f32 %v112, %v2347
    %2349 = vmatpush1.msra.mxu0 %v2348
    %2350 = vmatprep.subr.mxu0 0.0
    %v2351 = vand.u32 %v111, 4294901760
    %v2352 = vsub.f32 %v111, %v2351
    %2353 = vmatpush1.msra.mxu0 %v2352
    %2354 = vmatprep.subr.mxu0 0.0
    %v2355 = vand.u32 %v110, 4294901760
    %v2356 = vsub.f32 %v110, %v2355
    %2357 = vmatpush1.msra.mxu0 %v2356
    %2358 = vmatprep.subr.mxu0 0.0
    %v2359 = vand.u32 %v109, 4294901760
    %v2360 = vsub.f32 %v109, %v2359
    %2361 = vmatpush1.msra.mxu0 %v2360
    %2362 = vmatprep.subr.mxu0 0.0
    %v2363 = vand.u32 %v108, 4294901760
    %v2364 = vsub.f32 %v108, %v2363
    %2365 = vmatpush1.msra.mxu0 %v2364
    %2366 = vmatprep.subr.mxu0 0.0
    %v2367 = vand.u32 %v107, 4294901760
    %v2368 = vsub.f32 %v107, %v2367
    %2369 = vmatpush1.msra.mxu0 %v2368
    %2370 = vmatprep.subr.mxu0 0.0
    %v2371 = vand.u32 %v138, 4294901760
    %v2372 = vsub.f32 %v138, %v2371
    %2373 = vmatpush2.msra.mxu0 %v2372
    %2374 = vmatprep.subr.mxu0 0.0
    %v2375 = vand.u32 %v137, 4294901760
    %v2376 = vsub.f32 %v137, %v2375
    %2377 = vmatpush2.msra.mxu0 %v2376
    %2378 = vmatprep.subr.mxu0 0.0
    %v2379 = vand.u32 %v136, 4294901760
    %v2380 = vsub.f32 %v136, %v2379
    %2381 = vmatpush2.msra.mxu0 %v2380
    %2382 = vmatprep.subr.mxu0 0.0
    %v2383 = vand.u32 %v135, 4294901760
    %v2384 = vsub.f32 %v135, %v2383
    %2385 = vmatpush2.msra.mxu0 %v2384
    %2386 = vmatprep.subr.mxu0 0.0
    %v2387 = vand.u32 %v134, 4294901760
    %v2388 = vsub.f32 %v134, %v2387
    %2389 = vmatpush2.msra.mxu0 %v2388
    %2390 = vmatprep.subr.mxu0 0.0
    %v2391 = vand.u32 %v133, 4294901760
    %v2392 = vsub.f32 %v133, %v2391
    %2393 = vmatpush2.msra.mxu0 %v2392
    %2394 = vmatprep.subr.mxu0 0.0
    %v2395 = vand.u32 %v132, 4294901760
    %v2396 = vsub.f32 %v132, %v2395
    %2397 = vmatpush2.msra.mxu0 %v2396
    %2398 = vmatprep.subr.mxu0 0.0
    %v2399 = vand.u32 %v131, 4294901760
    %v2400 = vsub.f32 %v131, %v2399
    %2401 = vmatpush2.msra.mxu0 %v2400
    %2402 = vmatprep.subr.mxu0 0.0
    %v2403 = vand.u32 %v130, 4294901760
    %v2404 = vsub.f32 %v130, %v2403
    %2405 = vmatpush2.msra.mxu0 %v2404
    %2406 = vmatprep.subr.mxu0 0.0
    %v2407 = vand.u32 %v129, 4294901760
    %v2408 = vsub.f32 %v129, %v2407
    %2409 = vmatpush2.msra.mxu0 %v2408
    %2410 = vmatprep.subr.mxu0 0.0
    %v2411 = vand.u32 %v128, 4294901760
    %v2412 = vsub.f32 %v128, %v2411
    %2413 = vmatpush2.msra.mxu0 %v2412
    %2414 = vmatprep.subr.mxu0 0.0
    %v2415 = vand.u32 %v127, 4294901760
    %v2416 = vsub.f32 %v127, %v2415
    %2417 = vmatpush2.msra.mxu0 %v2416
    %2418 = vmatprep.subr.mxu0 0.0
    %v2419 = vand.u32 %v126, 4294901760
    %v2420 = vsub.f32 %v126, %v2419
    %2421 = vmatpush2.msra.mxu0 %v2420
    %2422 = vmatprep.subr.mxu0 0.0
    %v2423 = vand.u32 %v125, 4294901760
    %v2424 = vsub.f32 %v125, %v2423
    %2425 = vmatpush2.msra.mxu0 %v2424
    %2426 = vmatprep.subr.mxu0 0.0
    %v2427 = vand.u32 %v124, 4294901760
    %v2428 = vsub.f32 %v124, %v2427
    %2429 = vmatpush2.msra.mxu0 %v2428
    %2430 = vmatprep.subr.mxu0 0.0
    %v2431 = vand.u32 %v123, 4294901760
    %v2432 = vsub.f32 %v123, %v2431
    %2433 = vmatpush2.msra.mxu0 %v2432
    %v2434 = vand.u32 %v227, 4294901760
    %v2435 = vsub.f32 %v227, %v2434
    %2436 = vmatprep.mubr.f32.mxu0 %v2435
    %v2437 = vand.u32 %v226, 4294901760
    %v2438 = vsub.f32 %v226, %v2437
    %2439 = vmatmul.mubr.f32.gmra.mxu0 %v2438
    %v2440 = vpop.f32.mrf.mxu0
    %v2441 = vadd.f32 %v2303, %v2440
    %v2442 = vpop.f32.mrf.mxu0
    %2443 = vdwg.mxu0
    %2444 = vmatprep.subr.mxu0 0.0
    %v2445 = vand.u32 %v122, 4294901760
    %2446 = vmatpush1.msra.mxu0 %v2445
    %2447 = vmatprep.subr.mxu0 0.0
    %v2448 = vand.u32 %v121, 4294901760
    %2449 = vmatpush1.msra.mxu0 %v2448
    %2450 = vmatprep.subr.mxu0 0.0
    %v2451 = vand.u32 %v120, 4294901760
    %2452 = vmatpush1.msra.mxu0 %v2451
    %2453 = vmatprep.subr.mxu0 0.0
    %v2454 = vand.u32 %v119, 4294901760
    %2455 = vmatpush1.msra.mxu0 %v2454
    %2456 = vmatprep.subr.mxu0 0.0
    %v2457 = vand.u32 %v118, 4294901760
    %2458 = vmatpush1.msra.mxu0 %v2457
    %2459 = vmatprep.subr.mxu0 0.0
    %v2460 = vand.u32 %v117, 4294901760
    %2461 = vmatpush1.msra.mxu0 %v2460
    %2462 = vmatprep.subr.mxu0 0.0
    %v2463 = vand.u32 %v116, 4294901760
    %2464 = vmatpush1.msra.mxu0 %v2463
    %2465 = vmatprep.subr.mxu0 0.0
    %v2466 = vand.u32 %v115, 4294901760
    %2467 = vmatpush1.msra.mxu0 %v2466
    %2468 = vmatprep.subr.mxu0 0.0
    %v2469 = vand.u32 %v114, 4294901760
    %2470 = vmatpush1.msra.mxu0 %v2469
    %2471 = vmatprep.subr.mxu0 0.0
    %v2472 = vand.u32 %v113, 4294901760
    %2473 = vmatpush1.msra.mxu0 %v2472
    %2474 = vmatprep.subr.mxu0 0.0
    %v2475 = vand.u32 %v112, 4294901760
    %2476 = vmatpush1.msra.mxu0 %v2475
    %2477 = vmatprep.subr.mxu0 0.0
    %v2478 = vand.u32 %v111, 4294901760
    %2479 = vmatpush1.msra.mxu0 %v2478
    %2480 = vmatprep.subr.mxu0 0.0
    %v2481 = vand.u32 %v110, 4294901760
    %2482 = vmatpush1.msra.mxu0 %v2481
    %2483 = vmatprep.subr.mxu0 0.0
    %v2484 = vand.u32 %v109, 4294901760
    %2485 = vmatpush1.msra.mxu0 %v2484
    %2486 = vmatprep.subr.mxu0 0.0
    %v2487 = vand.u32 %v108, 4294901760
    %2488 = vmatpush1.msra.mxu0 %v2487
    %2489 = vmatprep.subr.mxu0 0.0
    %v2490 = vand.u32 %v107, 4294901760
    %2491 = vmatpush1.msra.mxu0 %v2490
    %2492 = vmatprep.subr.mxu0 0.0
    %v2493 = vand.u32 %v138, 4294901760
    %2494 = vmatpush2.msra.mxu0 %v2493
    %2495 = vmatprep.subr.mxu0 0.0
    %v2496 = vand.u32 %v137, 4294901760
    %2497 = vmatpush2.msra.mxu0 %v2496
    %2498 = vmatprep.subr.mxu0 0.0
    %v2499 = vand.u32 %v136, 4294901760
    %2500 = vmatpush2.msra.mxu0 %v2499
    %2501 = vmatprep.subr.mxu0 0.0
    %v2502 = vand.u32 %v135, 4294901760
    %2503 = vmatpush2.msra.mxu0 %v2502
    %2504 = vmatprep.subr.mxu0 0.0
    %v2505 = vand.u32 %v134, 4294901760
    %2506 = vmatpush2.msra.mxu0 %v2505
    %2507 = vmatprep.subr.mxu0 0.0
    %v2508 = vand.u32 %v133, 4294901760
    %2509 = vmatpush2.msra.mxu0 %v2508
    %2510 = vmatprep.subr.mxu0 0.0
    %v2511 = vand.u32 %v132, 4294901760
    %2512 = vmatpush2.msra.mxu0 %v2511
    %2513 = vmatprep.subr.mxu0 0.0
    %v2514 = vand.u32 %v131, 4294901760
    %2515 = vmatpush2.msra.mxu0 %v2514
    %2516 = vmatprep.subr.mxu0 0.0
    %v2517 = vand.u32 %v130, 4294901760
    %2518 = vmatpush2.msra.mxu0 %v2517
    %2519 = vmatprep.subr.mxu0 0.0
    %v2520 = vand.u32 %v129, 4294901760
    %2521 = vmatpush2.msra.mxu0 %v2520
    %2522 = vmatprep.subr.mxu0 0.0
    %v2523 = vand.u32 %v128, 4294901760
    %2524 = vmatpush2.msra.mxu0 %v2523
    %2525 = vmatprep.subr.mxu0 0.0
    %v2526 = vand.u32 %v127, 4294901760
    %2527 = vmatpush2.msra.mxu0 %v2526
    %2528 = vmatprep.subr.mxu0 0.0
    %v2529 = vand.u32 %v126, 4294901760
    %2530 = vmatpush2.msra.mxu0 %v2529
    %2531 = vmatprep.subr.mxu0 0.0
    %v2532 = vand.u32 %v125, 4294901760
    %2533 = vmatpush2.msra.mxu0 %v2532
    %2534 = vmatprep.subr.mxu0 0.0
    %v2535 = vand.u32 %v124, 4294901760
    %2536 = vmatpush2.msra.mxu0 %v2535
    %2537 = vmatprep.subr.mxu0 0.0
    %v2538 = vand.u32 %v123, 4294901760
    %2539 = vmatpush2.msra.mxu0 %v2538
    %v2540 = vand.u32 %v227, 4294901760
    %v2541 = vsub.f32 %v227, %v2540
    %v2542 = vand.u32 %v2541, 4294901760
    %2543 = vmatprep.mubr.f32.mxu0 %v2542
    %v2544 = vand.u32 %v226, 4294901760
    %v2545 = vsub.f32 %v226, %v2544
    %v2546 = vand.u32 %v2545, 4294901760
    %2547 = vmatmul.mubr.f32.gmra.mxu0 %v2546
    %v2548 = vpop.f32.mrf.mxu0
    %v2549 = vadd.f32 %v2441, %v2548
    %v2550 = vpop.f32.mrf.mxu0
    %2551 = vdwg.mxu0
    %2552 = vmatprep.subr.mxu0 0.0
    %v2553 = vand.u32 %v122, 4294901760
    %v2554 = vsub.f32 %v122, %v2553
    %v2555 = vand.u32 %v2554, 4294901760
    %2556 = vmatpush1.msra.mxu0 %v2555
    %2557 = vmatprep.subr.mxu0 0.0
    %v2558 = vand.u32 %v121, 4294901760
    %v2559 = vsub.f32 %v121, %v2558
    %v2560 = vand.u32 %v2559, 4294901760
    %2561 = vmatpush1.msra.mxu0 %v2560
    %2562 = vmatprep.subr.mxu0 0.0
    %v2563 = vand.u32 %v120, 4294901760
    %v2564 = vsub.f32 %v120, %v2563
    %v2565 = vand.u32 %v2564, 4294901760
    %2566 = vmatpush1.msra.mxu0 %v2565
    %2567 = vmatprep.subr.mxu0 0.0
    %v2568 = vand.u32 %v119, 4294901760
    %v2569 = vsub.f32 %v119, %v2568
    %v2570 = vand.u32 %v2569, 4294901760
    %2571 = vmatpush1.msra.mxu0 %v2570
    %2572 = vmatprep.subr.mxu0 0.0
    %v2573 = vand.u32 %v118, 4294901760
    %v2574 = vsub.f32 %v118, %v2573
    %v2575 = vand.u32 %v2574, 4294901760
    %2576 = vmatpush1.msra.mxu0 %v2575
    %2577 = vmatprep.subr.mxu0 0.0
    %v2578 = vand.u32 %v117, 4294901760
    %v2579 = vsub.f32 %v117, %v2578
    %v2580 = vand.u32 %v2579, 4294901760
    %2581 = vmatpush1.msra.mxu0 %v2580
    %2582 = vmatprep.subr.mxu0 0.0
    %v2583 = vand.u32 %v116, 4294901760
    %v2584 = vsub.f32 %v116, %v2583
    %v2585 = vand.u32 %v2584, 4294901760
    %2586 = vmatpush1.msra.mxu0 %v2585
    %2587 = vmatprep.subr.mxu0 0.0
    %v2588 = vand.u32 %v115, 4294901760
    %v2589 = vsub.f32 %v115, %v2588
    %v2590 = vand.u32 %v2589, 4294901760
    %2591 = vmatpush1.msra.mxu0 %v2590
    %2592 = vmatprep.subr.mxu0 0.0
    %v2593 = vand.u32 %v114, 4294901760
    %v2594 = vsub.f32 %v114, %v2593
    %v2595 = vand.u32 %v2594, 4294901760
    %2596 = vmatpush1.msra.mxu0 %v2595
    %2597 = vmatprep.subr.mxu0 0.0
    %v2598 = vand.u32 %v113, 4294901760
    %v2599 = vsub.f32 %v113, %v2598
    %v2600 = vand.u32 %v2599, 4294901760
    %2601 = vmatpush1.msra.mxu0 %v2600
    %2602 = vmatprep.subr.mxu0 0.0
    %v2603 = vand.u32 %v112, 4294901760
    %v2604 = vsub.f32 %v112, %v2603
    %v2605 = vand.u32 %v2604, 4294901760
    %2606 = vmatpush1.msra.mxu0 %v2605
    %2607 = vmatprep.subr.mxu0 0.0
    %v2608 = vand.u32 %v111, 4294901760
    %v2609 = vsub.f32 %v111, %v2608
    %v2610 = vand.u32 %v2609, 4294901760
    %2611 = vmatpush1.msra.mxu0 %v2610
    %2612 = vmatprep.subr.mxu0 0.0
    %v2613 = vand.u32 %v110, 4294901760
    %v2614 = vsub.f32 %v110, %v2613
    %v2615 = vand.u32 %v2614, 4294901760
    %2616 = vmatpush1.msra.mxu0 %v2615
    %2617 = vmatprep.subr.mxu0 0.0
    %v2618 = vand.u32 %v109, 4294901760
    %v2619 = vsub.f32 %v109, %v2618
    %v2620 = vand.u32 %v2619, 4294901760
    %2621 = vmatpush1.msra.mxu0 %v2620
    %2622 = vmatprep.subr.mxu0 0.0
    %v2623 = vand.u32 %v108, 4294901760
    %v2624 = vsub.f32 %v108, %v2623
    %v2625 = vand.u32 %v2624, 4294901760
    %2626 = vmatpush1.msra.mxu0 %v2625
    %2627 = vmatprep.subr.mxu0 0.0
    %v2628 = vand.u32 %v107, 4294901760
    %v2629 = vsub.f32 %v107, %v2628
    %v2630 = vand.u32 %v2629, 4294901760
    %2631 = vmatpush1.msra.mxu0 %v2630
    %2632 = vmatprep.subr.mxu0 0.0
    %v2633 = vand.u32 %v138, 4294901760
    %v2634 = vsub.f32 %v138, %v2633
    %v2635 = vand.u32 %v2634, 4294901760
    %2636 = vmatpush2.msra.mxu0 %v2635
    %2637 = vmatprep.subr.mxu0 0.0
    %v2638 = vand.u32 %v137, 4294901760
    %v2639 = vsub.f32 %v137, %v2638
    %v2640 = vand.u32 %v2639, 4294901760
    %2641 = vmatpush2.msra.mxu0 %v2640
    %2642 = vmatprep.subr.mxu0 0.0
    %v2643 = vand.u32 %v136, 4294901760
    %v2644 = vsub.f32 %v136, %v2643
    %v2645 = vand.u32 %v2644, 4294901760
    %2646 = vmatpush2.msra.mxu0 %v2645
    %2647 = vmatprep.subr.mxu0 0.0
    %v2648 = vand.u32 %v135, 4294901760
    %v2649 = vsub.f32 %v135, %v2648
    %v2650 = vand.u32 %v2649, 4294901760
    %2651 = vmatpush2.msra.mxu0 %v2650
    %2652 = vmatprep.subr.mxu0 0.0
    %v2653 = vand.u32 %v134, 4294901760
    %v2654 = vsub.f32 %v134, %v2653
    %v2655 = vand.u32 %v2654, 4294901760
    %2656 = vmatpush2.msra.mxu0 %v2655
    %2657 = vmatprep.subr.mxu0 0.0
    %v2658 = vand.u32 %v133, 4294901760
    %v2659 = vsub.f32 %v133, %v2658
    %v2660 = vand.u32 %v2659, 4294901760
    %2661 = vmatpush2.msra.mxu0 %v2660
    %2662 = vmatprep.subr.mxu0 0.0
    %v2663 = vand.u32 %v132, 4294901760
    %v2664 = vsub.f32 %v132, %v2663
    %v2665 = vand.u32 %v2664, 4294901760
    %2666 = vmatpush2.msra.mxu0 %v2665
    %2667 = vmatprep.subr.mxu0 0.0
    %v2668 = vand.u32 %v131, 4294901760
    %v2669 = vsub.f32 %v131, %v2668
    %v2670 = vand.u32 %v2669, 4294901760
    %2671 = vmatpush2.msra.mxu0 %v2670
    %2672 = vmatprep.subr.mxu0 0.0
    %v2673 = vand.u32 %v130, 4294901760
    %v2674 = vsub.f32 %v130, %v2673
    %v2675 = vand.u32 %v2674, 4294901760
    %2676 = vmatpush2.msra.mxu0 %v2675
    %2677 = vmatprep.subr.mxu0 0.0
    %v2678 = vand.u32 %v129, 4294901760
    %v2679 = vsub.f32 %v129, %v2678
    %v2680 = vand.u32 %v2679, 4294901760
    %2681 = vmatpush2.msra.mxu0 %v2680
    %2682 = vmatprep.subr.mxu0 0.0
    %v2683 = vand.u32 %v128, 4294901760
    %v2684 = vsub.f32 %v128, %v2683
    %v2685 = vand.u32 %v2684, 4294901760
    %2686 = vmatpush2.msra.mxu0 %v2685
    %2687 = vmatprep.subr.mxu0 0.0
    %v2688 = vand.u32 %v127, 4294901760
    %v2689 = vsub.f32 %v127, %v2688
    %v2690 = vand.u32 %v2689, 4294901760
    %2691 = vmatpush2.msra.mxu0 %v2690
    %2692 = vmatprep.subr.mxu0 0.0
    %v2693 = vand.u32 %v126, 4294901760
    %v2694 = vsub.f32 %v126, %v2693
    %v2695 = vand.u32 %v2694, 4294901760
    %2696 = vmatpush2.msra.mxu0 %v2695
    %2697 = vmatprep.subr.mxu0 0.0
    %v2698 = vand.u32 %v125, 4294901760
    %v2699 = vsub.f32 %v125, %v2698
    %v2700 = vand.u32 %v2699, 4294901760
    %2701 = vmatpush2.msra.mxu0 %v2700
    %2702 = vmatprep.subr.mxu0 0.0
    %v2703 = vand.u32 %v124, 4294901760
    %v2704 = vsub.f32 %v124, %v2703
    %v2705 = vand.u32 %v2704, 4294901760
    %2706 = vmatpush2.msra.mxu0 %v2705
    %2707 = vmatprep.subr.mxu0 0.0
    %v2708 = vand.u32 %v123, 4294901760
    %v2709 = vsub.f32 %v123, %v2708
    %v2710 = vand.u32 %v2709, 4294901760
    %2711 = vmatpush2.msra.mxu0 %v2710
    %v2712 = vand.u32 %v227, 4294901760
    %2713 = vmatprep.mubr.f32.mxu0 %v2712
    %v2714 = vand.u32 %v226, 4294901760
    %2715 = vmatmul.mubr.f32.gmra.mxu0 %v2714
    %v2716 = vpop.f32.mrf.mxu0
    %v2717 = vadd.f32 %v2549, %v2716
    %v2718 = vpop.f32.mrf.mxu0
    %2719 = vdwg.mxu0
    %2720 = vmatprep.subr.mxu0 0.0
    %v2721 = vand.u32 %v122, 4294901760
    %2722 = vmatpush1.msra.mxu0 %v2721
    %2723 = vmatprep.subr.mxu0 0.0
    %v2724 = vand.u32 %v121, 4294901760
    %2725 = vmatpush1.msra.mxu0 %v2724
    %2726 = vmatprep.subr.mxu0 0.0
    %v2727 = vand.u32 %v120, 4294901760
    %2728 = vmatpush1.msra.mxu0 %v2727
    %2729 = vmatprep.subr.mxu0 0.0
    %v2730 = vand.u32 %v119, 4294901760
    %2731 = vmatpush1.msra.mxu0 %v2730
    %2732 = vmatprep.subr.mxu0 0.0
    %v2733 = vand.u32 %v118, 4294901760
    %2734 = vmatpush1.msra.mxu0 %v2733
    %2735 = vmatprep.subr.mxu0 0.0
    %v2736 = vand.u32 %v117, 4294901760
    %2737 = vmatpush1.msra.mxu0 %v2736
    %2738 = vmatprep.subr.mxu0 0.0
    %v2739 = vand.u32 %v116, 4294901760
    %2740 = vmatpush1.msra.mxu0 %v2739
    %2741 = vmatprep.subr.mxu0 0.0
    %v2742 = vand.u32 %v115, 4294901760
    %2743 = vmatpush1.msra.mxu0 %v2742
    %2744 = vmatprep.subr.mxu0 0.0
    %v2745 = vand.u32 %v114, 4294901760
    %2746 = vmatpush1.msra.mxu0 %v2745
    %2747 = vmatprep.subr.mxu0 0.0
    %v2748 = vand.u32 %v113, 4294901760
    %2749 = vmatpush1.msra.mxu0 %v2748
    %2750 = vmatprep.subr.mxu0 0.0
    %v2751 = vand.u32 %v112, 4294901760
    %2752 = vmatpush1.msra.mxu0 %v2751
    %2753 = vmatprep.subr.mxu0 0.0
    %v2754 = vand.u32 %v111, 4294901760
    %2755 = vmatpush1.msra.mxu0 %v2754
    %2756 = vmatprep.subr.mxu0 0.0
    %v2757 = vand.u32 %v110, 4294901760
    %2758 = vmatpush1.msra.mxu0 %v2757
    %2759 = vmatprep.subr.mxu0 0.0
    %v2760 = vand.u32 %v109, 4294901760
    %2761 = vmatpush1.msra.mxu0 %v2760
    %2762 = vmatprep.subr.mxu0 0.0
    %v2763 = vand.u32 %v108, 4294901760
    %2764 = vmatpush1.msra.mxu0 %v2763
    %2765 = vmatprep.subr.mxu0 0.0
    %v2766 = vand.u32 %v107, 4294901760
    %2767 = vmatpush1.msra.mxu0 %v2766
    %2768 = vmatprep.subr.mxu0 0.0
    %v2769 = vand.u32 %v138, 4294901760
    %2770 = vmatpush2.msra.mxu0 %v2769
    %2771 = vmatprep.subr.mxu0 0.0
    %v2772 = vand.u32 %v137, 4294901760
    %2773 = vmatpush2.msra.mxu0 %v2772
    %2774 = vmatprep.subr.mxu0 0.0
    %v2775 = vand.u32 %v136, 4294901760
    %2776 = vmatpush2.msra.mxu0 %v2775
    %2777 = vmatprep.subr.mxu0 0.0
    %v2778 = vand.u32 %v135, 4294901760
    %2779 = vmatpush2.msra.mxu0 %v2778
    %2780 = vmatprep.subr.mxu0 0.0
    %v2781 = vand.u32 %v134, 4294901760
    %2782 = vmatpush2.msra.mxu0 %v2781
    %2783 = vmatprep.subr.mxu0 0.0
    %v2784 = vand.u32 %v133, 4294901760
    %2785 = vmatpush2.msra.mxu0 %v2784
    %2786 = vmatprep.subr.mxu0 0.0
    %v2787 = vand.u32 %v132, 4294901760
    %2788 = vmatpush2.msra.mxu0 %v2787
    %2789 = vmatprep.subr.mxu0 0.0
    %v2790 = vand.u32 %v131, 4294901760
    %2791 = vmatpush2.msra.mxu0 %v2790
    %2792 = vmatprep.subr.mxu0 0.0
    %v2793 = vand.u32 %v130, 4294901760
    %2794 = vmatpush2.msra.mxu0 %v2793
    %2795 = vmatprep.subr.mxu0 0.0
    %v2796 = vand.u32 %v129, 4294901760
    %2797 = vmatpush2.msra.mxu0 %v2796
    %2798 = vmatprep.subr.mxu0 0.0
    %v2799 = vand.u32 %v128, 4294901760
    %2800 = vmatpush2.msra.mxu0 %v2799
    %2801 = vmatprep.subr.mxu0 0.0
    %v2802 = vand.u32 %v127, 4294901760
    %2803 = vmatpush2.msra.mxu0 %v2802
    %2804 = vmatprep.subr.mxu0 0.0
    %v2805 = vand.u32 %v126, 4294901760
    %2806 = vmatpush2.msra.mxu0 %v2805
    %2807 = vmatprep.subr.mxu0 0.0
    %v2808 = vand.u32 %v125, 4294901760
    %2809 = vmatpush2.msra.mxu0 %v2808
    %2810 = vmatprep.subr.mxu0 0.0
    %v2811 = vand.u32 %v124, 4294901760
    %2812 = vmatpush2.msra.mxu0 %v2811
    %2813 = vmatprep.subr.mxu0 0.0
    %v2814 = vand.u32 %v123, 4294901760
    %2815 = vmatpush2.msra.mxu0 %v2814
    %v2816 = vand.u32 %v227, 4294901760
    %2817 = vmatprep.mubr.f32.mxu0 %v2816
    %v2818 = vand.u32 %v226, 4294901760
    %2819 = vmatmul.mubr.f32.gmra.mxu0 %v2818
    %v2820 = vpop.f32.mrf.mxu0
    %v2821 = vadd.f32 %v2717, %v2820
    %v2822 = vpop.f32.mrf.mxu0
    %2823 = vdwg.mxu0
    %2824 = vmatprep.subr.mxu0 0.0
    %2825 = vmatpush1.msra.mxu0 0.0
    %2826 = vmatprep.subr.mxu0 0.0
    %2827 = vmatpush1.msra.mxu0 0.0
    %2828 = vmatprep.subr.mxu0 0.0
    %2829 = vmatpush1.msra.mxu0 0.0
    %2830 = vmatprep.subr.mxu0 0.0
    %2831 = vmatpush1.msra.mxu0 0.0
    %2832 = vmatprep.subr.mxu0 0.0
    %2833 = vmatpush1.msra.mxu0 0.0
    %2834 = vmatprep.subr.mxu0 0.0
    %2835 = vmatpush1.msra.mxu0 0.0
    %2836 = vmatprep.subr.mxu0 0.0
    %2837 = vmatpush1.msra.mxu0 0.0
    %2838 = vmatprep.subr.mxu0 0.0
    %2839 = vmatpush1.msra.mxu0 0.0
    %2840 = vmatprep.subr.mxu0 0.0
    %2841 = vmatpush1.msra.mxu0 0.0
    %2842 = vmatprep.subr.mxu0 0.0
    %2843 = vmatpush1.msra.mxu0 0.0
    %2844 = vmatprep.subr.mxu0 0.0
    %2845 = vmatpush1.msra.mxu0 0.0
    %2846 = vmatprep.subr.mxu0 0.0
    %2847 = vmatpush1.msra.mxu0 0.0
    %2848 = vmatprep.subr.mxu0 0.0
    %v2849 = vand.u32 %v142, 4294901760
    %2850 = vmatpush1.msra.mxu0 %v2849
    %2851 = vmatprep.subr.mxu0 0.0
    %v2852 = vand.u32 %v141, 4294901760
    %2853 = vmatpush1.msra.mxu0 %v2852
    %2854 = vmatprep.subr.mxu0 0.0
    %v2855 = vand.u32 %v140, 4294901760
    %2856 = vmatpush1.msra.mxu0 %v2855
    %2857 = vmatprep.subr.mxu0 0.0
    %v2858 = vand.u32 %v139, 4294901760
    %2859 = vmatpush1.msra.mxu0 %v2858
    %2860 = vmatprep.subr.mxu0 0.0
    %2861 = vmatpush2.msra.mxu0 0.0
    %2862 = vmatprep.subr.mxu0 0.0
    %2863 = vmatpush2.msra.mxu0 0.0
    %2864 = vmatprep.subr.mxu0 0.0
    %2865 = vmatpush2.msra.mxu0 0.0
    %2866 = vmatprep.subr.mxu0 0.0
    %2867 = vmatpush2.msra.mxu0 0.0
    %2868 = vmatprep.subr.mxu0 0.0
    %2869 = vmatpush2.msra.mxu0 0.0
    %2870 = vmatprep.subr.mxu0 0.0
    %2871 = vmatpush2.msra.mxu0 0.0
    %2872 = vmatprep.subr.mxu0 0.0
    %2873 = vmatpush2.msra.mxu0 0.0
    %2874 = vmatprep.subr.mxu0 0.0
    %2875 = vmatpush2.msra.mxu0 0.0
    %2876 = vmatprep.subr.mxu0 0.0
    %2877 = vmatpush2.msra.mxu0 0.0
    %2878 = vmatprep.subr.mxu0 0.0
    %2879 = vmatpush2.msra.mxu0 0.0
    %2880 = vmatprep.subr.mxu0 0.0
    %2881 = vmatpush2.msra.mxu0 0.0
    %2882 = vmatprep.subr.mxu0 0.0
    %2883 = vmatpush2.msra.mxu0 0.0
    %2884 = vmatprep.subr.mxu0 0.0
    %2885 = vmatpush2.msra.mxu0 0.0
    %2886 = vmatprep.subr.mxu0 0.0
    %2887 = vmatpush2.msra.mxu0 0.0
    %2888 = vmatprep.subr.mxu0 0.0
    %2889 = vmatpush2.msra.mxu0 0.0
    %2890 = vmatprep.subr.mxu0 0.0
    %2891 = vmatpush2.msra.mxu0 0.0
    %2892 = vmatprep.mubr.f32.mxu0 0.0
    %v2893 = vand.u32 %v236, 4294901760
    %v2894 = vsub.f32 %v236, %v2893
    %v2895 = vand.u32 %v2894, 4294901760
    %v2896 = vsub.f32 %v2894, %v2895
    %v2897 = vand.u32 %v2896, 4294901760
    %2898 = vmatmul.mubr.f32.gmra.mxu0 %v2897
    %v2899 = vpop.f32.mrf.mxu0
    %v2900 = vadd.f32 %v2821, %v2899
    %v2901 = vpop.f32.mrf.mxu0
    %2902 = vdwg.mxu0
    %2903 = vmatprep.subr.mxu0 0.0
    %2904 = vmatpush1.msra.mxu0 0.0
    %2905 = vmatprep.subr.mxu0 0.0
    %2906 = vmatpush1.msra.mxu0 0.0
    %2907 = vmatprep.subr.mxu0 0.0
    %2908 = vmatpush1.msra.mxu0 0.0
    %2909 = vmatprep.subr.mxu0 0.0
    %2910 = vmatpush1.msra.mxu0 0.0
    %2911 = vmatprep.subr.mxu0 0.0
    %2912 = vmatpush1.msra.mxu0 0.0
    %2913 = vmatprep.subr.mxu0 0.0
    %2914 = vmatpush1.msra.mxu0 0.0
    %2915 = vmatprep.subr.mxu0 0.0
    %2916 = vmatpush1.msra.mxu0 0.0
    %2917 = vmatprep.subr.mxu0 0.0
    %2918 = vmatpush1.msra.mxu0 0.0
    %2919 = vmatprep.subr.mxu0 0.0
    %2920 = vmatpush1.msra.mxu0 0.0
    %2921 = vmatprep.subr.mxu0 0.0
    %2922 = vmatpush1.msra.mxu0 0.0
    %2923 = vmatprep.subr.mxu0 0.0
    %2924 = vmatpush1.msra.mxu0 0.0
    %2925 = vmatprep.subr.mxu0 0.0
    %2926 = vmatpush1.msra.mxu0 0.0
    %2927 = vmatprep.subr.mxu0 0.0
    %v2928 = vand.u32 %v142, 4294901760
    %v2929 = vsub.f32 %v142, %v2928
    %v2930 = vand.u32 %v2929, 4294901760
    %v2931 = vsub.f32 %v2929, %v2930
    %v2932 = vand.u32 %v2931, 4294901760
    %2933 = vmatpush1.msra.mxu0 %v2932
    %2934 = vmatprep.subr.mxu0 0.0
    %v2935 = vand.u32 %v141, 4294901760
    %v2936 = vsub.f32 %v141, %v2935
    %v2937 = vand.u32 %v2936, 4294901760
    %v2938 = vsub.f32 %v2936, %v2937
    %v2939 = vand.u32 %v2938, 4294901760
    %2940 = vmatpush1.msra.mxu0 %v2939
    %2941 = vmatprep.subr.mxu0 0.0
    %v2942 = vand.u32 %v140, 4294901760
    %v2943 = vsub.f32 %v140, %v2942
    %v2944 = vand.u32 %v2943, 4294901760
    %v2945 = vsub.f32 %v2943, %v2944
    %v2946 = vand.u32 %v2945, 4294901760
    %2947 = vmatpush1.msra.mxu0 %v2946
    %2948 = vmatprep.subr.mxu0 0.0
    %v2949 = vand.u32 %v139, 4294901760
    %v2950 = vsub.f32 %v139, %v2949
    %v2951 = vand.u32 %v2950, 4294901760
    %v2952 = vsub.f32 %v2950, %v2951
    %v2953 = vand.u32 %v2952, 4294901760
    %2954 = vmatpush1.msra.mxu0 %v2953
    %2955 = vmatprep.subr.mxu0 0.0
    %2956 = vmatpush2.msra.mxu0 0.0
    %2957 = vmatprep.subr.mxu0 0.0
    %2958 = vmatpush2.msra.mxu0 0.0
    %2959 = vmatprep.subr.mxu0 0.0
    %2960 = vmatpush2.msra.mxu0 0.0
    %2961 = vmatprep.subr.mxu0 0.0
    %2962 = vmatpush2.msra.mxu0 0.0
    %2963 = vmatprep.subr.mxu0 0.0
    %2964 = vmatpush2.msra.mxu0 0.0
    %2965 = vmatprep.subr.mxu0 0.0
    %2966 = vmatpush2.msra.mxu0 0.0
    %2967 = vmatprep.subr.mxu0 0.0
    %2968 = vmatpush2.msra.mxu0 0.0
    %2969 = vmatprep.subr.mxu0 0.0
    %2970 = vmatpush2.msra.mxu0 0.0
    %2971 = vmatprep.subr.mxu0 0.0
    %2972 = vmatpush2.msra.mxu0 0.0
    %2973 = vmatprep.subr.mxu0 0.0
    %2974 = vmatpush2.msra.mxu0 0.0
    %2975 = vmatprep.subr.mxu0 0.0
    %2976 = vmatpush2.msra.mxu0 0.0
    %2977 = vmatprep.subr.mxu0 0.0
    %2978 = vmatpush2.msra.mxu0 0.0
    %2979 = vmatprep.subr.mxu0 0.0
    %2980 = vmatpush2.msra.mxu0 0.0
    %2981 = vmatprep.subr.mxu0 0.0
    %2982 = vmatpush2.msra.mxu0 0.0
    %2983 = vmatprep.subr.mxu0 0.0
    %2984 = vmatpush2.msra.mxu0 0.0
    %2985 = vmatprep.subr.mxu0 0.0
    %2986 = vmatpush2.msra.mxu0 0.0
    %2987 = vmatprep.mubr.f32.mxu0 0.0
    %v2988 = vand.u32 %v236, 4294901760
    %2989 = vmatmul.mubr.f32.gmra.mxu0 %v2988
    %v2990 = vpop.f32.mrf.mxu0
    %v2991 = vadd.f32 %v2900, %v2990
    %v2992 = vpop.f32.mrf.mxu0
    %2993 = vdwg.mxu0
    %2994 = vmatprep.subr.mxu0 0.0
    %2995 = vmatpush1.msra.mxu0 0.0
    %2996 = vmatprep.subr.mxu0 0.0
    %2997 = vmatpush1.msra.mxu0 0.0
    %2998 = vmatprep.subr.mxu0 0.0
    %2999 = vmatpush1.msra.mxu0 0.0
    %3000 = vmatprep.subr.mxu0 0.0
    %3001 = vmatpush1.msra.mxu0 0.0
    %3002 = vmatprep.subr.mxu0 0.0
    %3003 = vmatpush1.msra.mxu0 0.0
    %3004 = vmatprep.subr.mxu0 0.0
    %3005 = vmatpush1.msra.mxu0 0.0
    %3006 = vmatprep.subr.mxu0 0.0
    %3007 = vmatpush1.msra.mxu0 0.0
    %3008 = vmatprep.subr.mxu0 0.0
    %3009 = vmatpush1.msra.mxu0 0.0
    %3010 = vmatprep.subr.mxu0 0.0
    %3011 = vmatpush1.msra.mxu0 0.0
    %3012 = vmatprep.subr.mxu0 0.0
    %3013 = vmatpush1.msra.mxu0 0.0
    %3014 = vmatprep.subr.mxu0 0.0
    %3015 = vmatpush1.msra.mxu0 0.0
    %3016 = vmatprep.subr.mxu0 0.0
    %3017 = vmatpush1.msra.mxu0 0.0
    %3018 = vmatprep.subr.mxu0 0.0
    %v3019 = vand.u32 %v142, 4294901760
    %v3020 = vsub.f32 %v142, %v3019
    %3021 = vmatpush1.msra.mxu0 %v3020
    %3022 = vmatprep.subr.mxu0 0.0
    %v3023 = vand.u32 %v141, 4294901760
    %v3024 = vsub.f32 %v141, %v3023
    %3025 = vmatpush1.msra.mxu0 %v3024
    %3026 = vmatprep.subr.mxu0 0.0
    %v3027 = vand.u32 %v140, 4294901760
    %v3028 = vsub.f32 %v140, %v3027
    %3029 = vmatpush1.msra.mxu0 %v3028
    %3030 = vmatprep.subr.mxu0 0.0
    %v3031 = vand.u32 %v139, 4294901760
    %v3032 = vsub.f32 %v139, %v3031
    %3033 = vmatpush1.msra.mxu0 %v3032
    %3034 = vmatprep.subr.mxu0 0.0
    %3035 = vmatpush2.msra.mxu0 0.0
    %3036 = vmatprep.subr.mxu0 0.0
    %3037 = vmatpush2.msra.mxu0 0.0
    %3038 = vmatprep.subr.mxu0 0.0
    %3039 = vmatpush2.msra.mxu0 0.0
    %3040 = vmatprep.subr.mxu0 0.0
    %3041 = vmatpush2.msra.mxu0 0.0
    %3042 = vmatprep.subr.mxu0 0.0
    %3043 = vmatpush2.msra.mxu0 0.0
    %3044 = vmatprep.subr.mxu0 0.0
    %3045 = vmatpush2.msra.mxu0 0.0
    %3046 = vmatprep.subr.mxu0 0.0
    %3047 = vmatpush2.msra.mxu0 0.0
    %3048 = vmatprep.subr.mxu0 0.0
    %3049 = vmatpush2.msra.mxu0 0.0
    %3050 = vmatprep.subr.mxu0 0.0
    %3051 = vmatpush2.msra.mxu0 0.0
    %3052 = vmatprep.subr.mxu0 0.0
    %3053 = vmatpush2.msra.mxu0 0.0
    %3054 = vmatprep.subr.mxu0 0.0
    %3055 = vmatpush2.msra.mxu0 0.0
    %3056 = vmatprep.subr.mxu0 0.0
    %3057 = vmatpush2.msra.mxu0 0.0
    %3058 = vmatprep.subr.mxu0 0.0
    %3059 = vmatpush2.msra.mxu0 0.0
    %3060 = vmatprep.subr.mxu0 0.0
    %3061 = vmatpush2.msra.mxu0 0.0
    %3062 = vmatprep.subr.mxu0 0.0
    %3063 = vmatpush2.msra.mxu0 0.0
    %3064 = vmatprep.subr.mxu0 0.0
    %3065 = vmatpush2.msra.mxu0 0.0
    %3066 = vmatprep.mubr.f32.mxu0 0.0
    %v3067 = vand.u32 %v236, 4294901760
    %v3068 = vsub.f32 %v236, %v3067
    %3069 = vmatmul.mubr.f32.gmra.mxu0 %v3068
    %v3070 = vpop.f32.mrf.mxu0
    %v3071 = vadd.f32 %v2991, %v3070
    %v3072 = vpop.f32.mrf.mxu0
    %3073 = vdwg.mxu0
    %3074 = vmatprep.subr.mxu0 0.0
    %3075 = vmatpush1.msra.mxu0 0.0
    %3076 = vmatprep.subr.mxu0 0.0
    %3077 = vmatpush1.msra.mxu0 0.0
    %3078 = vmatprep.subr.mxu0 0.0
    %3079 = vmatpush1.msra.mxu0 0.0
    %3080 = vmatprep.subr.mxu0 0.0
    %3081 = vmatpush1.msra.mxu0 0.0
    %3082 = vmatprep.subr.mxu0 0.0
    %3083 = vmatpush1.msra.mxu0 0.0
    %3084 = vmatprep.subr.mxu0 0.0
    %3085 = vmatpush1.msra.mxu0 0.0
    %3086 = vmatprep.subr.mxu0 0.0
    %3087 = vmatpush1.msra.mxu0 0.0
    %3088 = vmatprep.subr.mxu0 0.0
    %3089 = vmatpush1.msra.mxu0 0.0
    %3090 = vmatprep.subr.mxu0 0.0
    %3091 = vmatpush1.msra.mxu0 0.0
    %3092 = vmatprep.subr.mxu0 0.0
    %3093 = vmatpush1.msra.mxu0 0.0
    %3094 = vmatprep.subr.mxu0 0.0
    %3095 = vmatpush1.msra.mxu0 0.0
    %3096 = vmatprep.subr.mxu0 0.0
    %3097 = vmatpush1.msra.mxu0 0.0
    %3098 = vmatprep.subr.mxu0 0.0
    %v3099 = vand.u32 %v142, 4294901760
    %3100 = vmatpush1.msra.mxu0 %v3099
    %3101 = vmatprep.subr.mxu0 0.0
    %v3102 = vand.u32 %v141, 4294901760
    %3103 = vmatpush1.msra.mxu0 %v3102
    %3104 = vmatprep.subr.mxu0 0.0
    %v3105 = vand.u32 %v140, 4294901760
    %3106 = vmatpush1.msra.mxu0 %v3105
    %3107 = vmatprep.subr.mxu0 0.0
    %v3108 = vand.u32 %v139, 4294901760
    %3109 = vmatpush1.msra.mxu0 %v3108
    %3110 = vmatprep.subr.mxu0 0.0
    %3111 = vmatpush2.msra.mxu0 0.0
    %3112 = vmatprep.subr.mxu0 0.0
    %3113 = vmatpush2.msra.mxu0 0.0
    %3114 = vmatprep.subr.mxu0 0.0
    %3115 = vmatpush2.msra.mxu0 0.0
    %3116 = vmatprep.subr.mxu0 0.0
    %3117 = vmatpush2.msra.mxu0 0.0
    %3118 = vmatprep.subr.mxu0 0.0
    %3119 = vmatpush2.msra.mxu0 0.0
    %3120 = vmatprep.subr.mxu0 0.0
    %3121 = vmatpush2.msra.mxu0 0.0
    %3122 = vmatprep.subr.mxu0 0.0
    %3123 = vmatpush2.msra.mxu0 0.0
    %3124 = vmatprep.subr.mxu0 0.0
    %3125 = vmatpush2.msra.mxu0 0.0
    %3126 = vmatprep.subr.mxu0 0.0
    %3127 = vmatpush2.msra.mxu0 0.0
    %3128 = vmatprep.subr.mxu0 0.0
    %3129 = vmatpush2.msra.mxu0 0.0
    %3130 = vmatprep.subr.mxu0 0.0
    %3131 = vmatpush2.msra.mxu0 0.0
    %3132 = vmatprep.subr.mxu0 0.0
    %3133 = vmatpush2.msra.mxu0 0.0
    %3134 = vmatprep.subr.mxu0 0.0
    %3135 = vmatpush2.msra.mxu0 0.0
    %3136 = vmatprep.subr.mxu0 0.0
    %3137 = vmatpush2.msra.mxu0 0.0
    %3138 = vmatprep.subr.mxu0 0.0
    %3139 = vmatpush2.msra.mxu0 0.0
    %3140 = vmatprep.subr.mxu0 0.0
    %3141 = vmatpush2.msra.mxu0 0.0
    %3142 = vmatprep.mubr.f32.mxu0 0.0
    %v3143 = vand.u32 %v236, 4294901760
    %v3144 = vsub.f32 %v236, %v3143
    %v3145 = vand.u32 %v3144, 4294901760
    %3146 = vmatmul.mubr.f32.gmra.mxu0 %v3145
    %v3147 = vpop.f32.mrf.mxu0
    %v3148 = vadd.f32 %v3071, %v3147
    %v3149 = vpop.f32.mrf.mxu0
    %3150 = vdwg.mxu0
    %3151 = vmatprep.subr.mxu0 0.0
    %3152 = vmatpush1.msra.mxu0 0.0
    %3153 = vmatprep.subr.mxu0 0.0
    %3154 = vmatpush1.msra.mxu0 0.0
    %3155 = vmatprep.subr.mxu0 0.0
    %3156 = vmatpush1.msra.mxu0 0.0
    %3157 = vmatprep.subr.mxu0 0.0
    %3158 = vmatpush1.msra.mxu0 0.0
    %3159 = vmatprep.subr.mxu0 0.0
    %3160 = vmatpush1.msra.mxu0 0.0
    %3161 = vmatprep.subr.mxu0 0.0
    %3162 = vmatpush1.msra.mxu0 0.0
    %3163 = vmatprep.subr.mxu0 0.0
    %3164 = vmatpush1.msra.mxu0 0.0
    %3165 = vmatprep.subr.mxu0 0.0
    %3166 = vmatpush1.msra.mxu0 0.0
    %3167 = vmatprep.subr.mxu0 0.0
    %3168 = vmatpush1.msra.mxu0 0.0
    %3169 = vmatprep.subr.mxu0 0.0
    %3170 = vmatpush1.msra.mxu0 0.0
    %3171 = vmatprep.subr.mxu0 0.0
    %3172 = vmatpush1.msra.mxu0 0.0
    %3173 = vmatprep.subr.mxu0 0.0
    %3174 = vmatpush1.msra.mxu0 0.0
    %3175 = vmatprep.subr.mxu0 0.0
    %v3176 = vand.u32 %v142, 4294901760
    %v3177 = vsub.f32 %v142, %v3176
    %v3178 = vand.u32 %v3177, 4294901760
    %3179 = vmatpush1.msra.mxu0 %v3178
    %3180 = vmatprep.subr.mxu0 0.0
    %v3181 = vand.u32 %v141, 4294901760
    %v3182 = vsub.f32 %v141, %v3181
    %v3183 = vand.u32 %v3182, 4294901760
    %3184 = vmatpush1.msra.mxu0 %v3183
    %3185 = vmatprep.subr.mxu0 0.0
    %v3186 = vand.u32 %v140, 4294901760
    %v3187 = vsub.f32 %v140, %v3186
    %v3188 = vand.u32 %v3187, 4294901760
    %3189 = vmatpush1.msra.mxu0 %v3188
    %3190 = vmatprep.subr.mxu0 0.0
    %v3191 = vand.u32 %v139, 4294901760
    %v3192 = vsub.f32 %v139, %v3191
    %v3193 = vand.u32 %v3192, 4294901760
    %3194 = vmatpush1.msra.mxu0 %v3193
    %3195 = vmatprep.subr.mxu0 0.0
    %3196 = vmatpush2.msra.mxu0 0.0
    %3197 = vmatprep.subr.mxu0 0.0
    %3198 = vmatpush2.msra.mxu0 0.0
    %3199 = vmatprep.subr.mxu0 0.0
    %3200 = vmatpush2.msra.mxu0 0.0
    %3201 = vmatprep.subr.mxu0 0.0
    %3202 = vmatpush2.msra.mxu0 0.0
    %3203 = vmatprep.subr.mxu0 0.0
    %3204 = vmatpush2.msra.mxu0 0.0
    %3205 = vmatprep.subr.mxu0 0.0
    %3206 = vmatpush2.msra.mxu0 0.0
    %3207 = vmatprep.subr.mxu0 0.0
    %3208 = vmatpush2.msra.mxu0 0.0
    %3209 = vmatprep.subr.mxu0 0.0
    %3210 = vmatpush2.msra.mxu0 0.0
    %3211 = vmatprep.subr.mxu0 0.0
    %3212 = vmatpush2.msra.mxu0 0.0
    %3213 = vmatprep.subr.mxu0 0.0
    %3214 = vmatpush2.msra.mxu0 0.0
    %3215 = vmatprep.subr.mxu0 0.0
    %3216 = vmatpush2.msra.mxu0 0.0
    %3217 = vmatprep.subr.mxu0 0.0
    %3218 = vmatpush2.msra.mxu0 0.0
    %3219 = vmatprep.subr.mxu0 0.0
    %3220 = vmatpush2.msra.mxu0 0.0
    %3221 = vmatprep.subr.mxu0 0.0
    %3222 = vmatpush2.msra.mxu0 0.0
    %3223 = vmatprep.subr.mxu0 0.0
    %3224 = vmatpush2.msra.mxu0 0.0
    %3225 = vmatprep.subr.mxu0 0.0
    %3226 = vmatpush2.msra.mxu0 0.0
    %3227 = vmatprep.mubr.f32.mxu0 0.0
    %v3228 = vand.u32 %v236, 4294901760
    %3229 = vmatmul.mubr.f32.gmra.mxu0 %v3228
    %v3230 = vpop.f32.mrf.mxu0
    %v3231 = vadd.f32 %v3148, %v3230
    %v3232 = vpop.f32.mrf.mxu0
    %3233 = vdwg.mxu0
    %3234 = vmatprep.subr.mxu0 0.0
    %3235 = vmatpush1.msra.mxu0 0.0
    %3236 = vmatprep.subr.mxu0 0.0
    %3237 = vmatpush1.msra.mxu0 0.0
    %3238 = vmatprep.subr.mxu0 0.0
    %3239 = vmatpush1.msra.mxu0 0.0
    %3240 = vmatprep.subr.mxu0 0.0
    %3241 = vmatpush1.msra.mxu0 0.0
    %3242 = vmatprep.subr.mxu0 0.0
    %3243 = vmatpush1.msra.mxu0 0.0
    %3244 = vmatprep.subr.mxu0 0.0
    %3245 = vmatpush1.msra.mxu0 0.0
    %3246 = vmatprep.subr.mxu0 0.0
    %3247 = vmatpush1.msra.mxu0 0.0
    %3248 = vmatprep.subr.mxu0 0.0
    %3249 = vmatpush1.msra.mxu0 0.0
    %3250 = vmatprep.subr.mxu0 0.0
    %3251 = vmatpush1.msra.mxu0 0.0
    %3252 = vmatprep.subr.mxu0 0.0
    %3253 = vmatpush1.msra.mxu0 0.0
    %3254 = vmatprep.subr.mxu0 0.0
    %3255 = vmatpush1.msra.mxu0 0.0
    %3256 = vmatprep.subr.mxu0 0.0
    %3257 = vmatpush1.msra.mxu0 0.0
    %3258 = vmatprep.subr.mxu0 0.0
    %v3259 = vand.u32 %v142, 4294901760
    %3260 = vmatpush1.msra.mxu0 %v3259
    %3261 = vmatprep.subr.mxu0 0.0
    %v3262 = vand.u32 %v141, 4294901760
    %3263 = vmatpush1.msra.mxu0 %v3262
    %3264 = vmatprep.subr.mxu0 0.0
    %v3265 = vand.u32 %v140, 4294901760
    %3266 = vmatpush1.msra.mxu0 %v3265
    %3267 = vmatprep.subr.mxu0 0.0
    %v3268 = vand.u32 %v139, 4294901760
    %3269 = vmatpush1.msra.mxu0 %v3268
    %3270 = vmatprep.subr.mxu0 0.0
    %3271 = vmatpush2.msra.mxu0 0.0
    %3272 = vmatprep.subr.mxu0 0.0
    %3273 = vmatpush2.msra.mxu0 0.0
    %3274 = vmatprep.subr.mxu0 0.0
    %3275 = vmatpush2.msra.mxu0 0.0
    %3276 = vmatprep.subr.mxu0 0.0
    %3277 = vmatpush2.msra.mxu0 0.0
    %3278 = vmatprep.subr.mxu0 0.0
    %3279 = vmatpush2.msra.mxu0 0.0
    %3280 = vmatprep.subr.mxu0 0.0
    %3281 = vmatpush2.msra.mxu0 0.0
    %3282 = vmatprep.subr.mxu0 0.0
    %3283 = vmatpush2.msra.mxu0 0.0
    %3284 = vmatprep.subr.mxu0 0.0
    %3285 = vmatpush2.msra.mxu0 0.0
    %3286 = vmatprep.subr.mxu0 0.0
    %3287 = vmatpush2.msra.mxu0 0.0
    %3288 = vmatprep.subr.mxu0 0.0
    %3289 = vmatpush2.msra.mxu0 0.0
    %3290 = vmatprep.subr.mxu0 0.0
    %3291 = vmatpush2.msra.mxu0 0.0
    %3292 = vmatprep.subr.mxu0 0.0
    %3293 = vmatpush2.msra.mxu0 0.0
    %3294 = vmatprep.subr.mxu0 0.0
    %3295 = vmatpush2.msra.mxu0 0.0
    %3296 = vmatprep.subr.mxu0 0.0
    %3297 = vmatpush2.msra.mxu0 0.0
    %3298 = vmatprep.subr.mxu0 0.0
    %3299 = vmatpush2.msra.mxu0 0.0
    %3300 = vmatprep.subr.mxu0 0.0
    %3301 = vmatpush2.msra.mxu0 0.0
    %3302 = vmatprep.mubr.f32.mxu0 0.0
    %v3303 = vand.u32 %v236, 4294901760
    %3304 = vmatmul.mubr.f32.gmra.mxu0 %v3303
    %v3305 = vpop.f32.mrf.mxu0
    %v3306 = vadd.f32 %v3231, %v3305
    %v3307 = vpop.f32.mrf.mxu0
    %3308 = vdwg.mxu0
    %v3309 = vmax.f32 %v3306, 0.0
    %v3310 = vld [vmem:[%s3] sm:$0xff]
    %v3311 = vld [vmem:[%s3 + $0x8] sm:$0xff]
    %v3312 = vld [vmem:[%s3 + $0x10] sm:$0xff]
    %v3313 = vld [vmem:[%s3 + $0x18] sm:$0xff]
    %v3314 = vld [vmem:[%s3 + $0x20] sm:$0xff]
    %v3315 = vld [vmem:[%s3 + $0x28] sm:$0xff]
    %v3316 = vld [vmem:[%s3 + $0x30] sm:$0xff]
    %v3317 = vld [vmem:[%s3 + $0x38] sm:$0xff]
    %v3318 = vld [vmem:[%s3 + $0x40] sm:$0xff]
    %v3319 = vld [vmem:[%s3 + $0x48] sm:$0xff]
    %v3320 = vld [vmem:[%s3 + $0x50] sm:$0xff]
    %v3321 = vld [vmem:[%s3 + $0x58] sm:$0xff]
    %v3322 = vld [vmem:[%s3 + $0x60] sm:$0xff]
    %v3323 = vld [vmem:[%s3 + $0x68] sm:$0xff]
    %v3324 = vld [vmem:[%s3 + $0x70] sm:$0xff]
    %v3325 = vld [vmem:[%s3 + $0x78] sm:$0xff]
    %v3326 = vld [vmem:[%s4] sm:$0x1]
    %v3328 = vlaneseq
    %v3329 = vshrl.u32 %v3328, 7
    %v3330 = vsub.s32 0, %v3329
    %v3331 = vrot.slane %v3326, %v3330
    %3333 = vmatprep.subr.mxu0 0.0
    %v3334 = vand.u32 %v3325, 4294901760
    %3335 = vmatpush1.msra.mxu0 %v3334
    %3336 = vmatprep.subr.mxu0 0.0
    %v3337 = vand.u32 %v3324, 4294901760
    %3338 = vmatpush1.msra.mxu0 %v3337
    %3339 = vmatprep.subr.mxu0 0.0
    %v3340 = vand.u32 %v3323, 4294901760
    %3341 = vmatpush1.msra.mxu0 %v3340
    %3342 = vmatprep.subr.mxu0 0.0
    %v3343 = vand.u32 %v3322, 4294901760
    %3344 = vmatpush1.msra.mxu0 %v3343
    %3345 = vmatprep.subr.mxu0 0.0
    %v3346 = vand.u32 %v3321, 4294901760
    %3347 = vmatpush1.msra.mxu0 %v3346
    %3348 = vmatprep.subr.mxu0 0.0
    %v3349 = vand.u32 %v3320, 4294901760
    %3350 = vmatpush1.msra.mxu0 %v3349
    %3351 = vmatprep.subr.mxu0 0.0
    %v3352 = vand.u32 %v3319, 4294901760
    %3353 = vmatpush1.msra.mxu0 %v3352
    %3354 = vmatprep.subr.mxu0 0.0
    %v3355 = vand.u32 %v3318, 4294901760
    %3356 = vmatpush1.msra.mxu0 %v3355
    %3357 = vmatprep.subr.mxu0 0.0
    %v3358 = vand.u32 %v3317, 4294901760
    %3359 = vmatpush1.msra.mxu0 %v3358
    %3360 = vmatprep.subr.mxu0 0.0
    %v3361 = vand.u32 %v3316, 4294901760
    %3362 = vmatpush1.msra.mxu0 %v3361
    %3363 = vmatprep.subr.mxu0 0.0
    %v3364 = vand.u32 %v3315, 4294901760
    %3365 = vmatpush1.msra.mxu0 %v3364
    %3366 = vmatprep.subr.mxu0 0.0
    %v3367 = vand.u32 %v3314, 4294901760
    %3368 = vmatpush1.msra.mxu0 %v3367
    %3369 = vmatprep.subr.mxu0 0.0
    %v3370 = vand.u32 %v3313, 4294901760
    %3371 = vmatpush1.msra.mxu0 %v3370
    %3372 = vmatprep.subr.mxu0 0.0
    %v3373 = vand.u32 %v3312, 4294901760
    %3374 = vmatpush1.msra.mxu0 %v3373
    %3375 = vmatprep.subr.mxu0 0.0
    %v3376 = vand.u32 %v3311, 4294901760
    %3377 = vmatpush1.msra.mxu0 %v3376
    %3378 = vmatprep.subr.mxu0 0.0
    %v3379 = vand.u32 %v3310, 4294901760
    %3380 = vmatpush1.msra.mxu0 %v3379
    %3381 = vmatprep.subr.mxu0 0.0
    %3382 = vmatpush2.msra.mxu0 0.0
    %3383 = vmatprep.subr.mxu0 0.0
    %3384 = vmatpush2.msra.mxu0 0.0
    %3385 = vmatprep.subr.mxu0 0.0
    %3386 = vmatpush2.msra.mxu0 0.0
    %3387 = vmatprep.subr.mxu0 0.0
    %3388 = vmatpush2.msra.mxu0 0.0
    %3389 = vmatprep.subr.mxu0 0.0
    %3390 = vmatpush2.msra.mxu0 0.0
    %3391 = vmatprep.subr.mxu0 0.0
    %3392 = vmatpush2.msra.mxu0 0.0
    %3393 = vmatprep.subr.mxu0 0.0
    %3394 = vmatpush2.msra.mxu0 0.0
    %3395 = vmatprep.subr.mxu0 0.0
    %3396 = vmatpush2.msra.mxu0 0.0
    %3397 = vmatprep.subr.mxu0 0.0
    %3398 = vmatpush2.msra.mxu0 0.0
    %3399 = vmatprep.subr.mxu0 0.0
    %3400 = vmatpush2.msra.mxu0 0.0
    %3401 = vmatprep.subr.mxu0 0.0
    %3402 = vmatpush2.msra.mxu0 0.0
    %3403 = vmatprep.subr.mxu0 0.0
    %3404 = vmatpush2.msra.mxu0 0.0
    %3405 = vmatprep.subr.mxu0 0.0
    %3406 = vmatpush2.msra.mxu0 0.0
    %3407 = vmatprep.subr.mxu0 0.0
    %3408 = vmatpush2.msra.mxu0 0.0
    %3409 = vmatprep.subr.mxu0 0.0
    %3410 = vmatpush2.msra.mxu0 0.0
    %3411 = vmatprep.subr.mxu0 0.0
    %3412 = vmatpush2.msra.mxu0 0.0
    %3413 = vmatprep.mubr.f32.mxu0 0.0
    %v3414 = vand.u32 %v3309, 4294901760
    %v3415 = vsub.f32 %v3309, %v3414
    %v3416 = vand.u32 %v3415, 4294901760
    %v3417 = vsub.f32 %v3415, %v3416
    %v3418 = vand.u32 %v3417, 4294901760
    %3419 = vmatmul.mubr.f32.gmra.mxu0 %v3418
    %v3420 = vpop.f32.mrf.mxu0
    %v3421 = vadd.f32 %v3331, %v3420
    %v3422 = vpop.f32.mrf.mxu0
    %3423 = vdwg.mxu0
    %3424 = vmatprep.subr.mxu0 0.0
    %v3425 = vand.u32 %v3325, 4294901760
    %v3426 = vsub.f32 %v3325, %v3425
    %v3427 = vand.u32 %v3426, 4294901760
    %v3428 = vsub.f32 %v3426, %v3427
    %v3429 = vand.u32 %v3428, 4294901760
    %3430 = vmatpush1.msra.mxu0 %v3429
    %3431 = vmatprep.subr.mxu0 0.0
    %v3432 = vand.u32 %v3324, 4294901760
    %v3433 = vsub.f32 %v3324, %v3432
    %v3434 = vand.u32 %v3433, 4294901760
    %v3435 = vsub.f32 %v3433, %v3434
    %v3436 = vand.u32 %v3435, 4294901760
    %3437 = vmatpush1.msra.mxu0 %v3436
    %3438 = vmatprep.subr.mxu0 0.0
    %v3439 = vand.u32 %v3323, 4294901760
    %v3440 = vsub.f32 %v3323, %v3439
    %v3441 = vand.u32 %v3440, 4294901760
    %v3442 = vsub.f32 %v3440, %v3441
    %v3443 = vand.u32 %v3442, 4294901760
    %3444 = vmatpush1.msra.mxu0 %v3443
    %3445 = vmatprep.subr.mxu0 0.0
    %v3446 = vand.u32 %v3322, 4294901760
    %v3447 = vsub.f32 %v3322, %v3446
    %v3448 = vand.u32 %v3447, 4294901760
    %v3449 = vsub.f32 %v3447, %v3448
    %v3450 = vand.u32 %v3449, 4294901760
    %3451 = vmatpush1.msra.mxu0 %v3450
    %3452 = vmatprep.subr.mxu0 0.0
    %v3453 = vand.u32 %v3321, 4294901760
    %v3454 = vsub.f32 %v3321, %v3453
    %v3455 = vand.u32 %v3454, 4294901760
    %v3456 = vsub.f32 %v3454, %v3455
    %v3457 = vand.u32 %v3456, 4294901760
    %3458 = vmatpush1.msra.mxu0 %v3457
    %3459 = vmatprep.subr.mxu0 0.0
    %v3460 = vand.u32 %v3320, 4294901760
    %v3461 = vsub.f32 %v3320, %v3460
    %v3462 = vand.u32 %v3461, 4294901760
    %v3463 = vsub.f32 %v3461, %v3462
    %v3464 = vand.u32 %v3463, 4294901760
    %3465 = vmatpush1.msra.mxu0 %v3464
    %3466 = vmatprep.subr.mxu0 0.0
    %v3467 = vand.u32 %v3319, 4294901760
    %v3468 = vsub.f32 %v3319, %v3467
    %v3469 = vand.u32 %v3468, 4294901760
    %v3470 = vsub.f32 %v3468, %v3469
    %v3471 = vand.u32 %v3470, 4294901760
    %3472 = vmatpush1.msra.mxu0 %v3471
    %3473 = vmatprep.subr.mxu0 0.0
    %v3474 = vand.u32 %v3318, 4294901760
    %v3475 = vsub.f32 %v3318, %v3474
    %v3476 = vand.u32 %v3475, 4294901760
    %v3477 = vsub.f32 %v3475, %v3476
    %v3478 = vand.u32 %v3477, 4294901760
    %3479 = vmatpush1.msra.mxu0 %v3478
    %3480 = vmatprep.subr.mxu0 0.0
    %v3481 = vand.u32 %v3317, 4294901760
    %v3482 = vsub.f32 %v3317, %v3481
    %v3483 = vand.u32 %v3482, 4294901760
    %v3484 = vsub.f32 %v3482, %v3483
    %v3485 = vand.u32 %v3484, 4294901760
    %3486 = vmatpush1.msra.mxu0 %v3485
    %3487 = vmatprep.subr.mxu0 0.0
    %v3488 = vand.u32 %v3316, 4294901760
    %v3489 = vsub.f32 %v3316, %v3488
    %v3490 = vand.u32 %v3489, 4294901760
    %v3491 = vsub.f32 %v3489, %v3490
    %v3492 = vand.u32 %v3491, 4294901760
    %3493 = vmatpush1.msra.mxu0 %v3492
    %3494 = vmatprep.subr.mxu0 0.0
    %v3495 = vand.u32 %v3315, 4294901760
    %v3496 = vsub.f32 %v3315, %v3495
    %v3497 = vand.u32 %v3496, 4294901760
    %v3498 = vsub.f32 %v3496, %v3497
    %v3499 = vand.u32 %v3498, 4294901760
    %3500 = vmatpush1.msra.mxu0 %v3499
    %3501 = vmatprep.subr.mxu0 0.0
    %v3502 = vand.u32 %v3314, 4294901760
    %v3503 = vsub.f32 %v3314, %v3502
    %v3504 = vand.u32 %v3503, 4294901760
    %v3505 = vsub.f32 %v3503, %v3504
    %v3506 = vand.u32 %v3505, 4294901760
    %3507 = vmatpush1.msra.mxu0 %v3506
    %3508 = vmatprep.subr.mxu0 0.0
    %v3509 = vand.u32 %v3313, 4294901760
    %v3510 = vsub.f32 %v3313, %v3509
    %v3511 = vand.u32 %v3510, 4294901760
    %v3512 = vsub.f32 %v3510, %v3511
    %v3513 = vand.u32 %v3512, 4294901760
    %3514 = vmatpush1.msra.mxu0 %v3513
    %3515 = vmatprep.subr.mxu0 0.0
    %v3516 = vand.u32 %v3312, 4294901760
    %v3517 = vsub.f32 %v3312, %v3516
    %v3518 = vand.u32 %v3517, 4294901760
    %v3519 = vsub.f32 %v3517, %v3518
    %v3520 = vand.u32 %v3519, 4294901760
    %3521 = vmatpush1.msra.mxu0 %v3520
    %3522 = vmatprep.subr.mxu0 0.0
    %v3523 = vand.u32 %v3311, 4294901760
    %v3524 = vsub.f32 %v3311, %v3523
    %v3525 = vand.u32 %v3524, 4294901760
    %v3526 = vsub.f32 %v3524, %v3525
    %v3527 = vand.u32 %v3526, 4294901760
    %3528 = vmatpush1.msra.mxu0 %v3527
    %3529 = vmatprep.subr.mxu0 0.0
    %v3530 = vand.u32 %v3310, 4294901760
    %v3531 = vsub.f32 %v3310, %v3530
    %v3532 = vand.u32 %v3531, 4294901760
    %v3533 = vsub.f32 %v3531, %v3532
    %v3534 = vand.u32 %v3533, 4294901760
    %3535 = vmatpush1.msra.mxu0 %v3534
    %3536 = vmatprep.subr.mxu0 0.0
    %3537 = vmatpush2.msra.mxu0 0.0
    %3538 = vmatprep.subr.mxu0 0.0
    %3539 = vmatpush2.msra.mxu0 0.0
    %3540 = vmatprep.subr.mxu0 0.0
    %3541 = vmatpush2.msra.mxu0 0.0
    %3542 = vmatprep.subr.mxu0 0.0
    %3543 = vmatpush2.msra.mxu0 0.0
    %3544 = vmatprep.subr.mxu0 0.0
    %3545 = vmatpush2.msra.mxu0 0.0
    %3546 = vmatprep.subr.mxu0 0.0
    %3547 = vmatpush2.msra.mxu0 0.0
    %3548 = vmatprep.subr.mxu0 0.0
    %3549 = vmatpush2.msra.mxu0 0.0
    %3550 = vmatprep.subr.mxu0 0.0
    %3551 = vmatpush2.msra.mxu0 0.0
    %3552 = vmatprep.subr.mxu0 0.0
    %3553 = vmatpush2.msra.mxu0 0.0
    %3554 = vmatprep.subr.mxu0 0.0
    %3555 = vmatpush2.msra.mxu0 0.0
    %3556 = vmatprep.subr.mxu0 0.0
    %3557 = vmatpush2.msra.mxu0 0.0
    %3558 = vmatprep.subr.mxu0 0.0
    %3559 = vmatpush2.msra.mxu0 0.0
    %3560 = vmatprep.subr.mxu0 0.0
    %3561 = vmatpush2.msra.mxu0 0.0
    %3562 = vmatprep.subr.mxu0 0.0
    %3563 = vmatpush2.msra.mxu0 0.0
    %3564 = vmatprep.subr.mxu0 0.0
    %3565 = vmatpush2.msra.mxu0 0.0
    %3566 = vmatprep.subr.mxu0 0.0
    %3567 = vmatpush2.msra.mxu0 0.0
    %3568 = vmatprep.mubr.f32.mxu0 0.0
    %v3569 = vand.u32 %v3309, 4294901760
    %3570 = vmatmul.mubr.f32.gmra.mxu0 %v3569
    %v3571 = vpop.f32.mrf.mxu0
    %v3572 = vadd.f32 %v3421, %v3571
    %v3573 = vpop.f32.mrf.mxu0
    %3574 = vdwg.mxu0
    %3575 = vmatprep.subr.mxu0 0.0
    %v3576 = vand.u32 %v3325, 4294901760
    %v3577 = vsub.f32 %v3325, %v3576
    %3578 = vmatpush1.msra.mxu0 %v3577
    %3579 = vmatprep.subr.mxu0 0.0
    %v3580 = vand.u32 %v3324, 4294901760
    %v3581 = vsub.f32 %v3324, %v3580
    %3582 = vmatpush1.msra.mxu0 %v3581
    %3583 = vmatprep.subr.mxu0 0.0
    %v3584 = vand.u32 %v3323, 4294901760
    %v3585 = vsub.f32 %v3323, %v3584
    %3586 = vmatpush1.msra.mxu0 %v3585
    %3587 = vmatprep.subr.mxu0 0.0
    %v3588 = vand.u32 %v3322, 4294901760
    %v3589 = vsub.f32 %v3322, %v3588
    %3590 = vmatpush1.msra.mxu0 %v3589
    %3591 = vmatprep.subr.mxu0 0.0
    %v3592 = vand.u32 %v3321, 4294901760
    %v3593 = vsub.f32 %v3321, %v3592
    %3594 = vmatpush1.msra.mxu0 %v3593
    %3595 = vmatprep.subr.mxu0 0.0
    %v3596 = vand.u32 %v3320, 4294901760
    %v3597 = vsub.f32 %v3320, %v3596
    %3598 = vmatpush1.msra.mxu0 %v3597
    %3599 = vmatprep.subr.mxu0 0.0
    %v3600 = vand.u32 %v3319, 4294901760
    %v3601 = vsub.f32 %v3319, %v3600
    %3602 = vmatpush1.msra.mxu0 %v3601
    %3603 = vmatprep.subr.mxu0 0.0
    %v3604 = vand.u32 %v3318, 4294901760
    %v3605 = vsub.f32 %v3318, %v3604
    %3606 = vmatpush1.msra.mxu0 %v3605
    %3607 = vmatprep.subr.mxu0 0.0
    %v3608 = vand.u32 %v3317, 4294901760
    %v3609 = vsub.f32 %v3317, %v3608
    %3610 = vmatpush1.msra.mxu0 %v3609
    %3611 = vmatprep.subr.mxu0 0.0
    %v3612 = vand.u32 %v3316, 4294901760
    %v3613 = vsub.f32 %v3316, %v3612
    %3614 = vmatpush1.msra.mxu0 %v3613
    %3615 = vmatprep.subr.mxu0 0.0
    %v3616 = vand.u32 %v3315, 4294901760
    %v3617 = vsub.f32 %v3315, %v3616
    %3618 = vmatpush1.msra.mxu0 %v3617
    %3619 = vmatprep.subr.mxu0 0.0
    %v3620 = vand.u32 %v3314, 4294901760
    %v3621 = vsub.f32 %v3314, %v3620
    %3622 = vmatpush1.msra.mxu0 %v3621
    %3623 = vmatprep.subr.mxu0 0.0
    %v3624 = vand.u32 %v3313, 4294901760
    %v3625 = vsub.f32 %v3313, %v3624
    %3626 = vmatpush1.msra.mxu0 %v3625
    %3627 = vmatprep.subr.mxu0 0.0
    %v3628 = vand.u32 %v3312, 4294901760
    %v3629 = vsub.f32 %v3312, %v3628
    %3630 = vmatpush1.msra.mxu0 %v3629
    %3631 = vmatprep.subr.mxu0 0.0
    %v3632 = vand.u32 %v3311, 4294901760
    %v3633 = vsub.f32 %v3311, %v3632
    %3634 = vmatpush1.msra.mxu0 %v3633
    %3635 = vmatprep.subr.mxu0 0.0
    %v3636 = vand.u32 %v3310, 4294901760
    %v3637 = vsub.f32 %v3310, %v3636
    %3638 = vmatpush1.msra.mxu0 %v3637
    %3639 = vmatprep.subr.mxu0 0.0
    %3640 = vmatpush2.msra.mxu0 0.0
    %3641 = vmatprep.subr.mxu0 0.0
    %3642 = vmatpush2.msra.mxu0 0.0
    %3643 = vmatprep.subr.mxu0 0.0
    %3644 = vmatpush2.msra.mxu0 0.0
    %3645 = vmatprep.subr.mxu0 0.0
    %3646 = vmatpush2.msra.mxu0 0.0
    %3647 = vmatprep.subr.mxu0 0.0
    %3648 = vmatpush2.msra.mxu0 0.0
    %3649 = vmatprep.subr.mxu0 0.0
    %3650 = vmatpush2.msra.mxu0 0.0
    %3651 = vmatprep.subr.mxu0 0.0
    %3652 = vmatpush2.msra.mxu0 0.0
    %3653 = vmatprep.subr.mxu0 0.0
    %3654 = vmatpush2.msra.mxu0 0.0
    %3655 = vmatprep.subr.mxu0 0.0
    %3656 = vmatpush2.msra.mxu0 0.0
    %3657 = vmatprep.subr.mxu0 0.0
    %3658 = vmatpush2.msra.mxu0 0.0
    %3659 = vmatprep.subr.mxu0 0.0
    %3660 = vmatpush2.msra.mxu0 0.0
    %3661 = vmatprep.subr.mxu0 0.0
    %3662 = vmatpush2.msra.mxu0 0.0
    %3663 = vmatprep.subr.mxu0 0.0
    %3664 = vmatpush2.msra.mxu0 0.0
    %3665 = vmatprep.subr.mxu0 0.0
    %3666 = vmatpush2.msra.mxu0 0.0
    %3667 = vmatprep.subr.mxu0 0.0
    %3668 = vmatpush2.msra.mxu0 0.0
    %3669 = vmatprep.subr.mxu0 0.0
    %3670 = vmatpush2.msra.mxu0 0.0
    %3671 = vmatprep.mubr.f32.mxu0 0.0
    %v3672 = vand.u32 %v3309, 4294901760
    %v3673 = vsub.f32 %v3309, %v3672
    %3674 = vmatmul.mubr.f32.gmra.mxu0 %v3673
    %v3675 = vpop.f32.mrf.mxu0
    %v3676 = vadd.f32 %v3572, %v3675
    %v3677 = vpop.f32.mrf.mxu0
    %3678 = vdwg.mxu0
    %3679 = vmatprep.subr.mxu0 0.0
    %v3680 = vand.u32 %v3325, 4294901760
    %3681 = vmatpush1.msra.mxu0 %v3680
    %3682 = vmatprep.subr.mxu0 0.0
    %v3683 = vand.u32 %v3324, 4294901760
    %3684 = vmatpush1.msra.mxu0 %v3683
    %3685 = vmatprep.subr.mxu0 0.0
    %v3686 = vand.u32 %v3323, 4294901760
    %3687 = vmatpush1.msra.mxu0 %v3686
    %3688 = vmatprep.subr.mxu0 0.0
    %v3689 = vand.u32 %v3322, 4294901760
    %3690 = vmatpush1.msra.mxu0 %v3689
    %3691 = vmatprep.subr.mxu0 0.0
    %v3692 = vand.u32 %v3321, 4294901760
    %3693 = vmatpush1.msra.mxu0 %v3692
    %3694 = vmatprep.subr.mxu0 0.0
    %v3695 = vand.u32 %v3320, 4294901760
    %3696 = vmatpush1.msra.mxu0 %v3695
    %3697 = vmatprep.subr.mxu0 0.0
    %v3698 = vand.u32 %v3319, 4294901760
    %3699 = vmatpush1.msra.mxu0 %v3698
    %3700 = vmatprep.subr.mxu0 0.0
    %v3701 = vand.u32 %v3318, 4294901760
    %3702 = vmatpush1.msra.mxu0 %v3701
    %3703 = vmatprep.subr.mxu0 0.0
    %v3704 = vand.u32 %v3317, 4294901760
    %3705 = vmatpush1.msra.mxu0 %v3704
    %3706 = vmatprep.subr.mxu0 0.0
    %v3707 = vand.u32 %v3316, 4294901760
    %3708 = vmatpush1.msra.mxu0 %v3707
    %3709 = vmatprep.subr.mxu0 0.0
    %v3710 = vand.u32 %v3315, 4294901760
    %3711 = vmatpush1.msra.mxu0 %v3710
    %3712 = vmatprep.subr.mxu0 0.0
    %v3713 = vand.u32 %v3314, 4294901760
    %3714 = vmatpush1.msra.mxu0 %v3713
    %3715 = vmatprep.subr.mxu0 0.0
    %v3716 = vand.u32 %v3313, 4294901760
    %3717 = vmatpush1.msra.mxu0 %v3716
    %3718 = vmatprep.subr.mxu0 0.0
    %v3719 = vand.u32 %v3312, 4294901760
    %3720 = vmatpush1.msra.mxu0 %v3719
    %3721 = vmatprep.subr.mxu0 0.0
    %v3722 = vand.u32 %v3311, 4294901760
    %3723 = vmatpush1.msra.mxu0 %v3722
    %3724 = vmatprep.subr.mxu0 0.0
    %v3725 = vand.u32 %v3310, 4294901760
    %3726 = vmatpush1.msra.mxu0 %v3725
    %3727 = vmatprep.subr.mxu0 0.0
    %3728 = vmatpush2.msra.mxu0 0.0
    %3729 = vmatprep.subr.mxu0 0.0
    %3730 = vmatpush2.msra.mxu0 0.0
    %3731 = vmatprep.subr.mxu0 0.0
    %3732 = vmatpush2.msra.mxu0 0.0
    %3733 = vmatprep.subr.mxu0 0.0
    %3734 = vmatpush2.msra.mxu0 0.0
    %3735 = vmatprep.subr.mxu0 0.0
    %3736 = vmatpush2.msra.mxu0 0.0
    %3737 = vmatprep.subr.mxu0 0.0
    %3738 = vmatpush2.msra.mxu0 0.0
    %3739 = vmatprep.subr.mxu0 0.0
    %3740 = vmatpush2.msra.mxu0 0.0
    %3741 = vmatprep.subr.mxu0 0.0
    %3742 = vmatpush2.msra.mxu0 0.0
    %3743 = vmatprep.subr.mxu0 0.0
    %3744 = vmatpush2.msra.mxu0 0.0
    %3745 = vmatprep.subr.mxu0 0.0
    %3746 = vmatpush2.msra.mxu0 0.0
    %3747 = vmatprep.subr.mxu0 0.0
    %3748 = vmatpush2.msra.mxu0 0.0
    %3749 = vmatprep.subr.mxu0 0.0
    %3750 = vmatpush2.msra.mxu0 0.0
    %3751 = vmatprep.subr.mxu0 0.0
    %3752 = vmatpush2.msra.mxu0 0.0
    %3753 = vmatprep.subr.mxu0 0.0
    %3754 = vmatpush2.msra.mxu0 0.0
    %3755 = vmatprep.subr.mxu0 0.0
    %3756 = vmatpush2.msra.mxu0 0.0
    %3757 = vmatprep.subr.mxu0 0.0
    %3758 = vmatpush2.msra.mxu0 0.0
    %3759 = vmatprep.mubr.f32.mxu0 0.0
    %v3760 = vand.u32 %v3309, 4294901760
    %v3761 = vsub.f32 %v3309, %v3760
    %v3762 = vand.u32 %v3761, 4294901760
    %3763 = vmatmul.mubr.f32.gmra.mxu0 %v3762
    %v3764 = vpop.f32.mrf.mxu0
    %v3765 = vadd.f32 %v3676, %v3764
    %v3766 = vpop.f32.mrf.mxu0
    %3767 = vdwg.mxu0
    %3768 = vmatprep.subr.mxu0 0.0
    %v3769 = vand.u32 %v3325, 4294901760
    %v3770 = vsub.f32 %v3325, %v3769
    %v3771 = vand.u32 %v3770, 4294901760
    %3772 = vmatpush1.msra.mxu0 %v3771
    %3773 = vmatprep.subr.mxu0 0.0
    %v3774 = vand.u32 %v3324, 4294901760
    %v3775 = vsub.f32 %v3324, %v3774
    %v3776 = vand.u32 %v3775, 4294901760
    %3777 = vmatpush1.msra.mxu0 %v3776
    %3778 = vmatprep.subr.mxu0 0.0
    %v3779 = vand.u32 %v3323, 4294901760
    %v3780 = vsub.f32 %v3323, %v3779
    %v3781 = vand.u32 %v3780, 4294901760
    %3782 = vmatpush1.msra.mxu0 %v3781
    %3783 = vmatprep.subr.mxu0 0.0
    %v3784 = vand.u32 %v3322, 4294901760
    %v3785 = vsub.f32 %v3322, %v3784
    %v3786 = vand.u32 %v3785, 4294901760
    %3787 = vmatpush1.msra.mxu0 %v3786
    %3788 = vmatprep.subr.mxu0 0.0
    %v3789 = vand.u32 %v3321, 4294901760
    %v3790 = vsub.f32 %v3321, %v3789
    %v3791 = vand.u32 %v3790, 4294901760
    %3792 = vmatpush1.msra.mxu0 %v3791
    %3793 = vmatprep.subr.mxu0 0.0
    %v3794 = vand.u32 %v3320, 4294901760
    %v3795 = vsub.f32 %v3320, %v3794
    %v3796 = vand.u32 %v3795, 4294901760
    %3797 = vmatpush1.msra.mxu0 %v3796
    %3798 = vmatprep.subr.mxu0 0.0
    %v3799 = vand.u32 %v3319, 4294901760
    %v3800 = vsub.f32 %v3319, %v3799
    %v3801 = vand.u32 %v3800, 4294901760
    %3802 = vmatpush1.msra.mxu0 %v3801
    %3803 = vmatprep.subr.mxu0 0.0
    %v3804 = vand.u32 %v3318, 4294901760
    %v3805 = vsub.f32 %v3318, %v3804
    %v3806 = vand.u32 %v3805, 4294901760
    %3807 = vmatpush1.msra.mxu0 %v3806
    %3808 = vmatprep.subr.mxu0 0.0
    %v3809 = vand.u32 %v3317, 4294901760
    %v3810 = vsub.f32 %v3317, %v3809
    %v3811 = vand.u32 %v3810, 4294901760
    %3812 = vmatpush1.msra.mxu0 %v3811
    %3813 = vmatprep.subr.mxu0 0.0
    %v3814 = vand.u32 %v3316, 4294901760
    %v3815 = vsub.f32 %v3316, %v3814
    %v3816 = vand.u32 %v3815, 4294901760
    %3817 = vmatpush1.msra.mxu0 %v3816
    %3818 = vmatprep.subr.mxu0 0.0
    %v3819 = vand.u32 %v3315, 4294901760
    %v3820 = vsub.f32 %v3315, %v3819
    %v3821 = vand.u32 %v3820, 4294901760
    %3822 = vmatpush1.msra.mxu0 %v3821
    %3823 = vmatprep.subr.mxu0 0.0
    %v3824 = vand.u32 %v3314, 4294901760
    %v3825 = vsub.f32 %v3314, %v3824
    %v3826 = vand.u32 %v3825, 4294901760
    %3827 = vmatpush1.msra.mxu0 %v3826
    %3828 = vmatprep.subr.mxu0 0.0
    %v3829 = vand.u32 %v3313, 4294901760
    %v3830 = vsub.f32 %v3313, %v3829
    %v3831 = vand.u32 %v3830, 4294901760
    %3832 = vmatpush1.msra.mxu0 %v3831
    %3833 = vmatprep.subr.mxu0 0.0
    %v3834 = vand.u32 %v3312, 4294901760
    %v3835 = vsub.f32 %v3312, %v3834
    %v3836 = vand.u32 %v3835, 4294901760
    %3837 = vmatpush1.msra.mxu0 %v3836
    %3838 = vmatprep.subr.mxu0 0.0
    %v3839 = vand.u32 %v3311, 4294901760
    %v3840 = vsub.f32 %v3311, %v3839
    %v3841 = vand.u32 %v3840, 4294901760
    %3842 = vmatpush1.msra.mxu0 %v3841
    %3843 = vmatprep.subr.mxu0 0.0
    %v3844 = vand.u32 %v3310, 4294901760
    %v3845 = vsub.f32 %v3310, %v3844
    %v3846 = vand.u32 %v3845, 4294901760
    %3847 = vmatpush1.msra.mxu0 %v3846
    %3848 = vmatprep.subr.mxu0 0.0
    %3849 = vmatpush2.msra.mxu0 0.0
    %3850 = vmatprep.subr.mxu0 0.0
    %3851 = vmatpush2.msra.mxu0 0.0
    %3852 = vmatprep.subr.mxu0 0.0
    %3853 = vmatpush2.msra.mxu0 0.0
    %3854 = vmatprep.subr.mxu0 0.0
    %3855 = vmatpush2.msra.mxu0 0.0
    %3856 = vmatprep.subr.mxu0 0.0
    %3857 = vmatpush2.msra.mxu0 0.0
    %3858 = vmatprep.subr.mxu0 0.0
    %3859 = vmatpush2.msra.mxu0 0.0
    %3860 = vmatprep.subr.mxu0 0.0
    %3861 = vmatpush2.msra.mxu0 0.0
    %3862 = vmatprep.subr.mxu0 0.0
    %3863 = vmatpush2.msra.mxu0 0.0
    %3864 = vmatprep.subr.mxu0 0.0
    %3865 = vmatpush2.msra.mxu0 0.0
    %3866 = vmatprep.subr.mxu0 0.0
    %3867 = vmatpush2.msra.mxu0 0.0
    %3868 = vmatprep.subr.mxu0 0.0
    %3869 = vmatpush2.msra.mxu0 0.0
    %3870 = vmatprep.subr.mxu0 0.0
    %3871 = vmatpush2.msra.mxu0 0.0
    %3872 = vmatprep.subr.mxu0 0.0
    %3873 = vmatpush2.msra.mxu0 0.0
    %3874 = vmatprep.subr.mxu0 0.0
    %3875 = vmatpush2.msra.mxu0 0.0
    %3876 = vmatprep.subr.mxu0 0.0
    %3877 = vmatpush2.msra.mxu0 0.0
    %3878 = vmatprep.subr.mxu0 0.0
    %3879 = vmatpush2.msra.mxu0 0.0
    %3880 = vmatprep.mubr.f32.mxu0 0.0
    %v3881 = vand.u32 %v3309, 4294901760
    %3882 = vmatmul.mubr.f32.gmra.mxu0 %v3881
    %v3883 = vpop.f32.mrf.mxu0
    %v3884 = vadd.f32 %v3765, %v3883
    %v3885 = vpop.f32.mrf.mxu0
    %3886 = vdwg.mxu0
    %3887 = vmatprep.subr.mxu0 0.0
    %v3888 = vand.u32 %v3325, 4294901760
    %3889 = vmatpush1.msra.mxu0 %v3888
    %3890 = vmatprep.subr.mxu0 0.0
    %v3891 = vand.u32 %v3324, 4294901760
    %3892 = vmatpush1.msra.mxu0 %v3891
    %3893 = vmatprep.subr.mxu0 0.0
    %v3894 = vand.u32 %v3323, 4294901760
    %3895 = vmatpush1.msra.mxu0 %v3894
    %3896 = vmatprep.subr.mxu0 0.0
    %v3897 = vand.u32 %v3322, 4294901760
    %3898 = vmatpush1.msra.mxu0 %v3897
    %3899 = vmatprep.subr.mxu0 0.0
    %v3900 = vand.u32 %v3321, 4294901760
    %3901 = vmatpush1.msra.mxu0 %v3900
    %3902 = vmatprep.subr.mxu0 0.0
    %v3903 = vand.u32 %v3320, 4294901760
    %3904 = vmatpush1.msra.mxu0 %v3903
    %3905 = vmatprep.subr.mxu0 0.0
    %v3906 = vand.u32 %v3319, 4294901760
    %3907 = vmatpush1.msra.mxu0 %v3906
    %3908 = vmatprep.subr.mxu0 0.0
    %v3909 = vand.u32 %v3318, 4294901760
    %3910 = vmatpush1.msra.mxu0 %v3909
    %3911 = vmatprep.subr.mxu0 0.0
    %v3912 = vand.u32 %v3317, 4294901760
    %3913 = vmatpush1.msra.mxu0 %v3912
    %3914 = vmatprep.subr.mxu0 0.0
    %v3915 = vand.u32 %v3316, 4294901760
    %3916 = vmatpush1.msra.mxu0 %v3915
    %3917 = vmatprep.subr.mxu0 0.0
    %v3918 = vand.u32 %v3315, 4294901760
    %3919 = vmatpush1.msra.mxu0 %v3918
    %3920 = vmatprep.subr.mxu0 0.0
    %v3921 = vand.u32 %v3314, 4294901760
    %3922 = vmatpush1.msra.mxu0 %v3921
    %3923 = vmatprep.subr.mxu0 0.0
    %v3924 = vand.u32 %v3313, 4294901760
    %3925 = vmatpush1.msra.mxu0 %v3924
    %3926 = vmatprep.subr.mxu0 0.0
    %v3927 = vand.u32 %v3312, 4294901760
    %3928 = vmatpush1.msra.mxu0 %v3927
    %3929 = vmatprep.subr.mxu0 0.0
    %v3930 = vand.u32 %v3311, 4294901760
    %3931 = vmatpush1.msra.mxu0 %v3930
    %3932 = vmatprep.subr.mxu0 0.0
    %v3933 = vand.u32 %v3310, 4294901760
    %3934 = vmatpush1.msra.mxu0 %v3933
    %3935 = vmatprep.subr.mxu0 0.0
    %3936 = vmatpush2.msra.mxu0 0.0
    %3937 = vmatprep.subr.mxu0 0.0
    %3938 = vmatpush2.msra.mxu0 0.0
    %3939 = vmatprep.subr.mxu0 0.0
    %3940 = vmatpush2.msra.mxu0 0.0
    %3941 = vmatprep.subr.mxu0 0.0
    %3942 = vmatpush2.msra.mxu0 0.0
    %3943 = vmatprep.subr.mxu0 0.0
    %3944 = vmatpush2.msra.mxu0 0.0
    %3945 = vmatprep.subr.mxu0 0.0
    %3946 = vmatpush2.msra.mxu0 0.0
    %3947 = vmatprep.subr.mxu0 0.0
    %3948 = vmatpush2.msra.mxu0 0.0
    %3949 = vmatprep.subr.mxu0 0.0
    %3950 = vmatpush2.msra.mxu0 0.0
    %3951 = vmatprep.subr.mxu0 0.0
    %3952 = vmatpush2.msra.mxu0 0.0
    %3953 = vmatprep.subr.mxu0 0.0
    %3954 = vmatpush2.msra.mxu0 0.0
    %3955 = vmatprep.subr.mxu0 0.0
    %3956 = vmatpush2.msra.mxu0 0.0
    %3957 = vmatprep.subr.mxu0 0.0
    %3958 = vmatpush2.msra.mxu0 0.0
    %3959 = vmatprep.subr.mxu0 0.0
    %3960 = vmatpush2.msra.mxu0 0.0
    %3961 = vmatprep.subr.mxu0 0.0
    %3962 = vmatpush2.msra.mxu0 0.0
    %3963 = vmatprep.subr.mxu0 0.0
    %3964 = vmatpush2.msra.mxu0 0.0
    %3965 = vmatprep.subr.mxu0 0.0
    %3966 = vmatpush2.msra.mxu0 0.0
    %3967 = vmatprep.mubr.f32.mxu0 0.0
    %v3968 = vand.u32 %v3309, 4294901760
    %3969 = vmatmul.mubr.f32.gmra.mxu0 %v3968
    %v3970 = vpop.f32.mrf.mxu0
    %v3971 = vadd.f32 %v3884, %v3970
    %v3972 = vpop.f32.mrf.mxu0
    %3973 = vdwg.mxu0
    %vm3974 = vcmask 818176
    %3975 = vst.msk [vmem:[#allocation5] sm:$0xff] %vm3974, %v3971
    // Predicated region
    $region26: #{tpu_custom_call.1} parent=1 // pred_check
      _
    $region27: #{tpu_custom_call.1} parent=1 // pred_check_branch
      %3977 = sbr.rel (0) target = $region29
    $region28: #{tpu_custom_call.1} parent=1 // pred_region
      %s3979 = ssub.s32 128, 32
      %3980 = vsyncadd [#allocation4], %s3979
      %s3981 = sshll.u32 [#allocation5], 4
      %s3982 = int_to_ptr.vmem [resolvable:$true] %s3981
      %3987 = dma.vmem_to_hbm [thread:$0]  %s3982, 32, %s5, [#allocation4], 32, 32, 2
    $region29: #{tpu_custom_call.1} parent=1 // pred_fallthru
      _
    // Predicated region
    $region30: #{tpu_custom_call.1} parent=1 // pred_check
      _
    $region31: #{tpu_custom_call.1} parent=1 // pred_check_branch
      %3989 = sbr.rel (0) target = $region33
    $region32: #{tpu_custom_call.1} parent=1 // pred_region
      %3990 = dma.done [#allocation4], 128
    $region33: #{tpu_custom_call.1} parent=1 // pred_fallthru
      _
    %3991 = vsyncpa [#allocation3], 1
    %3992 = vsyncpa [#allocation4], 1

</llo_original>
